<compile_context>
chip_gen: v6e
topology: v6e:2x2x1
jax: 0.10.0
libtpu: 0.0.40
codegen_flags: <defaults>
</compile_context>

<pallas_src>
import math

import jax
import jax.numpy as jnp
from jax import lax
from jax.experimental import pallas as pl
from jax.experimental.pallas import tpu as pltpu


def _sigmoid(x):
    # tanh-based logistic: lands on the EUP slot, avoids an explicit divide.
    return 0.5 * (jnp.tanh(0.5 * x) + 1.0)


def _silu(x):
    return x * _sigmoid(x)


def _softplus(x):
    # numerically stable softplus (matches F.softplus up to fp error)
    return jnp.maximum(x, 0.0) + jnp.log(1.0 + jnp.exp(-jnp.abs(x)))


# --------------------------------------------------------------------------------------
# One fused kernel: full Mamba block (in_proj -> conv -> chunked SSM scan -> gate ->
# out_proj) for a group of G batch elements.
# --------------------------------------------------------------------------------------
def _make_mamba_kernel(G, L, d_model, d_inner, d_state, d_conv, out_pad, t_chunk):
    n_chunks = L // t_chunk

    def kernel(x_ref,
               w_in_ref, w_conv_ref, b_conv_ref, w_xproj_ref, b_dtp_ref,
               A_T_ref, D_ref, w_out_ref,
               out_ref):
        # ---- fused input projection: [x_in | z] in one bf16 MXU matmul (f32 accum) ----
        x = x_ref[...].reshape(G * L, d_model)                        # bf16
        proj_in = jnp.dot(x, w_in_ref[...], preferred_element_type=jnp.float32)
        xin = proj_in[:, :d_inner].reshape(G, L, d_inner)             # (G, L, Di) f32
        z = proj_in[:, d_inner:]                                      # (G*L, Di) f32

        # ---- causal depthwise conv1d via XLU roll + causal mask (no padded scratch) ---
        w_conv = w_conv_ref[...]                                      # (K, Di) f32
        b_conv = b_conv_ref[...]                                      # (1, Di) f32
        t_idx = lax.broadcasted_iota(jnp.int32, (L, d_inner), 0)
        xc_list = []
        for g in range(G):                                            # static, G small
            xg = xin[g]                                               # (L, Di)
            acc = xg * w_conv[d_conv - 1:d_conv, :]
            for k in range(d_conv - 1):                               # static unroll
                shift = d_conv - 1 - k
                xs = pltpu.roll(xg, shift=shift, axis=0)              # XLU sublane roll
                xs = jnp.where(t_idx >= shift, xs, 0.0)               # mask wrapped rows
                acc = acc + xs * w_conv[k:k + 1, :]
            xc_list.append(_silu(acc + b_conv))
        xc = jnp.stack(xc_list, axis=0)                               # (G, L, Di)
        xc_flat = xc.reshape(G * L, d_inner)

        # ---- fused x-projection: [dt_raw | B | C] in one bf16 MXU matmul --------------
        proj = jnp.dot(xc_flat.astype(jnp.bfloat16), w_xproj_ref[...],
                       preferred_element_type=jnp.float32)            # (G*L, Di + 2N)
        dt = _softplus(proj[:, :d_inner] + b_dtp_ref[...])            # (G*L, Di)
        Bm = proj[:, d_inner:d_inner + d_state]                       # (G*L, N)
        Cm = proj[:, d_inner + d_state:d_inner + 2 * d_state]         # (G*L, N)
        dtx = (dt * xc_flat).reshape(G, L, d_inner)
        dt3 = dt.reshape(G, L, d_inner)
        B3 = Bm.reshape(G, L, d_state)
        C3 = Cm.reshape(G, L, d_state)
        A_T = A_T_ref[...]                                            # (N, Di) f32

        # ---- time-chunked selective scan: carried h, chunk-local history in vregs -----
        # TODO(synk): for very large L, convert the static chunk loop into a fori_loop over
        # a (t_chunk, N, Di) VMEM scratch to bound trace size; static is fine at these L.
        y_rows = []
        for g in range(G):
            h = jnp.zeros((d_state, d_inner), jnp.float32)            # f32 carry
            for c in range(n_chunks):
                t0 = c * t_chunk
                dt_c = dt3[g, t0:t0 + t_chunk]                        # (TC, Di)
                dtx_c = dtx[g, t0:t0 + t_chunk]                       # (TC, Di)
                b_c = B3[g, t0:t0 + t_chunk]                          # (TC, N)
                c_c = C3[g, t0:t0 + t_chunk]                          # (TC, N)
                a = jnp.exp(dt_c[:, None, :] * A_T[None, :, :])       # (TC, N, Di)
                bx = b_c[:, :, None] * dtx_c[:, None, :]              # (TC, N, Di)
                # log-depth (Hillis–Steele) inclusive scan within the chunk:
                #   (a1, b1) then (a2, b2)  ->  (a2*a1, a2*b1 + b2)
                d = 1
                while d < t_chunk:
                    pad_a = jnp.ones((d, d_state, d_inner), jnp.float32)
                    pad_b = jnp.zeros((d, d_state, d_inner), jnp.float32)
                    a_prev = jnp.concatenate([pad_a, a[:t_chunk - d]], axis=0)
                    b_prev = jnp.concatenate([pad_b, bx[:t_chunk - d]], axis=0)
                    bx = a * b_prev + bx
                    a = a * a_prev
                    d *= 2
                h_hist = a * h[None, :, :] + bx                       # (TC, N, Di)
                h = h_hist[t_chunk - 1]                               # carry to next chunk
                # hoisted C-contraction for this chunk only (no history stored to VMEM)
                y_rows.append(jnp.sum(c_c[:, :, None] * h_hist, axis=1))   # (TC, Di)
        y = jnp.concatenate(y_rows, axis=0)                           # (G*L, Di)

        # ---- skip (D*u), SiLU(z) gate, lane-dense output projection -------------------
        y = y + xc_flat * D_ref[...]
        y = y * _silu(z)
        out = jnp.dot(y.astype(jnp.bfloat16), w_out_ref[...],
                      preferred_element_type=jnp.float32)             # (G*L, out_pad)
        out_ref[...] = out.reshape(G, L, out_pad)

    return kernel


def _pick_group_size(B, L):
    """Sequences per grid step: fill MXU M (<=256 rows) but keep >=2 grid steps if we can."""
    g_best = 1
    for g in range(1, B + 1):
        if B % g != 0 or g * L > 256:
            continue
        if g != 1 and B >= 2 and B // g < 2:
            continue
        g_best = g
    return g_best


def _vmem_limit_bytes(G, L, d_model, d_inner, d_state, d_conv, out_pad, t_chunk):
    f32, bf16 = 4, 2
    io = 2 * G * L * (d_model * bf16 + out_pad * f32)                 # double-buffered I/O blocks
    w = 2 * ((d_model * 2 * d_inner + d_inner * (d_inner + 2 * d_state)
              + d_inner * out_pad) * bf16
             + (d_conv * d_inner + 3 * d_inner + d_state * d_inner) * f32)
    live = G * L * (9 * d_inner + 2 * d_state + out_pad) * f32        # compiler-managed temps
    chunk = 8 * t_chunk * d_state * d_inner * f32                     # scan-chunk spill room
    est = io + w + live + chunk
    return int(min(64 * 1024 * 1024, max(32 * 1024 * 1024, 2 * est)))


def _cost_estimate(B, L, d_model, d_inner, d_state, d_conv, out_pad, t_chunk):
    n_passes = int(math.ceil(math.log2(t_chunk))) if t_chunk > 1 else 0
    matmul_flops = 2 * B * L * (d_model * 2 * d_inner
                                + d_inner * (d_inner + 2 * d_state)
                                + d_inner * out_pad)
    scan_flops = B * L * d_state * d_inner * (8 + 4 * n_passes)
    other_flops = B * L * d_inner * (2 * d_conv + 12)
    transcendentals = B * L * (d_state * d_inner + 6 * d_inner)
    bytes_accessed = (B * L * (d_model * 2 + out_pad * 4)
                      + 2 * (d_model * 2 * d_inner + d_inner * (d_inner + 2 * d_state)
                             + d_inner * out_pad)
                      + 4 * (d_conv * d_inner + 3 * d_inner + d_state * d_inner))
    return pl.CostEstimate(flops=int(matmul_flops + scan_flops + other_flops),
                           transcendentals=int(transcendentals),
                           bytes_accessed=int(bytes_accessed))


def mamba_forward(x_seq, params):
    """x_seq: (B, L, d_model) float32 -> (B, L, out_c) float32 (single Mamba block)."""
    B, L, d_model = x_seq.shape
    d_inner = params["w_in_x"].shape[1]
    d_conv = params["w_conv"].shape[0]
    d_state = params["w_B"].shape[1]
    out_c = params["w_out"].shape[1]
    out_pad = max(128, ((out_c + 127) // 128) * 128)                  # lane-dense output

    # ---- offline weight fusion (exact: no nonlinearity between the folded matmuls) ----
    # bf16 casts only for MXU operands; elementwise params stay f32.
    w_in = jnp.concatenate([params["w_in_x"], params["w_in_z"]],
                           axis=1).astype(jnp.bfloat16)                          # (dm, 2Di)
    w_dt_fold = jnp.dot(params["w_x_dt"], params["w_dt_proj"])                   # (Di, Di) f32
    w_xproj = jnp.concatenate([w_dt_fold, params["w_B"], params["w_C"]],
                              axis=1).astype(jnp.bfloat16)                       # (Di, Di+2N)
    w_out = jnp.zeros((d_inner, out_pad), jnp.float32)
    w_out = w_out.at[:, :out_c].set(params["w_out"]).astype(jnp.bfloat16)        # padded lanes

    weights = [w_in, params["w_conv"], params["b_conv"], w_xproj, params["b_dt_proj"],
               params["A_T"], params["D_row"], w_out]

    G = _pick_group_size(B, L)
    t_chunk = next(c for c in (8, 4, 2, 1) if L % c == 0)             # chunk stays in vregs
    kernel = _make_mamba_kernel(G, L, d_model, d_inner, d_state, d_conv, out_pad, t_chunk)

    in_specs = [pl.BlockSpec((G, L, d_model), lambda b: (b, 0, 0))]
    for w in weights:
        # Grid-invariant weights (constant index_map); Buffered(1) would trim one VMEM
        # buffer each but is omitted for portability across Pallas versions.
        in_specs.append(pl.BlockSpec(w.shape, lambda b, _n=w.ndim: (0,) * _n))
    out_specs = pl.BlockSpec((G, L, out_pad), lambda b: (b, 0, 0))

    y = pl.pallas_call(
        kernel,
        out_shape=jax.ShapeDtypeStruct((B, L, out_pad), jnp.float32),
        grid_spec=pltpu.PrefetchScalarGridSpec(
            num_scalar_prefetch=0,
            grid=(B // G,),
            in_specs=in_specs,
            out_specs=out_specs,
        ),
        # "parallel" batch axis: sharded across v7x's 2 TensorCores, neutral on v5e/v6e.
        compiler_params=pltpu.CompilerParams(
            dimension_semantics=("parallel",),
            vmem_limit_bytes=_vmem_limit_bytes(G, L, d_model, d_inner, d_state,
                                               d_conv, out_pad, t_chunk),
        ),
        cost_estimate=_cost_estimate(B, L, d_model, d_inner, d_state,
                                     d_conv, out_pad, t_chunk),
    )(x_seq.astype(jnp.bfloat16), *weights)

    return y[:, :, :out_c]


# --------------------------------------------------------------------------------------
# Parameter construction (deterministic, synthetic, module-shaped)
# --------------------------------------------------------------------------------------
def init_mamba_params(key, d_model, out_c, d_state=16, d_conv=4, expand=2):
    d_inner = expand * d_model
    dt_rank = math.ceil(d_model / 16)
    ks = jax.random.split(key, 10)

    def rn(k, shape, scale):
        return jax.random.normal(k, shape, jnp.float32) * scale

    # A = -exp(A_log), standard mamba init A_log = log(1..d_state); keep A^T (N, Di).
    A_T = -jnp.broadcast_to(
        jnp.arange(1, d_state + 1, dtype=jnp.float32)[:, None], (d_state, d_inner))

    return {
        "w_in_x": rn(ks[0], (d_model, d_inner), 0.10),
        "w_in_z": rn(ks[1], (d_model, d_inner), 0.10),
        "w_conv": rn(ks[2], (d_conv, d_inner), 0.20),
        "b_conv": rn(ks[3], (1, d_inner), 0.10),
        "w_x_dt": rn(ks[4], (d_inner, dt_rank), 0.10),
        "w_B": rn(ks[5], (d_inner, d_state), 0.10),
        "w_C": rn(ks[6], (d_inner, d_state), 0.10),
        "w_dt_proj": rn(ks[7], (dt_rank, d_inner), 0.30),
        "b_dt_proj": rn(ks[8], (1, d_inner), 0.10),
        "A_T": A_T,
        "D_row": jnp.ones((1, d_inner), jnp.float32),
        "w_out": rn(ks[9], (d_inner, out_c), 0.10),
    }


# --------------------------------------------------------------------------------------
# Full module forward: Double_SSM_Block_out
#   x (b,c,h,w) -> permute/flatten -> Mamba -> reshape -> permute(0,3,2,1)
# --------------------------------------------------------------------------------------
def double_ssm_block_out(x_nchw, params):
    b, c, h, w = x_nchw.shape
    out_c = params["w_out"].shape[1]
    seq = jnp.transpose(x_nchw, (0, 2, 3, 1)).reshape(b, h * w, c)      # (b, L, c)
    y = mamba_forward(seq, params)                                      # (b, L, out_c)
    y = y.reshape(b, h, w, out_c)
    # NOTE: (0, 3, 2, 1) matches the PyTorch reference literally -> (b, out_c, w, h).
    return jnp.transpose(y, (0, 3, 2, 1))


if __name__ == "__main__":
    n_channels, out_channels = 64, 32
    B, H, W = 2, 8, 4                                   # L = H*W = 32

    key = jax.random.PRNGKey(0)
    k_x, k_p = jax.random.split(key)

    x = jax.random.normal(k_x, (B, n_channels, H, W), jnp.float32)
    params = init_mamba_params(k_p, d_model=n_channels, out_c=out_channels)

    fwd = jax.jit(double_ssm_block_out)
    out = fwd(x, params)
    jax.block_until_ready(out)

    assert out.shape == (B, out_channels, W, H), out.shape
    assert bool(jnp.all(jnp.isfinite(out)))
    print("KERNEL_OK")
</pallas_src>

<mosaic_0001>
module attributes {stable_mosaic.version = 11 : i64} {
  func.func @kernel(%arg0: i32, %arg1: memref<1x32x64xbf16, #tpu.memory_space<vmem>>, %arg2: memref<64x256xbf16, #tpu.memory_space<vmem>>, %arg3: memref<4x128xf32, #tpu.memory_space<vmem>>, %arg4: memref<1x128xf32, #tpu.memory_space<vmem>>, %arg5: memref<128x160xbf16, #tpu.memory_space<vmem>>, %arg6: memref<1x128xf32, #tpu.memory_space<vmem>>, %arg7: memref<16x128xf32, #tpu.memory_space<vmem>>, %arg8: memref<1x128xf32, #tpu.memory_space<vmem>>, %arg9: memref<128x128xbf16, #tpu.memory_space<vmem>>, %arg10: memref<1x32x128xf32, #tpu.memory_space<vmem>>) attributes {dimension_semantics = [#tpu.dimension_semantics<parallel>], iteration_bounds = array<i64: 2>, scalar_prefetch = 0 : i64, scratch_operands = 0 : i64, tpu.core_type = #tpu.core_type<tc>, window_params = [{transform_indices = @transform_0, window_bounds = array<i64: 1, 32, 64>}, {pipeline_mode = #tpu.pipeline_mode<synchronous>, transform_indices = @transform_1, window_bounds = array<i64: 64, 256>}, {pipeline_mode = #tpu.pipeline_mode<synchronous>, transform_indices = @transform_2, window_bounds = array<i64: 4, 128>}, {pipeline_mode = #tpu.pipeline_mode<synchronous>, transform_indices = @transform_3, window_bounds = array<i64: 1, 128>}, {pipeline_mode = #tpu.pipeline_mode<synchronous>, transform_indices = @transform_4, window_bounds = array<i64: 128, 160>}, {pipeline_mode = #tpu.pipeline_mode<synchronous>, transform_indices = @transform_5, window_bounds = array<i64: 1, 128>}, {pipeline_mode = #tpu.pipeline_mode<synchronous>, transform_indices = @transform_6, window_bounds = array<i64: 16, 128>}, {pipeline_mode = #tpu.pipeline_mode<synchronous>, transform_indices = @transform_7, window_bounds = array<i64: 1, 128>}, {pipeline_mode = #tpu.pipeline_mode<synchronous>, transform_indices = @transform_8, window_bounds = array<i64: 128, 128>}, {transform_indices = @transform_9, window_bounds = array<i64: 1, 32, 128>}]} {
    %c0 = arith.constant 0 : index
    %c0_0 = arith.constant 0 : index
    %c0_1 = arith.constant 0 : index
    %0 = vector.load %arg1[%c0, %c0_0, %c0_1] : memref<1x32x64xbf16, #tpu.memory_space<vmem>>, vector<1x32x64xbf16>
    %1 = vector.shape_cast %0 : vector<1x32x64xbf16> to vector<32x64xbf16>
    %c0_2 = arith.constant 0 : index
    %c0_3 = arith.constant 0 : index
    %2 = vector.load %arg2[%c0_2, %c0_3] : memref<64x256xbf16, #tpu.memory_space<vmem>>, vector<64x256xbf16>
    %cst = arith.constant dense<0.000000e+00> : vector<32x256xf32>
    %3 = tpu.matmul %1, %2, %cst {dimension_numbers = #tpu.dot_dimension_numbers<[1], [0], [0], [1], [0, 0, 1, 1], [], []>} : vector<32x64xbf16>, vector<64x256xbf16>, vector<32x256xf32> -> vector<32x256xf32>
    %4 = vector.extract_strided_slice %3 {offsets = [0, 0], sizes = [32, 128], strides = [1, 1]} : vector<32x256xf32> to vector<32x128xf32>
    %5 = vector.shape_cast %4 : vector<32x128xf32> to vector<1x32x128xf32>
    %6 = vector.extract_strided_slice %3 {offsets = [0, 128], sizes = [32, 128], strides = [1, 1]} : vector<32x256xf32> to vector<32x128xf32>
    %c0_4 = arith.constant 0 : index
    %c0_5 = arith.constant 0 : index
    %7 = vector.load %arg3[%c0_4, %c0_5] : memref<4x128xf32, #tpu.memory_space<vmem>>, vector<4x128xf32>
    %c0_6 = arith.constant 0 : index
    %c0_7 = arith.constant 0 : index
    %8 = vector.load %arg4[%c0_6, %c0_7] : memref<1x128xf32, #tpu.memory_space<vmem>>, vector<1x128xf32>
    %9 = tpu.iota {dimensions = array<i32: 0>} : vector<32x128xi32>
    %10 = vector.shape_cast %5 : vector<1x32x128xf32> to vector<32x128xf32>
    %11 = vector.extract_strided_slice %7 {offsets = [3, 0], sizes = [1, 128], strides = [1, 1]} : vector<4x128xf32> to vector<1x128xf32>
    %12 = vector.broadcast %11 : vector<1x128xf32> to vector<32x128xf32>
    %13 = arith.mulf %10, %12 : vector<32x128xf32>
    %c3_i32 = arith.constant 3 : i32
    %14 = tpu.dynamic_rotate %10 by %c3_i32 dim 0 : vector<32x128xf32>, i32 -> vector<32x128xf32>
    %c3_i32_8 = arith.constant 3 : i32
    %15 = vector.broadcast %c3_i32_8 : i32 to vector<32x128xi32>
    %16 = arith.cmpi sge, %9, %15 : vector<32x128xi32>
    %cst_9 = arith.constant 0.000000e+00 : f32
    %17 = vector.broadcast %cst_9 : f32 to vector<32x128xf32>
    %18 = arith.select %16, %14, %17 : vector<32x128xi1>, vector<32x128xf32>
    %19 = vector.extract_strided_slice %7 {offsets = [0, 0], sizes = [1, 128], strides = [1, 1]} : vector<4x128xf32> to vector<1x128xf32>
    %20 = vector.broadcast %19 : vector<1x128xf32> to vector<32x128xf32>
    %21 = arith.mulf %18, %20 : vector<32x128xf32>
    %22 = arith.addf %13, %21 : vector<32x128xf32>
    %c2_i32 = arith.constant 2 : i32
    %23 = tpu.dynamic_rotate %10 by %c2_i32 dim 0 : vector<32x128xf32>, i32 -> vector<32x128xf32>
    %c2_i32_10 = arith.constant 2 : i32
    %24 = vector.broadcast %c2_i32_10 : i32 to vector<32x128xi32>
    %25 = arith.cmpi sge, %9, %24 : vector<32x128xi32>
    %cst_11 = arith.constant 0.000000e+00 : f32
    %26 = vector.broadcast %cst_11 : f32 to vector<32x128xf32>
    %27 = arith.select %25, %23, %26 : vector<32x128xi1>, vector<32x128xf32>
    %28 = vector.extract_strided_slice %7 {offsets = [1, 0], sizes = [1, 128], strides = [1, 1]} : vector<4x128xf32> to vector<1x128xf32>
    %29 = vector.broadcast %28 : vector<1x128xf32> to vector<32x128xf32>
    %30 = arith.mulf %27, %29 : vector<32x128xf32>
    %31 = arith.addf %22, %30 : vector<32x128xf32>
    %c1_i32 = arith.constant 1 : i32
    %32 = tpu.dynamic_rotate %10 by %c1_i32 dim 0 : vector<32x128xf32>, i32 -> vector<32x128xf32>
    %c1_i32_12 = arith.constant 1 : i32
    %33 = vector.broadcast %c1_i32_12 : i32 to vector<32x128xi32>
    %34 = arith.cmpi sge, %9, %33 : vector<32x128xi32>
    %cst_13 = arith.constant 0.000000e+00 : f32
    %35 = vector.broadcast %cst_13 : f32 to vector<32x128xf32>
    %36 = arith.select %34, %32, %35 : vector<32x128xi1>, vector<32x128xf32>
    %37 = vector.extract_strided_slice %7 {offsets = [2, 0], sizes = [1, 128], strides = [1, 1]} : vector<4x128xf32> to vector<1x128xf32>
    %38 = vector.broadcast %37 : vector<1x128xf32> to vector<32x128xf32>
    %39 = arith.mulf %36, %38 : vector<32x128xf32>
    %40 = arith.addf %31, %39 : vector<32x128xf32>
    %41 = vector.broadcast %8 : vector<1x128xf32> to vector<32x128xf32>
    %42 = arith.addf %40, %41 : vector<32x128xf32>
    %cst_14 = arith.constant 5.000000e-01 : f32
    %43 = vector.broadcast %cst_14 : f32 to vector<32x128xf32>
    %44 = arith.mulf %43, %42 : vector<32x128xf32>
    %45 = math.tanh %44 : vector<32x128xf32>
    %cst_15 = arith.constant 1.000000e+00 : f32
    %46 = vector.broadcast %cst_15 : f32 to vector<32x128xf32>
    %47 = arith.addf %45, %46 : vector<32x128xf32>
    %cst_16 = arith.constant 5.000000e-01 : f32
    %48 = vector.broadcast %cst_16 : f32 to vector<32x128xf32>
    %49 = arith.mulf %48, %47 : vector<32x128xf32>
    %50 = arith.mulf %42, %49 : vector<32x128xf32>
    %51 = vector.shape_cast %50 : vector<32x128xf32> to vector<1x32x128xf32>
    %52 = vector.shape_cast %51 : vector<1x32x128xf32> to vector<32x128xf32>
    %53 = arith.truncf %52 : vector<32x128xf32> to vector<32x128xbf16>
    %c0_17 = arith.constant 0 : index
    %c0_18 = arith.constant 0 : index
    %54 = vector.load %arg5[%c0_17, %c0_18] : memref<128x160xbf16, #tpu.memory_space<vmem>>, vector<128x160xbf16>
    %cst_19 = arith.constant dense<0.000000e+00> : vector<32x160xf32>
    %55 = tpu.matmul %53, %54, %cst_19 {dimension_numbers = #tpu.dot_dimension_numbers<[1], [0], [0], [1], [0, 0, 1, 1], [], []>} : vector<32x128xbf16>, vector<128x160xbf16>, vector<32x160xf32> -> vector<32x160xf32>
    %56 = vector.extract_strided_slice %55 {offsets = [0, 0], sizes = [32, 128], strides = [1, 1]} : vector<32x160xf32> to vector<32x128xf32>
    %c0_20 = arith.constant 0 : index
    %c0_21 = arith.constant 0 : index
    %57 = vector.load %arg6[%c0_20, %c0_21] : memref<1x128xf32, #tpu.memory_space<vmem>>, vector<1x128xf32>
    %58 = vector.broadcast %57 : vector<1x128xf32> to vector<32x128xf32>
    %59 = arith.addf %56, %58 : vector<32x128xf32>
    %cst_22 = arith.constant 0.000000e+00 : f32
    %60 = vector.broadcast %cst_22 : f32 to vector<32x128xf32>
    %61 = arith.maximumf %59, %60 : vector<32x128xf32>
    %62 = math.absf %59 : vector<32x128xf32>
    %cst_23 = arith.constant 0.000000e+00 : f32
    %63 = vector.broadcast %cst_23 : f32 to vector<32x128xf32>
    %64 = arith.subf %63, %62 : vector<32x128xf32>
    %65 = math.exp %64 : vector<32x128xf32>
    %cst_24 = arith.constant 1.000000e+00 : f32
    %66 = vector.broadcast %cst_24 : f32 to vector<32x128xf32>
    %67 = arith.addf %66, %65 : vector<32x128xf32>
    %68 = math.log %67 : vector<32x128xf32>
    %69 = arith.addf %61, %68 : vector<32x128xf32>
    %70 = vector.extract_strided_slice %55 {offsets = [0, 128], sizes = [32, 16], strides = [1, 1]} : vector<32x160xf32> to vector<32x16xf32>
    %71 = vector.extract_strided_slice %55 {offsets = [0, 144], sizes = [32, 16], strides = [1, 1]} : vector<32x160xf32> to vector<32x16xf32>
    %72 = arith.mulf %69, %52 : vector<32x128xf32>
    %73 = vector.shape_cast %72 : vector<32x128xf32> to vector<1x32x128xf32>
    %74 = vector.shape_cast %69 : vector<32x128xf32> to vector<1x32x128xf32>
    %75 = vector.shape_cast %70 : vector<32x16xf32> to vector<1x32x16xf32>
    %76 = vector.shape_cast %71 : vector<32x16xf32> to vector<1x32x16xf32>
    %c0_25 = arith.constant 0 : index
    %c0_26 = arith.constant 0 : index
    %77 = vector.load %arg7[%c0_25, %c0_26] : memref<16x128xf32, #tpu.memory_space<vmem>>, vector<16x128xf32>
    %cst_27 = arith.constant 0.000000e+00 : f32
    %78 = vector.broadcast %cst_27 : f32 to vector<16x128xf32>
    %79 = vector.extract_strided_slice %74 {offsets = [0, 0, 0], sizes = [1, 8, 128], strides = [1, 1, 1]} : vector<1x32x128xf32> to vector<1x8x128xf32>
    %80 = vector.shape_cast %79 : vector<1x8x128xf32> to vector<8x128xf32>
    %81 = vector.extract_strided_slice %73 {offsets = [0, 0, 0], sizes = [1, 8, 128], strides = [1, 1, 1]} : vector<1x32x128xf32> to vector<1x8x128xf32>
    %82 = vector.shape_cast %81 : vector<1x8x128xf32> to vector<8x128xf32>
    %83 = vector.extract_strided_slice %75 {offsets = [0, 0, 0], sizes = [1, 8, 16], strides = [1, 1, 1]} : vector<1x32x16xf32> to vector<1x8x16xf32>
    %84 = vector.shape_cast %83 : vector<1x8x16xf32> to vector<8x16xf32>
    %85 = vector.extract_strided_slice %76 {offsets = [0, 0, 0], sizes = [1, 8, 16], strides = [1, 1, 1]} : vector<1x32x16xf32> to vector<1x8x16xf32>
    %86 = vector.shape_cast %85 : vector<1x8x16xf32> to vector<8x16xf32>
    %87 = vector.shape_cast %80 : vector<8x128xf32> to vector<8x1x128xf32>
    %88 = vector.shape_cast %77 : vector<16x128xf32> to vector<1x16x128xf32>
    %89 = vector.broadcast %87 : vector<8x1x128xf32> to vector<8x16x128xf32>
    %90 = vector.broadcast %88 : vector<1x16x128xf32> to vector<8x16x128xf32>
    %91 = arith.mulf %89, %90 : vector<8x16x128xf32>
    %92 = math.exp %91 : vector<8x16x128xf32>
    %93 = vector.shape_cast %84 : vector<8x16xf32> to vector<8x16x1xf32>
    %94 = vector.shape_cast %82 : vector<8x128xf32> to vector<8x1x128xf32>
    %95 = vector.broadcast %93 : vector<8x16x1xf32> to vector<8x16x128xf32>
    %96 = vector.broadcast %94 : vector<8x1x128xf32> to vector<8x16x128xf32>
    %97 = arith.mulf %95, %96 : vector<8x16x128xf32>
    %cst_28 = arith.constant 1.000000e+00 : f32
    %98 = vector.broadcast %cst_28 : f32 to vector<1x16x128xf32>
    %cst_29 = arith.constant 0.000000e+00 : f32
    %99 = vector.broadcast %cst_29 : f32 to vector<1x16x128xf32>
    %100 = vector.extract_strided_slice %92 {offsets = [0, 0, 0], sizes = [7, 16, 128], strides = [1, 1, 1]} : vector<8x16x128xf32> to vector<7x16x128xf32>
    %101 = tpu.concatenate %98, %100 in 0 : vector<1x16x128xf32>, vector<7x16x128xf32> -> vector<8x16x128xf32>
    %102 = vector.extract_strided_slice %97 {offsets = [0, 0, 0], sizes = [7, 16, 128], strides = [1, 1, 1]} : vector<8x16x128xf32> to vector<7x16x128xf32>
    %103 = tpu.concatenate %99, %102 in 0 : vector<1x16x128xf32>, vector<7x16x128xf32> -> vector<8x16x128xf32>
    %104 = arith.mulf %92, %103 : vector<8x16x128xf32>
    %105 = arith.addf %104, %97 : vector<8x16x128xf32>
    %106 = arith.mulf %92, %101 : vector<8x16x128xf32>
    %cst_30 = arith.constant 1.000000e+00 : f32
    %107 = vector.broadcast %cst_30 : f32 to vector<2x16x128xf32>
    %cst_31 = arith.constant 0.000000e+00 : f32
    %108 = vector.broadcast %cst_31 : f32 to vector<2x16x128xf32>
    %109 = vector.extract_strided_slice %106 {offsets = [0, 0, 0], sizes = [6, 16, 128], strides = [1, 1, 1]} : vector<8x16x128xf32> to vector<6x16x128xf32>
    %110 = tpu.concatenate %107, %109 in 0 : vector<2x16x128xf32>, vector<6x16x128xf32> -> vector<8x16x128xf32>
    %111 = vector.extract_strided_slice %105 {offsets = [0, 0, 0], sizes = [6, 16, 128], strides = [1, 1, 1]} : vector<8x16x128xf32> to vector<6x16x128xf32>
    %112 = tpu.concatenate %108, %111 in 0 : vector<2x16x128xf32>, vector<6x16x128xf32> -> vector<8x16x128xf32>
    %113 = arith.mulf %106, %112 : vector<8x16x128xf32>
    %114 = arith.addf %113, %105 : vector<8x16x128xf32>
    %115 = arith.mulf %106, %110 : vector<8x16x128xf32>
    %cst_32 = arith.constant 1.000000e+00 : f32
    %116 = vector.broadcast %cst_32 : f32 to vector<4x16x128xf32>
    %cst_33 = arith.constant 0.000000e+00 : f32
    %117 = vector.broadcast %cst_33 : f32 to vector<4x16x128xf32>
    %118 = vector.extract_strided_slice %115 {offsets = [0, 0, 0], sizes = [4, 16, 128], strides = [1, 1, 1]} : vector<8x16x128xf32> to vector<4x16x128xf32>
    %119 = tpu.concatenate %116, %118 in 0 : vector<4x16x128xf32>, vector<4x16x128xf32> -> vector<8x16x128xf32>
    %120 = vector.extract_strided_slice %114 {offsets = [0, 0, 0], sizes = [4, 16, 128], strides = [1, 1, 1]} : vector<8x16x128xf32> to vector<4x16x128xf32>
    %121 = tpu.concatenate %117, %120 in 0 : vector<4x16x128xf32>, vector<4x16x128xf32> -> vector<8x16x128xf32>
    %122 = arith.mulf %115, %121 : vector<8x16x128xf32>
    %123 = arith.addf %122, %114 : vector<8x16x128xf32>
    %124 = arith.mulf %115, %119 : vector<8x16x128xf32>
    %125 = vector.shape_cast %78 : vector<16x128xf32> to vector<1x16x128xf32>
    %126 = vector.broadcast %125 : vector<1x16x128xf32> to vector<8x16x128xf32>
    %127 = arith.mulf %124, %126 : vector<8x16x128xf32>
    %128 = arith.addf %127, %123 : vector<8x16x128xf32>
    %129 = vector.extract_strided_slice %128 {offsets = [7, 0, 0], sizes = [1, 16, 128], strides = [1, 1, 1]} : vector<8x16x128xf32> to vector<1x16x128xf32>
    %130 = vector.shape_cast %129 : vector<1x16x128xf32> to vector<16x128xf32>
    %131 = vector.shape_cast %86 : vector<8x16xf32> to vector<8x16x1xf32>
    %132 = vector.broadcast %131 : vector<8x16x1xf32> to vector<8x16x128xf32>
    %133 = arith.mulf %132, %128 : vector<8x16x128xf32>
    %cst_34 = arith.constant dense<0.000000e+00> : vector<8x128xf32>
    %134 = vector.multi_reduction <add>, %133, %cst_34 [1] : vector<8x16x128xf32> to vector<8x128xf32>
    %135 = vector.extract_strided_slice %74 {offsets = [0, 8, 0], sizes = [1, 8, 128], strides = [1, 1, 1]} : vector<1x32x128xf32> to vector<1x8x128xf32>
    %136 = vector.shape_cast %135 : vector<1x8x128xf32> to vector<8x128xf32>
    %137 = vector.extract_strided_slice %73 {offsets = [0, 8, 0], sizes = [1, 8, 128], strides = [1, 1, 1]} : vector<1x32x128xf32> to vector<1x8x128xf32>
    %138 = vector.shape_cast %137 : vector<1x8x128xf32> to vector<8x128xf32>
    %139 = vector.extract_strided_slice %75 {offsets = [0, 8, 0], sizes = [1, 8, 16], strides = [1, 1, 1]} : vector<1x32x16xf32> to vector<1x8x16xf32>
    %140 = vector.shape_cast %139 : vector<1x8x16xf32> to vector<8x16xf32>
    %141 = vector.extract_strided_slice %76 {offsets = [0, 8, 0], sizes = [1, 8, 16], strides = [1, 1, 1]} : vector<1x32x16xf32> to vector<1x8x16xf32>
    %142 = vector.shape_cast %141 : vector<1x8x16xf32> to vector<8x16xf32>
    %143 = vector.shape_cast %136 : vector<8x128xf32> to vector<8x1x128xf32>
    %144 = vector.shape_cast %77 : vector<16x128xf32> to vector<1x16x128xf32>
    %145 = vector.broadcast %143 : vector<8x1x128xf32> to vector<8x16x128xf32>
    %146 = vector.broadcast %144 : vector<1x16x128xf32> to vector<8x16x128xf32>
    %147 = arith.mulf %145, %146 : vector<8x16x128xf32>
    %148 = math.exp %147 : vector<8x16x128xf32>
    %149 = vector.shape_cast %140 : vector<8x16xf32> to vector<8x16x1xf32>
    %150 = vector.shape_cast %138 : vector<8x128xf32> to vector<8x1x128xf32>
    %151 = vector.broadcast %149 : vector<8x16x1xf32> to vector<8x16x128xf32>
    %152 = vector.broadcast %150 : vector<8x1x128xf32> to vector<8x16x128xf32>
    %153 = arith.mulf %151, %152 : vector<8x16x128xf32>
    %cst_35 = arith.constant 1.000000e+00 : f32
    %154 = vector.broadcast %cst_35 : f32 to vector<1x16x128xf32>
    %cst_36 = arith.constant 0.000000e+00 : f32
    %155 = vector.broadcast %cst_36 : f32 to vector<1x16x128xf32>
    %156 = vector.extract_strided_slice %148 {offsets = [0, 0, 0], sizes = [7, 16, 128], strides = [1, 1, 1]} : vector<8x16x128xf32> to vector<7x16x128xf32>
    %157 = tpu.concatenate %154, %156 in 0 : vector<1x16x128xf32>, vector<7x16x128xf32> -> vector<8x16x128xf32>
    %158 = vector.extract_strided_slice %153 {offsets = [0, 0, 0], sizes = [7, 16, 128], strides = [1, 1, 1]} : vector<8x16x128xf32> to vector<7x16x128xf32>
    %159 = tpu.concatenate %155, %158 in 0 : vector<1x16x128xf32>, vector<7x16x128xf32> -> vector<8x16x128xf32>
    %160 = arith.mulf %148, %159 : vector<8x16x128xf32>
    %161 = arith.addf %160, %153 : vector<8x16x128xf32>
    %162 = arith.mulf %148, %157 : vector<8x16x128xf32>
    %cst_37 = arith.constant 1.000000e+00 : f32
    %163 = vector.broadcast %cst_37 : f32 to vector<2x16x128xf32>
    %cst_38 = arith.constant 0.000000e+00 : f32
    %164 = vector.broadcast %cst_38 : f32 to vector<2x16x128xf32>
    %165 = vector.extract_strided_slice %162 {offsets = [0, 0, 0], sizes = [6, 16, 128], strides = [1, 1, 1]} : vector<8x16x128xf32> to vector<6x16x128xf32>
    %166 = tpu.concatenate %163, %165 in 0 : vector<2x16x128xf32>, vector<6x16x128xf32> -> vector<8x16x128xf32>
    %167 = vector.extract_strided_slice %161 {offsets = [0, 0, 0], sizes = [6, 16, 128], strides = [1, 1, 1]} : vector<8x16x128xf32> to vector<6x16x128xf32>
    %168 = tpu.concatenate %164, %167 in 0 : vector<2x16x128xf32>, vector<6x16x128xf32> -> vector<8x16x128xf32>
    %169 = arith.mulf %162, %168 : vector<8x16x128xf32>
    %170 = arith.addf %169, %161 : vector<8x16x128xf32>
    %171 = arith.mulf %162, %166 : vector<8x16x128xf32>
    %cst_39 = arith.constant 1.000000e+00 : f32
    %172 = vector.broadcast %cst_39 : f32 to vector<4x16x128xf32>
    %cst_40 = arith.constant 0.000000e+00 : f32
    %173 = vector.broadcast %cst_40 : f32 to vector<4x16x128xf32>
    %174 = vector.extract_strided_slice %171 {offsets = [0, 0, 0], sizes = [4, 16, 128], strides = [1, 1, 1]} : vector<8x16x128xf32> to vector<4x16x128xf32>
    %175 = tpu.concatenate %172, %174 in 0 : vector<4x16x128xf32>, vector<4x16x128xf32> -> vector<8x16x128xf32>
    %176 = vector.extract_strided_slice %170 {offsets = [0, 0, 0], sizes = [4, 16, 128], strides = [1, 1, 1]} : vector<8x16x128xf32> to vector<4x16x128xf32>
    %177 = tpu.concatenate %173, %176 in 0 : vector<4x16x128xf32>, vector<4x16x128xf32> -> vector<8x16x128xf32>
    %178 = arith.mulf %171, %177 : vector<8x16x128xf32>
    %179 = arith.addf %178, %170 : vector<8x16x128xf32>
    %180 = arith.mulf %171, %175 : vector<8x16x128xf32>
    %181 = vector.shape_cast %130 : vector<16x128xf32> to vector<1x16x128xf32>
    %182 = vector.broadcast %181 : vector<1x16x128xf32> to vector<8x16x128xf32>
    %183 = arith.mulf %180, %182 : vector<8x16x128xf32>
    %184 = arith.addf %183, %179 : vector<8x16x128xf32>
    %185 = vector.extract_strided_slice %184 {offsets = [7, 0, 0], sizes = [1, 16, 128], strides = [1, 1, 1]} : vector<8x16x128xf32> to vector<1x16x128xf32>
    %186 = vector.shape_cast %185 : vector<1x16x128xf32> to vector<16x128xf32>
    %187 = vector.shape_cast %142 : vector<8x16xf32> to vector<8x16x1xf32>
    %188 = vector.broadcast %187 : vector<8x16x1xf32> to vector<8x16x128xf32>
    %189 = arith.mulf %188, %184 : vector<8x16x128xf32>
    %cst_41 = arith.constant dense<0.000000e+00> : vector<8x128xf32>
    %190 = vector.multi_reduction <add>, %189, %cst_41 [1] : vector<8x16x128xf32> to vector<8x128xf32>
    %191 = vector.extract_strided_slice %74 {offsets = [0, 16, 0], sizes = [1, 8, 128], strides = [1, 1, 1]} : vector<1x32x128xf32> to vector<1x8x128xf32>
    %192 = vector.shape_cast %191 : vector<1x8x128xf32> to vector<8x128xf32>
    %193 = vector.extract_strided_slice %73 {offsets = [0, 16, 0], sizes = [1, 8, 128], strides = [1, 1, 1]} : vector<1x32x128xf32> to vector<1x8x128xf32>
    %194 = vector.shape_cast %193 : vector<1x8x128xf32> to vector<8x128xf32>
    %195 = vector.extract_strided_slice %75 {offsets = [0, 16, 0], sizes = [1, 8, 16], strides = [1, 1, 1]} : vector<1x32x16xf32> to vector<1x8x16xf32>
    %196 = vector.shape_cast %195 : vector<1x8x16xf32> to vector<8x16xf32>
    %197 = vector.extract_strided_slice %76 {offsets = [0, 16, 0], sizes = [1, 8, 16], strides = [1, 1, 1]} : vector<1x32x16xf32> to vector<1x8x16xf32>
    %198 = vector.shape_cast %197 : vector<1x8x16xf32> to vector<8x16xf32>
    %199 = vector.shape_cast %192 : vector<8x128xf32> to vector<8x1x128xf32>
    %200 = vector.shape_cast %77 : vector<16x128xf32> to vector<1x16x128xf32>
    %201 = vector.broadcast %199 : vector<8x1x128xf32> to vector<8x16x128xf32>
    %202 = vector.broadcast %200 : vector<1x16x128xf32> to vector<8x16x128xf32>
    %203 = arith.mulf %201, %202 : vector<8x16x128xf32>
    %204 = math.exp %203 : vector<8x16x128xf32>
    %205 = vector.shape_cast %196 : vector<8x16xf32> to vector<8x16x1xf32>
    %206 = vector.shape_cast %194 : vector<8x128xf32> to vector<8x1x128xf32>
    %207 = vector.broadcast %205 : vector<8x16x1xf32> to vector<8x16x128xf32>
    %208 = vector.broadcast %206 : vector<8x1x128xf32> to vector<8x16x128xf32>
    %209 = arith.mulf %207, %208 : vector<8x16x128xf32>
    %cst_42 = arith.constant 1.000000e+00 : f32
    %210 = vector.broadcast %cst_42 : f32 to vector<1x16x128xf32>
    %cst_43 = arith.constant 0.000000e+00 : f32
    %211 = vector.broadcast %cst_43 : f32 to vector<1x16x128xf32>
    %212 = vector.extract_strided_slice %204 {offsets = [0, 0, 0], sizes = [7, 16, 128], strides = [1, 1, 1]} : vector<8x16x128xf32> to vector<7x16x128xf32>
    %213 = tpu.concatenate %210, %212 in 0 : vector<1x16x128xf32>, vector<7x16x128xf32> -> vector<8x16x128xf32>
    %214 = vector.extract_strided_slice %209 {offsets = [0, 0, 0], sizes = [7, 16, 128], strides = [1, 1, 1]} : vector<8x16x128xf32> to vector<7x16x128xf32>
    %215 = tpu.concatenate %211, %214 in 0 : vector<1x16x128xf32>, vector<7x16x128xf32> -> vector<8x16x128xf32>
    %216 = arith.mulf %204, %215 : vector<8x16x128xf32>
    %217 = arith.addf %216, %209 : vector<8x16x128xf32>
    %218 = arith.mulf %204, %213 : vector<8x16x128xf32>
    %cst_44 = arith.constant 1.000000e+00 : f32
    %219 = vector.broadcast %cst_44 : f32 to vector<2x16x128xf32>
    %cst_45 = arith.constant 0.000000e+00 : f32
    %220 = vector.broadcast %cst_45 : f32 to vector<2x16x128xf32>
    %221 = vector.extract_strided_slice %218 {offsets = [0, 0, 0], sizes = [6, 16, 128], strides = [1, 1, 1]} : vector<8x16x128xf32> to vector<6x16x128xf32>
    %222 = tpu.concatenate %219, %221 in 0 : vector<2x16x128xf32>, vector<6x16x128xf32> -> vector<8x16x128xf32>
    %223 = vector.extract_strided_slice %217 {offsets = [0, 0, 0], sizes = [6, 16, 128], strides = [1, 1, 1]} : vector<8x16x128xf32> to vector<6x16x128xf32>
    %224 = tpu.concatenate %220, %223 in 0 : vector<2x16x128xf32>, vector<6x16x128xf32> -> vector<8x16x128xf32>
    %225 = arith.mulf %218, %224 : vector<8x16x128xf32>
    %226 = arith.addf %225, %217 : vector<8x16x128xf32>
    %227 = arith.mulf %218, %222 : vector<8x16x128xf32>
    %cst_46 = arith.constant 1.000000e+00 : f32
    %228 = vector.broadcast %cst_46 : f32 to vector<4x16x128xf32>
    %cst_47 = arith.constant 0.000000e+00 : f32
    %229 = vector.broadcast %cst_47 : f32 to vector<4x16x128xf32>
    %230 = vector.extract_strided_slice %227 {offsets = [0, 0, 0], sizes = [4, 16, 128], strides = [1, 1, 1]} : vector<8x16x128xf32> to vector<4x16x128xf32>
    %231 = tpu.concatenate %228, %230 in 0 : vector<4x16x128xf32>, vector<4x16x128xf32> -> vector<8x16x128xf32>
    %232 = vector.extract_strided_slice %226 {offsets = [0, 0, 0], sizes = [4, 16, 128], strides = [1, 1, 1]} : vector<8x16x128xf32> to vector<4x16x128xf32>
    %233 = tpu.concatenate %229, %232 in 0 : vector<4x16x128xf32>, vector<4x16x128xf32> -> vector<8x16x128xf32>
    %234 = arith.mulf %227, %233 : vector<8x16x128xf32>
    %235 = arith.addf %234, %226 : vector<8x16x128xf32>
    %236 = arith.mulf %227, %231 : vector<8x16x128xf32>
    %237 = vector.shape_cast %186 : vector<16x128xf32> to vector<1x16x128xf32>
    %238 = vector.broadcast %237 : vector<1x16x128xf32> to vector<8x16x128xf32>
    %239 = arith.mulf %236, %238 : vector<8x16x128xf32>
    %240 = arith.addf %239, %235 : vector<8x16x128xf32>
    %241 = vector.extract_strided_slice %240 {offsets = [7, 0, 0], sizes = [1, 16, 128], strides = [1, 1, 1]} : vector<8x16x128xf32> to vector<1x16x128xf32>
    %242 = vector.shape_cast %241 : vector<1x16x128xf32> to vector<16x128xf32>
    %243 = vector.shape_cast %198 : vector<8x16xf32> to vector<8x16x1xf32>
    %244 = vector.broadcast %243 : vector<8x16x1xf32> to vector<8x16x128xf32>
    %245 = arith.mulf %244, %240 : vector<8x16x128xf32>
    %cst_48 = arith.constant dense<0.000000e+00> : vector<8x128xf32>
    %246 = vector.multi_reduction <add>, %245, %cst_48 [1] : vector<8x16x128xf32> to vector<8x128xf32>
    %247 = vector.extract_strided_slice %74 {offsets = [0, 24, 0], sizes = [1, 8, 128], strides = [1, 1, 1]} : vector<1x32x128xf32> to vector<1x8x128xf32>
    %248 = vector.shape_cast %247 : vector<1x8x128xf32> to vector<8x128xf32>
    %249 = vector.extract_strided_slice %73 {offsets = [0, 24, 0], sizes = [1, 8, 128], strides = [1, 1, 1]} : vector<1x32x128xf32> to vector<1x8x128xf32>
    %250 = vector.shape_cast %249 : vector<1x8x128xf32> to vector<8x128xf32>
    %251 = vector.extract_strided_slice %75 {offsets = [0, 24, 0], sizes = [1, 8, 16], strides = [1, 1, 1]} : vector<1x32x16xf32> to vector<1x8x16xf32>
    %252 = vector.shape_cast %251 : vector<1x8x16xf32> to vector<8x16xf32>
    %253 = vector.extract_strided_slice %76 {offsets = [0, 24, 0], sizes = [1, 8, 16], strides = [1, 1, 1]} : vector<1x32x16xf32> to vector<1x8x16xf32>
    %254 = vector.shape_cast %253 : vector<1x8x16xf32> to vector<8x16xf32>
    %255 = vector.shape_cast %248 : vector<8x128xf32> to vector<8x1x128xf32>
    %256 = vector.shape_cast %77 : vector<16x128xf32> to vector<1x16x128xf32>
    %257 = vector.broadcast %255 : vector<8x1x128xf32> to vector<8x16x128xf32>
    %258 = vector.broadcast %256 : vector<1x16x128xf32> to vector<8x16x128xf32>
    %259 = arith.mulf %257, %258 : vector<8x16x128xf32>
    %260 = math.exp %259 : vector<8x16x128xf32>
    %261 = vector.shape_cast %252 : vector<8x16xf32> to vector<8x16x1xf32>
    %262 = vector.shape_cast %250 : vector<8x128xf32> to vector<8x1x128xf32>
    %263 = vector.broadcast %261 : vector<8x16x1xf32> to vector<8x16x128xf32>
    %264 = vector.broadcast %262 : vector<8x1x128xf32> to vector<8x16x128xf32>
    %265 = arith.mulf %263, %264 : vector<8x16x128xf32>
    %cst_49 = arith.constant 1.000000e+00 : f32
    %266 = vector.broadcast %cst_49 : f32 to vector<1x16x128xf32>
    %cst_50 = arith.constant 0.000000e+00 : f32
    %267 = vector.broadcast %cst_50 : f32 to vector<1x16x128xf32>
    %268 = vector.extract_strided_slice %260 {offsets = [0, 0, 0], sizes = [7, 16, 128], strides = [1, 1, 1]} : vector<8x16x128xf32> to vector<7x16x128xf32>
    %269 = tpu.concatenate %266, %268 in 0 : vector<1x16x128xf32>, vector<7x16x128xf32> -> vector<8x16x128xf32>
    %270 = vector.extract_strided_slice %265 {offsets = [0, 0, 0], sizes = [7, 16, 128], strides = [1, 1, 1]} : vector<8x16x128xf32> to vector<7x16x128xf32>
    %271 = tpu.concatenate %267, %270 in 0 : vector<1x16x128xf32>, vector<7x16x128xf32> -> vector<8x16x128xf32>
    %272 = arith.mulf %260, %271 : vector<8x16x128xf32>
    %273 = arith.addf %272, %265 : vector<8x16x128xf32>
    %274 = arith.mulf %260, %269 : vector<8x16x128xf32>
    %cst_51 = arith.constant 1.000000e+00 : f32
    %275 = vector.broadcast %cst_51 : f32 to vector<2x16x128xf32>
    %cst_52 = arith.constant 0.000000e+00 : f32
    %276 = vector.broadcast %cst_52 : f32 to vector<2x16x128xf32>
    %277 = vector.extract_strided_slice %274 {offsets = [0, 0, 0], sizes = [6, 16, 128], strides = [1, 1, 1]} : vector<8x16x128xf32> to vector<6x16x128xf32>
    %278 = tpu.concatenate %275, %277 in 0 : vector<2x16x128xf32>, vector<6x16x128xf32> -> vector<8x16x128xf32>
    %279 = vector.extract_strided_slice %273 {offsets = [0, 0, 0], sizes = [6, 16, 128], strides = [1, 1, 1]} : vector<8x16x128xf32> to vector<6x16x128xf32>
    %280 = tpu.concatenate %276, %279 in 0 : vector<2x16x128xf32>, vector<6x16x128xf32> -> vector<8x16x128xf32>
    %281 = arith.mulf %274, %280 : vector<8x16x128xf32>
    %282 = arith.addf %281, %273 : vector<8x16x128xf32>
    %283 = arith.mulf %274, %278 : vector<8x16x128xf32>
    %cst_53 = arith.constant 1.000000e+00 : f32
    %284 = vector.broadcast %cst_53 : f32 to vector<4x16x128xf32>
    %cst_54 = arith.constant 0.000000e+00 : f32
    %285 = vector.broadcast %cst_54 : f32 to vector<4x16x128xf32>
    %286 = vector.extract_strided_slice %283 {offsets = [0, 0, 0], sizes = [4, 16, 128], strides = [1, 1, 1]} : vector<8x16x128xf32> to vector<4x16x128xf32>
    %287 = tpu.concatenate %284, %286 in 0 : vector<4x16x128xf32>, vector<4x16x128xf32> -> vector<8x16x128xf32>
    %288 = vector.extract_strided_slice %282 {offsets = [0, 0, 0], sizes = [4, 16, 128], strides = [1, 1, 1]} : vector<8x16x128xf32> to vector<4x16x128xf32>
    %289 = tpu.concatenate %285, %288 in 0 : vector<4x16x128xf32>, vector<4x16x128xf32> -> vector<8x16x128xf32>
    %290 = arith.mulf %283, %289 : vector<8x16x128xf32>
    %291 = arith.addf %290, %282 : vector<8x16x128xf32>
    %292 = arith.mulf %283, %287 : vector<8x16x128xf32>
    %293 = vector.shape_cast %242 : vector<16x128xf32> to vector<1x16x128xf32>
    %294 = vector.broadcast %293 : vector<1x16x128xf32> to vector<8x16x128xf32>
    %295 = arith.mulf %292, %294 : vector<8x16x128xf32>
    %296 = arith.addf %295, %291 : vector<8x16x128xf32>
    %297 = vector.shape_cast %254 : vector<8x16xf32> to vector<8x16x1xf32>
    %298 = vector.broadcast %297 : vector<8x16x1xf32> to vector<8x16x128xf32>
    %299 = arith.mulf %298, %296 : vector<8x16x128xf32>
    %cst_55 = arith.constant dense<0.000000e+00> : vector<8x128xf32>
    %300 = vector.multi_reduction <add>, %299, %cst_55 [1] : vector<8x16x128xf32> to vector<8x128xf32>
    %301 = tpu.concatenate %134, %190, %246, %300 in 0 : vector<8x128xf32>, vector<8x128xf32>, vector<8x128xf32>, vector<8x128xf32> -> vector<32x128xf32>
    %c0_56 = arith.constant 0 : index
    %c0_57 = arith.constant 0 : index
    %302 = vector.load %arg8[%c0_56, %c0_57] : memref<1x128xf32, #tpu.memory_space<vmem>>, vector<1x128xf32>
    %303 = vector.broadcast %302 : vector<1x128xf32> to vector<32x128xf32>
    %304 = arith.mulf %52, %303 : vector<32x128xf32>
    %305 = arith.addf %301, %304 : vector<32x128xf32>
    %cst_58 = arith.constant 5.000000e-01 : f32
    %306 = vector.broadcast %cst_58 : f32 to vector<32x128xf32>
    %307 = arith.mulf %306, %6 : vector<32x128xf32>
    %308 = math.tanh %307 : vector<32x128xf32>
    %cst_59 = arith.constant 1.000000e+00 : f32
    %309 = vector.broadcast %cst_59 : f32 to vector<32x128xf32>
    %310 = arith.addf %308, %309 : vector<32x128xf32>
    %cst_60 = arith.constant 5.000000e-01 : f32
    %311 = vector.broadcast %cst_60 : f32 to vector<32x128xf32>
    %312 = arith.mulf %311, %310 : vector<32x128xf32>
    %313 = arith.mulf %6, %312 : vector<32x128xf32>
    %314 = arith.mulf %305, %313 : vector<32x128xf32>
    %315 = arith.truncf %314 : vector<32x128xf32> to vector<32x128xbf16>
    %c0_61 = arith.constant 0 : index
    %c0_62 = arith.constant 0 : index
    %316 = vector.load %arg9[%c0_61, %c0_62] : memref<128x128xbf16, #tpu.memory_space<vmem>>, vector<128x128xbf16>
    %cst_63 = arith.constant dense<0.000000e+00> : vector<32x128xf32>
    %317 = tpu.matmul %315, %316, %cst_63 {dimension_numbers = #tpu.dot_dimension_numbers<[1], [0], [0], [1], [0, 0, 1, 1], [], []>} : vector<32x128xbf16>, vector<128x128xbf16>, vector<32x128xf32> -> vector<32x128xf32>
    %318 = vector.shape_cast %317 : vector<32x128xf32> to vector<1x32x128xf32>
    %c0_64 = arith.constant 0 : index
    %c0_65 = arith.constant 0 : index
    %c0_66 = arith.constant 0 : index
    %319 = vector.load %arg10[%c0_64, %c0_65, %c0_66] : memref<1x32x128xf32, #tpu.memory_space<vmem>>, vector<1x32x128xf32>
    tpu.vector_store %arg10[%c0_64, %c0_65, %c0_66], %318 {strides = array<i32>} : memref<1x32x128xf32, #tpu.memory_space<vmem>>, vector<1x32x128xf32>,
    return
  }
  func.func @transform_0(%arg0: i32) -> (i32, i32, i32) {
    %c0_i32 = arith.constant 0 : i32
    %c0_i32_0 = arith.constant 0 : i32
    %c0_i32_1 = arith.constant 0 : i32
    return %arg0, %c0_i32, %c0_i32_0 : i32, i32, i32
  }
  func.func @transform_1(%arg0: i32) -> (i32, i32) {
    %c0_i32 = arith.constant 0 : i32
    %c0_i32_0 = arith.constant 0 : i32
    %c0_i32_1 = arith.constant 0 : i32
    return %c0_i32, %c0_i32_0 : i32, i32
  }
  func.func @transform_2(%arg0: i32) -> (i32, i32) {
    %c0_i32 = arith.constant 0 : i32
    %c0_i32_0 = arith.constant 0 : i32
    %c0_i32_1 = arith.constant 0 : i32
    return %c0_i32, %c0_i32_0 : i32, i32
  }
  func.func @transform_3(%arg0: i32) -> (i32, i32) {
    %c0_i32 = arith.constant 0 : i32
    %c0_i32_0 = arith.constant 0 : i32
    %c0_i32_1 = arith.constant 0 : i32
    return %c0_i32, %c0_i32_0 : i32, i32
  }
  func.func @transform_4(%arg0: i32) -> (i32, i32) {
    %c0_i32 = arith.constant 0 : i32
    %c0_i32_0 = arith.constant 0 : i32
    %c0_i32_1 = arith.constant 0 : i32
    return %c0_i32, %c0_i32_0 : i32, i32
  }
  func.func @transform_5(%arg0: i32) -> (i32, i32) {
    %c0_i32 = arith.constant 0 : i32
    %c0_i32_0 = arith.constant 0 : i32
    %c0_i32_1 = arith.constant 0 : i32
    return %c0_i32, %c0_i32_0 : i32, i32
  }
  func.func @transform_6(%arg0: i32) -> (i32, i32) {
    %c0_i32 = arith.constant 0 : i32
    %c0_i32_0 = arith.constant 0 : i32
    %c0_i32_1 = arith.constant 0 : i32
    return %c0_i32, %c0_i32_0 : i32, i32
  }
  func.func @transform_7(%arg0: i32) -> (i32, i32) {
    %c0_i32 = arith.constant 0 : i32
    %c0_i32_0 = arith.constant 0 : i32
    %c0_i32_1 = arith.constant 0 : i32
    return %c0_i32, %c0_i32_0 : i32, i32
  }
  func.func @transform_8(%arg0: i32) -> (i32, i32) {
    %c0_i32 = arith.constant 0 : i32
    %c0_i32_0 = arith.constant 0 : i32
    %c0_i32_1 = arith.constant 0 : i32
    return %c0_i32, %c0_i32_0 : i32, i32
  }
  func.func @transform_9(%arg0: i32) -> (i32, i32, i32) {
    %c0_i32 = arith.constant 0 : i32
    %c0_i32_0 = arith.constant 0 : i32
    %c0_i32_1 = arith.constant 0 : i32
    return %arg0, %c0_i32, %c0_i32_0 : i32, i32, i32
  }
}

</mosaic_0001>

<llo_original>
// kernel: double_ssm_block_out.1
$region0: #{double_ssm_block_out.1}
  #allocation0 [shape = 'u32[]', space=smem, size = 0x4, offset = 0x4, fixed_abs, tag = 'smem constant byte address 0x4 - core index']
  #allocation1 [shape = 'u32[144,128]{1,0:T(1,128)}', space=vmem, size = 0x12000, scoped, tag = 'internal scratch']
  %s0 = inlined_call_operand.vmem [shape: bf16[2,32,64], index: 0, kind: input, shape index: {}]
  %s1 = inlined_call_operand.vmem [shape: bf16[64,256], index: 1, kind: input, shape index: {}]
  %s2 = inlined_call_operand.vmem [shape: f32[4,128], index: 2, kind: input, shape index: {}]
  %s3 = inlined_call_operand.vmem [shape: f32[1,128], index: 3, kind: input, shape index: {}]
  %s4 = inlined_call_operand.vmem [shape: bf16[128,160], index: 4, kind: input, shape index: {}]
  %s5 = inlined_call_operand.vmem [shape: f32[1,128], index: 5, kind: input, shape index: {}]
  %s6 = inlined_call_operand.vmem [shape: f32[16,128], index: 6, kind: input, shape index: {}]
  %s7 = inlined_call_operand.vmem [shape: f32[1,128], index: 7, kind: input, shape index: {}]
  %s8 = inlined_call_operand.vmem [shape: bf16[128,128], index: 8, kind: input, shape index: {}]
  %s9 = inlined_call_operand.vmem [shape: f32[2,32,128], index: 9, kind: output, shape index: {}]
  %s10 = sld [smem:[#allocation0]]
  $region69: #{double_ssm_block_out.1} parent=0
    _
  %s12 = ssub.s32 1, %s10
  %s13 = scalar_select 0, %s12, %s10
  loop: start=0, step=1, limit=4
  $region2: #{double_ssm_block_out.1} parent=0 // loop_pre_header
    _
  $region3: #{double_ssm_block_out.1} parent=0 // loop_header
    %s15 = sphi 0, %s19
    %p16 = scmp.ge.s32.totalorder %s15, 4
    %s25 = sphi 0, %s27
    %s28 = sphi 0, %s25
    %s29 = sphi 0, %s28
    %s45 = sphi 0, %s29
    %s49 = sphi 0, %s49
    %s51 = sphi 0, %s49
    %s52 = sphi 0, %s51
    %s66 = sphi 0, %s52
    %s70 = sphi 0, %s70
    %s72 = sphi 0, %s70
    %s73 = sphi 0, %s72
    %s87 = sphi 0, %s73
    %s91 = sphi 0, %s91
    %s93 = sphi 0, %s91
    %s94 = sphi 0, %s93
    %s108 = sphi 0, %s94
    %s112 = sphi 0, %s112
    %s114 = sphi 0, %s112
    %s115 = sphi 0, %s114
    %s129 = sphi 0, %s115
    %s133 = sphi 0, %s133
    %s135 = sphi 0, %s133
    %s136 = sphi 0, %s135
    %s150 = sphi 0, %s136
    %s154 = sphi 0, %s154
    %s156 = sphi 0, %s154
    %s157 = sphi 0, %s156
    %s171 = sphi 0, %s157
    %s175 = sphi 0, %s175
    %s177 = sphi 0, %s175
    %s178 = sphi 0, %s177
    %s192 = sphi 0, %s178
    %s196 = sphi 0, %s196
    %s198 = sphi 0, %s196
    %s199 = sphi 0, %s198
    %s213 = sphi 0, %s199
    %s219 = sphi 0, %s221
    %s222 = sphi 0, %s219
    %s223 = sphi 0, %s222
    %s239 = sphi 0, %s223
  $region4: #{double_ssm_block_out.1} parent=0 // loop_header_branch
    %18 = sbr.rel (%p16) target = $region8
  $region5: #{double_ssm_block_out.1} parent=0 // loop_body
    %s20 = ssub.s32 %s15, 1
    %s21 = ssub.s32 %s15, 2
    %s22 = sadd.s32 %s15, 1
    %s23 = ssub.s32 %s15, %s22
    %p24 = scmp.eq.s32.totalorder %s23, 0
    %s26 = sadd.s32 %s25, 1
    %s27 = scalar_select %p24, %s25, %s26
    %p30 = pneg %p24
    %p31 = scmp.eq.s32.totalorder %s15, 1
    %p32 = por %p30, %p31
    %p33 = scmp.ne.s32.totalorder %s25, %s28
    %p34 = scmp.eq.s32.totalorder %s15, 0
    %p35 = por %p33, %p34
    %p36 = scmp.ne.s32.totalorder %s25, %s28
    %p37 = scmp.eq.s32.totalorder %s20, 1
    %p38 = por %p36, %p37
    %p39 = scmp.ne.s32.totalorder %s28, %s29
    %p40 = scmp.eq.s32.totalorder %s20, 0
    %p41 = por %p39, %p40
    %p42 = scmp.ne.s32.totalorder %s28, %s29
    %p43 = scmp.eq.s32.totalorder %s21, 1
    %p44 = por %p42, %p43
    %p46 = scmp.ne.s32.totalorder %s29, %s45
    %p47 = scmp.eq.s32.totalorder %s21, 0
    %p48 = por %p46, %p47
    %s50 = sadd.s32 %s49, 1
    %p53 = scmp.eq.s32.totalorder %s15, 1
    %p54 = scmp.ne.s32.totalorder %s49, %s51
    %p55 = scmp.eq.s32.totalorder %s15, 0
    %p56 = por %p54, %p55
    %p57 = scmp.ne.s32.totalorder %s49, %s51
    %p58 = scmp.eq.s32.totalorder %s20, 1
    %p59 = por %p57, %p58
    %p60 = scmp.ne.s32.totalorder %s51, %s52
    %p61 = scmp.eq.s32.totalorder %s20, 0
    %p62 = por %p60, %p61
    %p63 = scmp.ne.s32.totalorder %s51, %s52
    %p64 = scmp.eq.s32.totalorder %s21, 1
    %p65 = por %p63, %p64
    %p67 = scmp.ne.s32.totalorder %s52, %s66
    %p68 = scmp.eq.s32.totalorder %s21, 0
    %p69 = por %p67, %p68
    %s71 = sadd.s32 %s70, 1
    %p74 = scmp.eq.s32.totalorder %s15, 1
    %p75 = scmp.ne.s32.totalorder %s70, %s72
    %p76 = scmp.eq.s32.totalorder %s15, 0
    %p77 = por %p75, %p76
    %p78 = scmp.ne.s32.totalorder %s70, %s72
    %p79 = scmp.eq.s32.totalorder %s20, 1
    %p80 = por %p78, %p79
    %p81 = scmp.ne.s32.totalorder %s72, %s73
    %p82 = scmp.eq.s32.totalorder %s20, 0
    %p83 = por %p81, %p82
    %p84 = scmp.ne.s32.totalorder %s72, %s73
    %p85 = scmp.eq.s32.totalorder %s21, 1
    %p86 = por %p84, %p85
    %p88 = scmp.ne.s32.totalorder %s73, %s87
    %p89 = scmp.eq.s32.totalorder %s21, 0
    %p90 = por %p88, %p89
    %s92 = sadd.s32 %s91, 1
    %p95 = scmp.eq.s32.totalorder %s15, 1
    %p96 = scmp.ne.s32.totalorder %s91, %s93
    %p97 = scmp.eq.s32.totalorder %s15, 0
    %p98 = por %p96, %p97
    %p99 = scmp.ne.s32.totalorder %s91, %s93
    %p100 = scmp.eq.s32.totalorder %s20, 1
    %p101 = por %p99, %p100
    %p102 = scmp.ne.s32.totalorder %s93, %s94
    %p103 = scmp.eq.s32.totalorder %s20, 0
    %p104 = por %p102, %p103
    %p105 = scmp.ne.s32.totalorder %s93, %s94
    %p106 = scmp.eq.s32.totalorder %s21, 1
    %p107 = por %p105, %p106
    %p109 = scmp.ne.s32.totalorder %s94, %s108
    %p110 = scmp.eq.s32.totalorder %s21, 0
    %p111 = por %p109, %p110
    %s113 = sadd.s32 %s112, 1
    %p116 = scmp.eq.s32.totalorder %s15, 1
    %p117 = scmp.ne.s32.totalorder %s112, %s114
    %p118 = scmp.eq.s32.totalorder %s15, 0
    %p119 = por %p117, %p118
    %p120 = scmp.ne.s32.totalorder %s112, %s114
    %p121 = scmp.eq.s32.totalorder %s20, 1
    %p122 = por %p120, %p121
    %p123 = scmp.ne.s32.totalorder %s114, %s115
    %p124 = scmp.eq.s32.totalorder %s20, 0
    %p125 = por %p123, %p124
    %p126 = scmp.ne.s32.totalorder %s114, %s115
    %p127 = scmp.eq.s32.totalorder %s21, 1
    %p128 = por %p126, %p127
    %p130 = scmp.ne.s32.totalorder %s115, %s129
    %p131 = scmp.eq.s32.totalorder %s21, 0
    %p132 = por %p130, %p131
    %s134 = sadd.s32 %s133, 1
    %p137 = scmp.eq.s32.totalorder %s15, 1
    %p138 = scmp.ne.s32.totalorder %s133, %s135
    %p139 = scmp.eq.s32.totalorder %s15, 0
    %p140 = por %p138, %p139
    %p141 = scmp.ne.s32.totalorder %s133, %s135
    %p142 = scmp.eq.s32.totalorder %s20, 1
    %p143 = por %p141, %p142
    %p144 = scmp.ne.s32.totalorder %s135, %s136
    %p145 = scmp.eq.s32.totalorder %s20, 0
    %p146 = por %p144, %p145
    %p147 = scmp.ne.s32.totalorder %s135, %s136
    %p148 = scmp.eq.s32.totalorder %s21, 1
    %p149 = por %p147, %p148
    %p151 = scmp.ne.s32.totalorder %s136, %s150
    %p152 = scmp.eq.s32.totalorder %s21, 0
    %p153 = por %p151, %p152
    %s155 = sadd.s32 %s154, 1
    %p158 = scmp.eq.s32.totalorder %s15, 1
    %p159 = scmp.ne.s32.totalorder %s154, %s156
    %p160 = scmp.eq.s32.totalorder %s15, 0
    %p161 = por %p159, %p160
    %p162 = scmp.ne.s32.totalorder %s154, %s156
    %p163 = scmp.eq.s32.totalorder %s20, 1
    %p164 = por %p162, %p163
    %p165 = scmp.ne.s32.totalorder %s156, %s157
    %p166 = scmp.eq.s32.totalorder %s20, 0
    %p167 = por %p165, %p166
    %p168 = scmp.ne.s32.totalorder %s156, %s157
    %p169 = scmp.eq.s32.totalorder %s21, 1
    %p170 = por %p168, %p169
    %p172 = scmp.ne.s32.totalorder %s157, %s171
    %p173 = scmp.eq.s32.totalorder %s21, 0
    %p174 = por %p172, %p173
    %s176 = sadd.s32 %s175, 1
    %p179 = scmp.eq.s32.totalorder %s15, 1
    %p180 = scmp.ne.s32.totalorder %s175, %s177
    %p181 = scmp.eq.s32.totalorder %s15, 0
    %p182 = por %p180, %p181
    %p183 = scmp.ne.s32.totalorder %s175, %s177
    %p184 = scmp.eq.s32.totalorder %s20, 1
    %p185 = por %p183, %p184
    %p186 = scmp.ne.s32.totalorder %s177, %s178
    %p187 = scmp.eq.s32.totalorder %s20, 0
    %p188 = por %p186, %p187
    %p189 = scmp.ne.s32.totalorder %s177, %s178
    %p190 = scmp.eq.s32.totalorder %s21, 1
    %p191 = por %p189, %p190
    %p193 = scmp.ne.s32.totalorder %s178, %s192
    %p194 = scmp.eq.s32.totalorder %s21, 0
    %p195 = por %p193, %p194
    %s197 = sadd.s32 %s196, 1
    %p200 = scmp.eq.s32.totalorder %s15, 1
    %p201 = scmp.ne.s32.totalorder %s196, %s198
    %p202 = scmp.eq.s32.totalorder %s15, 0
    %p203 = por %p201, %p202
    %p204 = scmp.ne.s32.totalorder %s196, %s198
    %p205 = scmp.eq.s32.totalorder %s20, 1
    %p206 = por %p204, %p205
    %p207 = scmp.ne.s32.totalorder %s198, %s199
    %p208 = scmp.eq.s32.totalorder %s20, 0
    %p209 = por %p207, %p208
    %p210 = scmp.ne.s32.totalorder %s198, %s199
    %p211 = scmp.eq.s32.totalorder %s21, 1
    %p212 = por %p210, %p211
    %p214 = scmp.ne.s32.totalorder %s199, %s213
    %p215 = scmp.eq.s32.totalorder %s21, 0
    %p216 = por %p214, %p215
    %s217 = ssub.s32 %s15, %s22
    %p218 = scmp.eq.s32.totalorder %s217, 0
    %s220 = sadd.s32 %s219, 1
    %s221 = scalar_select %p218, %s219, %s220
    %p224 = pneg %p218
    %p225 = scmp.eq.s32.totalorder %s15, 1
    %p226 = por %p224, %p225
    %p227 = scmp.ne.s32.totalorder %s219, %s222
    %p228 = scmp.eq.s32.totalorder %s15, 0
    %p229 = por %p227, %p228
    %p230 = scmp.ne.s32.totalorder %s219, %s222
    %p231 = scmp.eq.s32.totalorder %s20, 1
    %p232 = por %p230, %p231
    %p233 = scmp.ne.s32.totalorder %s222, %s223
    %p234 = scmp.eq.s32.totalorder %s20, 0
    %p235 = por %p233, %p234
    %p236 = scmp.ne.s32.totalorder %s222, %s223
    %p237 = scmp.eq.s32.totalorder %s21, 1
    %p238 = por %p236, %p237
    %p240 = scmp.ne.s32.totalorder %s223, %s239
    %p241 = scmp.eq.s32.totalorder %s21, 0
    %p242 = por %p240, %p241
    %p243 = scmp.le.s32.totalorder 1, %s15
    %p244 = scmp.lt.s32.totalorder %s15, 3
    %p245 = pnand %p243, %p244
    %p246 = pneg %p245
    // Predicated region
    $region9: #{double_ssm_block_out.1} parent=5 // pred_check
      _
    $region10: #{double_ssm_block_out.1} parent=5 // pred_check_branch
      %248 = sbr.rel (%p245) target = $region12
    $region11: #{double_ssm_block_out.1} parent=5 // pred_region
      %s249 = ssub.s32 %s15, 1
      // Predicated region
      $region13: #{double_ssm_block_out.1} parent=11 // pred_check
        %p250 = pneg %p62
      $region14: #{double_ssm_block_out.1} parent=11 // pred_check_branch
        %252 = sbr.rel (%p250) target = $region16
      $region15: #{double_ssm_block_out.1} parent=11 // pred_region
        _
      $region16: #{double_ssm_block_out.1} parent=11 // pred_fallthru
        _
      // Predicated region
      $region17: #{double_ssm_block_out.1} parent=11 // pred_check
        %p253 = pneg %p83
      $region18: #{double_ssm_block_out.1} parent=11 // pred_check_branch
        %255 = sbr.rel (%p253) target = $region20
      $region19: #{double_ssm_block_out.1} parent=11 // pred_region
        _
      $region20: #{double_ssm_block_out.1} parent=11 // pred_fallthru
        _
      // Predicated region
      $region21: #{double_ssm_block_out.1} parent=11 // pred_check
        %p256 = pneg %p104
      $region22: #{double_ssm_block_out.1} parent=11 // pred_check_branch
        %258 = sbr.rel (%p256) target = $region24
      $region23: #{double_ssm_block_out.1} parent=11 // pred_region
        _
      $region24: #{double_ssm_block_out.1} parent=11 // pred_fallthru
        _
      // Predicated region
      $region25: #{double_ssm_block_out.1} parent=11 // pred_check
        %p259 = pneg %p125
      $region26: #{double_ssm_block_out.1} parent=11 // pred_check_branch
        %261 = sbr.rel (%p259) target = $region28
      $region27: #{double_ssm_block_out.1} parent=11 // pred_region
        _
      $region28: #{double_ssm_block_out.1} parent=11 // pred_fallthru
        _
      // Predicated region
      $region29: #{double_ssm_block_out.1} parent=11 // pred_check
        %p262 = pneg %p146
      $region30: #{double_ssm_block_out.1} parent=11 // pred_check_branch
        %264 = sbr.rel (%p262) target = $region32
      $region31: #{double_ssm_block_out.1} parent=11 // pred_region
        _
      $region32: #{double_ssm_block_out.1} parent=11 // pred_fallthru
        _
      // Predicated region
      $region33: #{double_ssm_block_out.1} parent=11 // pred_check
        %p265 = pneg %p167
      $region34: #{double_ssm_block_out.1} parent=11 // pred_check_branch
        %267 = sbr.rel (%p265) target = $region36
      $region35: #{double_ssm_block_out.1} parent=11 // pred_region
        _
      $region36: #{double_ssm_block_out.1} parent=11 // pred_fallthru
        _
      // Predicated region
      $region37: #{double_ssm_block_out.1} parent=11 // pred_check
        %p268 = pneg %p188
      $region38: #{double_ssm_block_out.1} parent=11 // pred_check_branch
        %270 = sbr.rel (%p268) target = $region40
      $region39: #{double_ssm_block_out.1} parent=11 // pred_region
        _
      $region40: #{double_ssm_block_out.1} parent=11 // pred_fallthru
        _
      // Predicated region
      $region41: #{double_ssm_block_out.1} parent=11 // pred_check
        %p271 = pneg %p209
      $region42: #{double_ssm_block_out.1} parent=11 // pred_check_branch
        %273 = sbr.rel (%p271) target = $region44
      $region43: #{double_ssm_block_out.1} parent=11 // pred_region
        _
      $region44: #{double_ssm_block_out.1} parent=11 // pred_fallthru
        _
    $region12: #{double_ssm_block_out.1} parent=5 // pred_fallthru
      _
    %p274 = scmp.lt.s32.totalorder %s15, 2
    // Predicated region
    $region45: #{double_ssm_block_out.1} parent=5 // pred_check
      %p275 = pneg %p274
    $region46: #{double_ssm_block_out.1} parent=5 // pred_check_branch
      %277 = sbr.rel (%p275) target = $region48
    $region47: #{double_ssm_block_out.1} parent=5 // pred_region
      // Predicated region
      $region49: #{double_ssm_block_out.1} parent=47 // pred_check
        %p278 = pneg %p35
      $region50: #{double_ssm_block_out.1} parent=47 // pred_check_branch
        %280 = sbr.rel (%p278) target = $region52
      $region51: #{double_ssm_block_out.1} parent=47 // pred_region
        %p281 = scmp.lt.s32.totalorder %s15, 1
        %s282 = scalar_select %p281, %s15, 1
        %s283 = smul.addr %s282, 4
        %s284 = smul.addr %s283, 4
        %s285 = scalar_lea.vmem %s0, %s284
      $region52: #{double_ssm_block_out.1} parent=47 // pred_fallthru
        _
    $region48: #{double_ssm_block_out.1} parent=5 // pred_fallthru
      _
    %p286 = scmp.le.s32.totalorder 1, %s15
    %p287 = scmp.lt.s32.totalorder %s15, 3
    %p288 = pnand %p286, %p287
    %p289 = pneg %p288
    // Predicated region
    $region53: #{double_ssm_block_out.1} parent=5 // pred_check
      _
    $region54: #{double_ssm_block_out.1} parent=5 // pred_check_branch
      %291 = sbr.rel (%p288) target = $region56
    $region55: #{double_ssm_block_out.1} parent=5 // pred_region
      %s292 = ssub.s32 %s15, 1
      %p293 = scmp.lt.s32.totalorder %s20, 1
      %s294 = scalar_select %p293, %s20, 1
      %s295 = smul.addr %s294, 4
      %s296 = smul.addr %s295, 4
      %s297 = scalar_lea.vmem %s0, %s296
      %p298 = pneg %p41
      %p299 = pneg %p38
      %p300 = pneg %p62
      %p301 = pneg %p59
      %p302 = pneg %p83
      %p303 = pneg %p80
      %p304 = pneg %p104
      %p305 = pneg %p101
      %p306 = pneg %p125
      %p307 = pneg %p122
      %p308 = pneg %p146
      %p309 = pneg %p143
      %p310 = pneg %p167
      %p311 = pneg %p164
      %p312 = pneg %p188
      %p313 = pneg %p185
      %p314 = pneg %p209
      %p315 = pneg %p206
      %p316 = pneg %p235
      %p317 = pneg %p232
      %p318 = scmp.lt.s32.totalorder %s20, 1
      %s319 = scalar_select %p318, %s20, 1
      %s320 = smul.addr %s319, 4
      %s321 = smul.addr %s320, 8
      %s322 = scalar_lea.vmem %s9, %s321
      %p323 = scmp.lt.s32.totalorder %s20, 1
      %s324 = scalar_select %p323, %s20, 1
      %s325 = smul.addr %s324, 4
      %s326 = smul.addr %s325, 4
      %s327 = scalar_lea.vmem %s0, %s326
      %p328 = scmp.lt.s32.totalorder %s20, 1
      %s329 = scalar_select %p328, %s20, 1
      %s330 = smul.addr %s329, 4
      %s331 = smul.addr %s330, 8
      %s332 = scalar_lea.vmem %s9, %s331
      %v334 = vld [vmem:[%s327] sm:$0xf]
      %v335 = vld [vmem:[%s327 + $0x4] sm:$0xf]
      %v336 = vld [vmem:[%s327 + $0x8] sm:$0xf]
      %v337 = vld [vmem:[%s327 + $0xc] sm:$0xf]
      %v338 = vld [vmem:[%s1] sm:$0xff]
      %v339 = vld [vmem:[%s1 + $0x8] sm:$0xff]
      %v340 = vld [vmem:[%s1 + $0x10] sm:$0xff]
      %v341 = vld [vmem:[%s1 + $0x18] sm:$0xff]
      %v342 = vld [vmem:[%s1 + $0x20] sm:$0xff]
      %v343 = vld [vmem:[%s1 + $0x28] sm:$0xff]
      %v344 = vld [vmem:[%s1 + $0x30] sm:$0xff]
      %v345 = vld [vmem:[%s1 + $0x38] sm:$0xff]
      %v350 = vunpack.c.l.b16 %v334
      %v351 = vunpack.c.l.b16 %v335
      %v352 = vunpack.c.l.b16 %v336
      %v353 = vunpack.c.l.b16 %v337
      %v354 = vpack.c.b16 %v351, %v350
      %v355 = vpack.c.b16 %v353, %v352
      %v364 = vunpack.c.l.b16 %v338
      %v365 = vunpack.c.h.b16 %v338
      %v366 = vunpack.c.l.b16 %v339
      %v367 = vunpack.c.h.b16 %v339
      %v368 = vunpack.c.l.b16 %v340
      %v369 = vunpack.c.h.b16 %v340
      %v370 = vunpack.c.l.b16 %v341
      %v371 = vunpack.c.h.b16 %v341
      %v372 = vunpack.c.l.b16 %v342
      %v373 = vunpack.c.h.b16 %v342
      %v374 = vunpack.c.l.b16 %v343
      %v375 = vunpack.c.h.b16 %v343
      %v376 = vunpack.c.l.b16 %v344
      %v377 = vunpack.c.h.b16 %v344
      %v378 = vunpack.c.l.b16 %v345
      %v379 = vunpack.c.h.b16 %v345
      %v380 = vpack.c.b16 %v366, %v364
      %v381 = vpack.c.b16 %v367, %v365
      %v382 = vpack.c.b16 %v370, %v368
      %v383 = vpack.c.b16 %v371, %v369
      %v384 = vpack.c.b16 %v374, %v372
      %v385 = vpack.c.b16 %v375, %v373
      %v386 = vpack.c.b16 %v378, %v376
      %v387 = vpack.c.b16 %v379, %v377
      %vm396 = vcmask 523264
      %v398 = vsel %vm396, %v354, 0
      %v401 = vsel %vm396, %v355, 0
      %403 = vmatprep.subr.bf16.mxu0 0
      %404 = vmatpush1.bf16.msra.mxu0 0
      %405 = vmatprep.subr.bf16.mxu0 0
      %406 = vmatpush1.bf16.msra.mxu0 0
      %407 = vmatprep.subr.bf16.mxu0 0
      %408 = vmatpush1.bf16.msra.mxu0 0
      %409 = vmatprep.subr.bf16.mxu0 0
      %410 = vmatpush1.bf16.msra.mxu0 0
      %411 = vmatprep.subr.bf16.mxu0 %v387
      %412 = vmatpush1.bf16.msra.mxu0 %v386
      %413 = vmatprep.subr.bf16.mxu0 %v385
      %414 = vmatpush1.bf16.msra.mxu0 %v384
      %415 = vmatprep.subr.bf16.mxu0 %v383
      %416 = vmatpush1.bf16.msra.mxu0 %v382
      %417 = vmatprep.subr.bf16.mxu0 %v381
      %418 = vmatpush1.bf16.msra.mxu0 %v380
      %419 = vmatprep.subr.bf16.mxu0 0
      %420 = vmatpush2.bf16.msra.mxu0 0
      %421 = vmatprep.subr.bf16.mxu0 0
      %422 = vmatpush2.bf16.msra.mxu0 0
      %423 = vmatprep.subr.bf16.mxu0 0
      %424 = vmatpush2.bf16.msra.mxu0 0
      %425 = vmatprep.subr.bf16.mxu0 0
      %426 = vmatpush2.bf16.msra.mxu0 0
      %427 = vmatprep.subr.bf16.mxu0 0
      %428 = vmatpush2.bf16.msra.mxu0 0
      %429 = vmatprep.subr.bf16.mxu0 0
      %430 = vmatpush2.bf16.msra.mxu0 0
      %431 = vmatprep.subr.bf16.mxu0 0
      %432 = vmatpush2.bf16.msra.mxu0 0
      %433 = vmatprep.subr.bf16.mxu0 0
      %434 = vmatpush2.bf16.msra.mxu0 0
      %435 = vmatprep.mubr.bf16.mxu0 0
      %436 = vmatmul.mubr.bf16.gmra.mxu0 %v398
      %v437 = vpop.f32.mrf.mxu0
      %v438 = vadd.f32 0.0, %v437
      %v439 = vpop.f32.mrf.mxu0
      %v440 = vadd.f32 0.0, %v439
      %v441 = vpop.f32.mrf.mxu0
      %v442 = vadd.f32 0.0, %v441
      %v443 = vpop.f32.mrf.mxu0
      %v444 = vadd.f32 0.0, %v443
      %445 = vmatprep.mubr.bf16.mxu0 0
      %446 = vmatmul.mubr.bf16.gmra.mxu0 %v401
      %v447 = vpop.f32.mrf.mxu0
      %v448 = vadd.f32 0.0, %v447
      %v449 = vpop.f32.mrf.mxu0
      %v450 = vadd.f32 0.0, %v449
      %v451 = vpop.f32.mrf.mxu0
      %v452 = vadd.f32 0.0, %v451
      %v453 = vpop.f32.mrf.mxu0
      %v454 = vadd.f32 0.0, %v453
      %455 = vdwg.mxu0
      %v456 = vld [vmem:[%s2] sm:$0xf]
      %v457 = vld [vmem:[%s3] sm:$0x1]
      %v458 = vlaneseq
      %v459 = vshrl.u32 %v458, 7
      %v460 = vadd.s32 %v459, 8
      %v461 = vadd.s32 %v459, 16
      %v462 = vadd.s32 %v459, 24
      %v463 = vlaneseq
      %v464 = vshrl.u32 %v463, 7
      %v465 = vsub.s32 3, %v464
      %v466 = vrot.slane %v456, %v465
      %v467 = vmul.f32 %v438, %v466
      %v468 = vmul.f32 %v442, %v466
      %v469 = vmul.f32 %v448, %v466
      %v470 = vmul.f32 %v452, %v466
      %v471 = vrot.slane %v438, 5
      %v472 = vrot.slane %v442, 5
      %v473 = vrot.slane %v448, 5
      %v474 = vrot.slane %v452, 5
      %vm475 = vcmp.lt.s32.totalorder %v459, 3
      %v476 = vsel %vm475, %v473, %v474
      %v477 = vsel %vm475, %v472, %v473
      %v478 = vsel %vm475, %v471, %v472
      %v479 = vsel %vm475, %v474, %v471
      %vm480 = vcmp.ge.s32.totalorder %v459, 3
      %vm481 = vcmp.ge.s32.totalorder %v460, 3
      %vm482 = vcmp.ge.s32.totalorder %v461, 3
      %vm483 = vcmp.ge.s32.totalorder %v462, 3
      %v484 = vsel %vm480, %v479, 0.0
      %v485 = vsel %vm481, %v478, 0.0
      %v486 = vsel %vm482, %v477, 0.0
      %v487 = vsel %vm483, %v476, 0.0
      %v488 = vlaneseq
      %v489 = vshrl.u32 %v488, 7
      %v490 = vsub.s32 0, %v489
      %v491 = vrot.slane %v456, %v490
      %v492 = vmul.f32 %v484, %v491
      %v493 = vmul.f32 %v485, %v491
      %v494 = vmul.f32 %v486, %v491
      %v495 = vmul.f32 %v487, %v491
      %v496 = vadd.f32 %v467, %v492
      %v497 = vadd.f32 %v468, %v493
      %v498 = vadd.f32 %v469, %v494
      %v499 = vadd.f32 %v470, %v495
      %v500 = vrot.slane %v438, 6
      %v501 = vrot.slane %v442, 6
      %v502 = vrot.slane %v448, 6
      %v503 = vrot.slane %v452, 6
      %vm504 = vcmp.lt.s32.totalorder %v459, 2
      %v505 = vsel %vm504, %v502, %v503
      %v506 = vsel %vm504, %v501, %v502
      %v507 = vsel %vm504, %v500, %v501
      %v508 = vsel %vm504, %v503, %v500
      %vm509 = vcmp.ge.s32.totalorder %v459, 2
      %vm510 = vcmp.ge.s32.totalorder %v460, 2
      %vm511 = vcmp.ge.s32.totalorder %v461, 2
      %vm512 = vcmp.ge.s32.totalorder %v462, 2
      %v513 = vsel %vm509, %v508, 0.0
      %v514 = vsel %vm510, %v507, 0.0
      %v515 = vsel %vm511, %v506, 0.0
      %v516 = vsel %vm512, %v505, 0.0
      %v517 = vlaneseq
      %v518 = vshrl.u32 %v517, 7
      %v519 = vsub.s32 1, %v518
      %v520 = vrot.slane %v456, %v519
      %v521 = vmul.f32 %v513, %v520
      %v522 = vmul.f32 %v514, %v520
      %v523 = vmul.f32 %v515, %v520
      %v524 = vmul.f32 %v516, %v520
      %v525 = vadd.f32 %v496, %v521
      %v526 = vadd.f32 %v497, %v522
      %v527 = vadd.f32 %v498, %v523
      %v528 = vadd.f32 %v499, %v524
      %v529 = vrot.slane %v438, 7
      %v530 = vrot.slane %v442, 7
      %v531 = vrot.slane %v448, 7
      %v532 = vrot.slane %v452, 7
      %vm533 = vcmp.lt.s32.totalorder %v459, 1
      %v534 = vsel %vm533, %v531, %v532
      %v535 = vsel %vm533, %v530, %v531
      %v536 = vsel %vm533, %v529, %v530
      %v537 = vsel %vm533, %v532, %v529
      %vm538 = vcmp.ge.s32.totalorder %v459, 1
      %vm539 = vcmp.ge.s32.totalorder %v460, 1
      %vm540 = vcmp.ge.s32.totalorder %v461, 1
      %vm541 = vcmp.ge.s32.totalorder %v462, 1
      %v542 = vsel %vm538, %v537, 0.0
      %v543 = vsel %vm539, %v536, 0.0
      %v544 = vsel %vm540, %v535, 0.0
      %v545 = vsel %vm541, %v534, 0.0
      %v546 = vlaneseq
      %v547 = vshrl.u32 %v546, 7
      %v548 = vsub.s32 2, %v547
      %v549 = vrot.slane %v456, %v548
      %v550 = vmul.f32 %v542, %v549
      %v551 = vmul.f32 %v543, %v549
      %v552 = vmul.f32 %v544, %v549
      %v553 = vmul.f32 %v545, %v549
      %v554 = vadd.f32 %v525, %v550
      %v555 = vadd.f32 %v526, %v551
      %v556 = vadd.f32 %v527, %v552
      %v557 = vadd.f32 %v528, %v553
      %v559 = vlaneseq
      %v560 = vshrl.u32 %v559, 7
      %v561 = vsub.s32 0, %v560
      %v562 = vrot.slane %v457, %v561
      %v564 = vadd.f32 %v554, %v562
      %v565 = vadd.f32 %v555, %v562
      %v566 = vadd.f32 %v556, %v562
      %v567 = vadd.f32 %v557, %v562
      %v568 = vmul.f32 %v564, 0.5
      %v569 = vmul.f32 %v565, 0.5
      %v570 = vmul.f32 %v566, 0.5
      %v571 = vmul.f32 %v567, 0.5
      %v572 = vtanh.pop %v568
      %v573 = vtanh.pop %v569
      %v574 = vtanh.pop %v570
      %v575 = vtanh.pop %v571
      %v576 = vadd.f32 %v572, 1.0
      %v577 = vadd.f32 %v573, 1.0
      %v578 = vadd.f32 %v574, 1.0
      %v579 = vadd.f32 %v575, 1.0
      %v580 = vmul.f32 %v576, 0.5
      %v581 = vmul.f32 %v577, 0.5
      %v582 = vmul.f32 %v578, 0.5
      %v583 = vmul.f32 %v579, 0.5
      %v584 = vmul.f32 %v564, %v580
      %v585 = vmul.f32 %v565, %v581
      %v586 = vmul.f32 %v566, %v582
      %v587 = vmul.f32 %v567, %v583
      %v588 = vpack.c.bf16 %v585, %v584
      %v589 = vpack.c.bf16 %v587, %v586
      %v590 = vld [vmem:[%s4] sm:$0xff]
      %v591 = vld [vmem:[%s4 + $0x8] sm:$0xff]
      %v592 = vld [vmem:[%s4 + $0x10] sm:$0xff]
      %v593 = vld [vmem:[%s4 + $0x18] sm:$0xff]
      %v594 = vld [vmem:[%s4 + $0x20] sm:$0xff]
      %v595 = vld [vmem:[%s4 + $0x28] sm:$0xff]
      %v596 = vld [vmem:[%s4 + $0x30] sm:$0xff]
      %v597 = vld [vmem:[%s4 + $0x38] sm:$0xff]
      %v598 = vld [vmem:[%s4 + $0x40] sm:$0xff]
      %v599 = vld [vmem:[%s4 + $0x48] sm:$0xff]
      %v600 = vld [vmem:[%s4 + $0x50] sm:$0xff]
      %v601 = vld [vmem:[%s4 + $0x58] sm:$0xff]
      %v602 = vld [vmem:[%s4 + $0x60] sm:$0xff]
      %v603 = vld [vmem:[%s4 + $0x68] sm:$0xff]
      %v604 = vld [vmem:[%s4 + $0x70] sm:$0xff]
      %v605 = vld [vmem:[%s4 + $0x78] sm:$0xff]
      %v622 = vunpack.c.l.b16 %v590
      %v623 = vunpack.c.h.b16 %v590
      %v624 = vunpack.c.l.b16 %v591
      %v625 = vunpack.c.h.b16 %v591
      %v626 = vunpack.c.l.b16 %v592
      %v627 = vunpack.c.h.b16 %v592
      %v628 = vunpack.c.l.b16 %v593
      %v629 = vunpack.c.h.b16 %v593
      %v630 = vunpack.c.l.b16 %v594
      %v631 = vunpack.c.h.b16 %v594
      %v632 = vunpack.c.l.b16 %v595
      %v633 = vunpack.c.h.b16 %v595
      %v634 = vunpack.c.l.b16 %v596
      %v635 = vunpack.c.h.b16 %v596
      %v636 = vunpack.c.l.b16 %v597
      %v637 = vunpack.c.h.b16 %v597
      %v638 = vunpack.c.l.b16 %v598
      %v639 = vunpack.c.h.b16 %v598
      %v640 = vunpack.c.l.b16 %v599
      %v641 = vunpack.c.h.b16 %v599
      %v642 = vunpack.c.l.b16 %v600
      %v643 = vunpack.c.h.b16 %v600
      %v644 = vunpack.c.l.b16 %v601
      %v645 = vunpack.c.h.b16 %v601
      %v646 = vunpack.c.l.b16 %v602
      %v647 = vunpack.c.h.b16 %v602
      %v648 = vunpack.c.l.b16 %v603
      %v649 = vunpack.c.h.b16 %v603
      %v650 = vunpack.c.l.b16 %v604
      %v651 = vunpack.c.h.b16 %v604
      %v652 = vunpack.c.l.b16 %v605
      %v653 = vunpack.c.h.b16 %v605
      %v654 = vpack.c.b16 %v624, %v622
      %v655 = vpack.c.b16 %v625, %v623
      %v656 = vpack.c.b16 %v628, %v626
      %v657 = vpack.c.b16 %v629, %v627
      %v658 = vpack.c.b16 %v632, %v630
      %v659 = vpack.c.b16 %v633, %v631
      %v660 = vpack.c.b16 %v636, %v634
      %v661 = vpack.c.b16 %v637, %v635
      %v662 = vpack.c.b16 %v640, %v638
      %v663 = vpack.c.b16 %v641, %v639
      %v664 = vpack.c.b16 %v644, %v642
      %v665 = vpack.c.b16 %v645, %v643
      %v666 = vpack.c.b16 %v648, %v646
      %v667 = vpack.c.b16 %v649, %v647
      %v668 = vpack.c.b16 %v652, %v650
      %v669 = vpack.c.b16 %v653, %v651
      %686 = vmatprep.subr.bf16.mxu0 %v669
      %687 = vmatpush1.bf16.msra.mxu0 %v668
      %688 = vmatprep.subr.bf16.mxu0 %v667
      %689 = vmatpush1.bf16.msra.mxu0 %v666
      %690 = vmatprep.subr.bf16.mxu0 %v665
      %691 = vmatpush1.bf16.msra.mxu0 %v664
      %692 = vmatprep.subr.bf16.mxu0 %v663
      %693 = vmatpush1.bf16.msra.mxu0 %v662
      %694 = vmatprep.subr.bf16.mxu0 %v661
      %695 = vmatpush1.bf16.msra.mxu0 %v660
      %696 = vmatprep.subr.bf16.mxu0 %v659
      %697 = vmatpush1.bf16.msra.mxu0 %v658
      %698 = vmatprep.subr.bf16.mxu0 %v657
      %699 = vmatpush1.bf16.msra.mxu0 %v656
      %700 = vmatprep.subr.bf16.mxu0 %v655
      %701 = vmatpush1.bf16.msra.mxu0 %v654
      %702 = vmatprep.subr.bf16.mxu0 0
      %703 = vmatpush2.bf16.msra.mxu0 0
      %704 = vmatprep.subr.bf16.mxu0 0
      %705 = vmatpush2.bf16.msra.mxu0 0
      %706 = vmatprep.subr.bf16.mxu0 0
      %707 = vmatpush2.bf16.msra.mxu0 0
      %708 = vmatprep.subr.bf16.mxu0 0
      %709 = vmatpush2.bf16.msra.mxu0 0
      %710 = vmatprep.subr.bf16.mxu0 0
      %711 = vmatpush2.bf16.msra.mxu0 0
      %712 = vmatprep.subr.bf16.mxu0 0
      %713 = vmatpush2.bf16.msra.mxu0 0
      %714 = vmatprep.subr.bf16.mxu0 0
      %715 = vmatpush2.bf16.msra.mxu0 0
      %716 = vmatprep.subr.bf16.mxu0 0
      %717 = vmatpush2.bf16.msra.mxu0 0
      %718 = vmatprep.mubr.bf16.mxu0 0
      %719 = vmatmul.mubr.bf16.gmra.mxu0 %v588
      %v720 = vpop.f32.mrf.mxu0
      %v721 = vadd.f32 0.0, %v720
      %v722 = vpop.f32.mrf.mxu0
      %v723 = vadd.f32 0.0, %v722
      %v724 = vpop.f32.mrf.mxu0
      %v725 = vadd.f32 0.0, %v724
      %v726 = vpop.f32.mrf.mxu0
      %v727 = vadd.f32 0.0, %v726
      %728 = vmatprep.mubr.bf16.mxu0 0
      %729 = vmatmul.mubr.bf16.gmra.mxu0 %v589
      %v730 = vpop.f32.mrf.mxu0
      %v731 = vadd.f32 0.0, %v730
      %v732 = vpop.f32.mrf.mxu0
      %v733 = vadd.f32 0.0, %v732
      %v734 = vpop.f32.mrf.mxu0
      %v735 = vadd.f32 0.0, %v734
      %v736 = vpop.f32.mrf.mxu0
      %v737 = vadd.f32 0.0, %v736
      %738 = vdwg.mxu0
      %v739 = vld [vmem:[%s5] sm:$0x1]
      %v741 = vlaneseq
      %v742 = vshrl.u32 %v741, 7
      %v743 = vsub.s32 0, %v742
      %v744 = vrot.slane %v739, %v743
      %v746 = vadd.f32 %v721, %v744
      %v747 = vadd.f32 %v725, %v744
      %v748 = vadd.f32 %v731, %v744
      %v749 = vadd.f32 %v735, %v744
      %v750 = vmax.f32 %v746, 0.0
      %v751 = vmax.f32 %v747, 0.0
      %v752 = vmax.f32 %v748, 0.0
      %v753 = vmax.f32 %v749, 0.0
      %v754 = vand.u32 2147483647, %v746
      %v755 = vand.u32 2147483647, %v747
      %v756 = vand.u32 2147483647, %v748
      %v757 = vand.u32 2147483647, %v749
      %v758 = vsub.f32 0.0, %v754
      %v759 = vsub.f32 0.0, %v755
      %v760 = vsub.f32 0.0, %v756
      %v761 = vsub.f32 0.0, %v757
      %v762 = vmul.f32 %v758, 1.442695
      %v763 = vpow.pop %v762
      %v764 = vmul.f32 %v759, 1.442695
      %v765 = vpow.pop %v764
      %v766 = vmul.f32 %v760, 1.442695
      %v767 = vpow.pop %v766
      %v768 = vmul.f32 %v761, 1.442695
      %v769 = vpow.pop %v768
      %v770 = vadd.f32 %v763, 1.0
      %v771 = vadd.f32 %v765, 1.0
      %v772 = vadd.f32 %v767, 1.0
      %v773 = vadd.f32 %v769, 1.0
      %v774 = vlog2.pop %v770
      %v775 = vmul.f32 %v774, 0.6931472
      %v776 = vlog2.pop %v771
      %v777 = vmul.f32 %v776, 0.6931472
      %v778 = vlog2.pop %v772
      %v779 = vmul.f32 %v778, 0.6931472
      %v780 = vlog2.pop %v773
      %v781 = vmul.f32 %v780, 0.6931472
      %v782 = vadd.f32 %v750, %v775
      %v783 = vadd.f32 %v751, %v777
      %v784 = vadd.f32 %v752, %v779
      %v785 = vadd.f32 %v753, %v781
      %v786 = vmul.f32 %v782, %v584
      %v787 = vmul.f32 %v783, %v585
      %v788 = vmul.f32 %v784, %v586
      %v789 = vmul.f32 %v785, %v587
      %v790 = vld [vmem:[%s6] sm:$0xff]
      %v791 = vld [vmem:[%s6 + $0x8] sm:$0xff]
      %v793 = vcombine.high %v782, %v782
      %v795 = vunpack.c.l.s4 1966171168
      %v796 = vunpack.c.0.s8 %v795
      %v797 = vlaneseq
      %v798 = vshrl.u32 %v797, 7
      %v799 = vsub.s32 %v796, %v798
      %v800 = vrot.slane %v782, %v799
      %v802 = vunpack.c.l.s4 1966171168
      %v803 = vunpack.c.0.s8 %v802
      %v804 = vlaneseq
      %v805 = vshrl.u32 %v804, 7
      %v806 = vsub.s32 %v803, %v805
      %v807 = vrot.slane %v793, %v806
      %v808 = vcombine.high %v800, %v800
      %v809 = vcombine.high %v807, %v807
      %v811 = vunpack.c.l.s4 1966171168
      %v812 = vunpack.c.0.s8 %v811
      %v813 = vlaneseq
      %v814 = vshrl.u32 %v813, 7
      %v815 = vsub.s32 %v812, %v814
      %v816 = vrot.slane %v800, %v815
      %v818 = vunpack.c.l.s4 1966171168
      %v819 = vunpack.c.0.s8 %v818
      %v820 = vlaneseq
      %v821 = vshrl.u32 %v820, 7
      %v822 = vsub.s32 %v819, %v821
      %v823 = vrot.slane %v807, %v822
      %v825 = vunpack.c.l.s4 1966171168
      %v826 = vunpack.c.0.s8 %v825
      %v827 = vlaneseq
      %v828 = vshrl.u32 %v827, 7
      %v829 = vsub.s32 %v826, %v828
      %v830 = vrot.slane %v808, %v829
      %v832 = vunpack.c.l.s4 1966171168
      %v833 = vunpack.c.0.s8 %v832
      %v834 = vlaneseq
      %v835 = vshrl.u32 %v834, 7
      %v836 = vsub.s32 %v833, %v835
      %v837 = vrot.slane %v809, %v836
      %v838 = vcombine.high %v816, %v816
      %v839 = vcombine.high %v823, %v823
      %v840 = vcombine.high %v830, %v830
      %v841 = vcombine.high %v837, %v837
      %v842 = vlaneseq
      %v843 = vshrl.u32 %v842, 7
      %v844 = vsub.s32 0, %v843
      %v845 = vrot.slane %v816, %v844
      %v846 = vlaneseq
      %v847 = vshrl.u32 %v846, 7
      %v848 = vsub.s32 0, %v847
      %v849 = vrot.slane %v830, %v848
      %v850 = vlaneseq
      %v851 = vshrl.u32 %v850, 7
      %v852 = vsub.s32 0, %v851
      %v853 = vrot.slane %v838, %v852
      %v854 = vlaneseq
      %v855 = vshrl.u32 %v854, 7
      %v856 = vsub.s32 0, %v855
      %v857 = vrot.slane %v840, %v856
      %v858 = vlaneseq
      %v859 = vshrl.u32 %v858, 7
      %v860 = vsub.s32 0, %v859
      %v861 = vrot.slane %v823, %v860
      %v862 = vlaneseq
      %v863 = vshrl.u32 %v862, 7
      %v864 = vsub.s32 0, %v863
      %v865 = vrot.slane %v837, %v864
      %v866 = vlaneseq
      %v867 = vshrl.u32 %v866, 7
      %v868 = vsub.s32 0, %v867
      %v869 = vrot.slane %v839, %v868
      %v870 = vlaneseq
      %v871 = vshrl.u32 %v870, 7
      %v872 = vsub.s32 0, %v871
      %v873 = vrot.slane %v841, %v872
      %v882 = vmul.f32 %v845, %v790
      %v883 = vmul.f32 %v845, %v791
      %v884 = vmul.f32 %v849, %v790
      %v885 = vmul.f32 %v849, %v791
      %v886 = vmul.f32 %v853, %v790
      %v887 = vmul.f32 %v853, %v791
      %v888 = vmul.f32 %v857, %v790
      %v889 = vmul.f32 %v857, %v791
      %v890 = vmul.f32 %v861, %v790
      %v891 = vmul.f32 %v861, %v791
      %v892 = vmul.f32 %v865, %v790
      %v893 = vmul.f32 %v865, %v791
      %v894 = vmul.f32 %v869, %v790
      %v895 = vmul.f32 %v869, %v791
      %v896 = vmul.f32 %v873, %v790
      %v897 = vmul.f32 %v873, %v791
      %v898 = vmul.f32 %v882, 1.442695
      %v899 = vpow.pop %v898
      %v900 = vmul.f32 %v883, 1.442695
      %v901 = vpow.pop %v900
      %v902 = vmul.f32 %v884, 1.442695
      %v903 = vpow.pop %v902
      %v904 = vmul.f32 %v885, 1.442695
      %v905 = vpow.pop %v904
      %v906 = vmul.f32 %v886, 1.442695
      %v907 = vpow.pop %v906
      %v908 = vmul.f32 %v887, 1.442695
      %v909 = vpow.pop %v908
      %v910 = vmul.f32 %v888, 1.442695
      %v911 = vpow.pop %v910
      %v912 = vmul.f32 %v889, 1.442695
      %v913 = vpow.pop %v912
      %v914 = vmul.f32 %v890, 1.442695
      %v915 = vpow.pop %v914
      %v916 = vmul.f32 %v891, 1.442695
      %v917 = vpow.pop %v916
      %v918 = vmul.f32 %v892, 1.442695
      %v919 = vpow.pop %v918
      %v920 = vmul.f32 %v893, 1.442695
      %v921 = vpow.pop %v920
      %v922 = vmul.f32 %v894, 1.442695
      %v923 = vpow.pop %v922
      %v924 = vmul.f32 %v895, 1.442695
      %v925 = vpow.pop %v924
      %v926 = vmul.f32 %v896, 1.442695
      %v927 = vpow.pop %v926
      %v928 = vmul.f32 %v897, 1.442695
      %v929 = vpow.pop %v928
      %v930 = vlaneseq
      %v931 = vshrl.u32 %v930, 7
      %v932 = vsub.s32 0, %v931
      %v933 = vrot.slane %v723, %v932
      %935 = vbcast.lane.b32.xlu0 %v933, 256
      %v936 = vpop.permute.xlu0 %935
      %s938 = sor.u32 256, 8
      %939 = vbcast.lane.b32.xlu0 %v933, %s938
      %v940 = vpop.permute.xlu0 %939
      %v941 = vlaneseq
      %v942 = vshrl.u32 %v941, 7
      %v943 = vsub.s32 1, %v942
      %v944 = vrot.slane %v723, %v943
      %946 = vbcast.lane.b32.xlu0 %v944, 256
      %v947 = vpop.permute.xlu0 %946
      %s949 = sor.u32 256, 8
      %950 = vbcast.lane.b32.xlu0 %v944, %s949
      %v951 = vpop.permute.xlu0 %950
      %v952 = vlaneseq
      %v953 = vshrl.u32 %v952, 7
      %v954 = vsub.s32 2, %v953
      %v955 = vrot.slane %v723, %v954
      %957 = vbcast.lane.b32.xlu0 %v955, 256
      %v958 = vpop.permute.xlu0 %957
      %s960 = sor.u32 256, 8
      %961 = vbcast.lane.b32.xlu0 %v955, %s960
      %v962 = vpop.permute.xlu0 %961
      %v963 = vlaneseq
      %v964 = vshrl.u32 %v963, 7
      %v965 = vsub.s32 3, %v964
      %v966 = vrot.slane %v723, %v965
      %968 = vbcast.lane.b32.xlu0 %v966, 256
      %v969 = vpop.permute.xlu0 %968
      %s971 = sor.u32 256, 8
      %972 = vbcast.lane.b32.xlu0 %v966, %s971
      %v973 = vpop.permute.xlu0 %972
      %v974 = vlaneseq
      %v975 = vshrl.u32 %v974, 7
      %v976 = vsub.s32 4, %v975
      %v977 = vrot.slane %v723, %v976
      %979 = vbcast.lane.b32.xlu0 %v977, 256
      %v980 = vpop.permute.xlu0 %979
      %s982 = sor.u32 256, 8
      %983 = vbcast.lane.b32.xlu0 %v977, %s982
      %v984 = vpop.permute.xlu0 %983
      %v985 = vlaneseq
      %v986 = vshrl.u32 %v985, 7
      %v987 = vsub.s32 5, %v986
      %v988 = vrot.slane %v723, %v987
      %990 = vbcast.lane.b32.xlu0 %v988, 256
      %v991 = vpop.permute.xlu0 %990
      %s993 = sor.u32 256, 8
      %994 = vbcast.lane.b32.xlu0 %v988, %s993
      %v995 = vpop.permute.xlu0 %994
      %v996 = vlaneseq
      %v997 = vshrl.u32 %v996, 7
      %v998 = vsub.s32 6, %v997
      %v999 = vrot.slane %v723, %v998
      %1001 = vbcast.lane.b32.xlu0 %v999, 256
      %v1002 = vpop.permute.xlu0 %1001
      %s1004 = sor.u32 256, 8
      %1005 = vbcast.lane.b32.xlu0 %v999, %s1004
      %v1006 = vpop.permute.xlu0 %1005
      %v1007 = vlaneseq
      %v1008 = vshrl.u32 %v1007, 7
      %v1009 = vsub.s32 7, %v1008
      %v1010 = vrot.slane %v723, %v1009
      %1012 = vbcast.lane.b32.xlu0 %v1010, 256
      %v1013 = vpop.permute.xlu0 %1012
      %s1015 = sor.u32 256, 8
      %1016 = vbcast.lane.b32.xlu0 %v1010, %s1015
      %v1017 = vpop.permute.xlu0 %1016
      %v1019 = vcombine.high %v786, %v786
      %v1021 = vunpack.c.l.s4 1966171168
      %v1022 = vunpack.c.0.s8 %v1021
      %v1023 = vlaneseq
      %v1024 = vshrl.u32 %v1023, 7
      %v1025 = vsub.s32 %v1022, %v1024
      %v1026 = vrot.slane %v786, %v1025
      %v1028 = vunpack.c.l.s4 1966171168
      %v1029 = vunpack.c.0.s8 %v1028
      %v1030 = vlaneseq
      %v1031 = vshrl.u32 %v1030, 7
      %v1032 = vsub.s32 %v1029, %v1031
      %v1033 = vrot.slane %v1019, %v1032
      %v1034 = vcombine.high %v1026, %v1026
      %v1035 = vcombine.high %v1033, %v1033
      %v1037 = vunpack.c.l.s4 1966171168
      %v1038 = vunpack.c.0.s8 %v1037
      %v1039 = vlaneseq
      %v1040 = vshrl.u32 %v1039, 7
      %v1041 = vsub.s32 %v1038, %v1040
      %v1042 = vrot.slane %v1026, %v1041
      %v1044 = vunpack.c.l.s4 1966171168
      %v1045 = vunpack.c.0.s8 %v1044
      %v1046 = vlaneseq
      %v1047 = vshrl.u32 %v1046, 7
      %v1048 = vsub.s32 %v1045, %v1047
      %v1049 = vrot.slane %v1033, %v1048
      %v1051 = vunpack.c.l.s4 1966171168
      %v1052 = vunpack.c.0.s8 %v1051
      %v1053 = vlaneseq
      %v1054 = vshrl.u32 %v1053, 7
      %v1055 = vsub.s32 %v1052, %v1054
      %v1056 = vrot.slane %v1034, %v1055
      %v1058 = vunpack.c.l.s4 1966171168
      %v1059 = vunpack.c.0.s8 %v1058
      %v1060 = vlaneseq
      %v1061 = vshrl.u32 %v1060, 7
      %v1062 = vsub.s32 %v1059, %v1061
      %v1063 = vrot.slane %v1035, %v1062
      %v1064 = vcombine.high %v1042, %v1042
      %v1065 = vcombine.high %v1049, %v1049
      %v1066 = vcombine.high %v1056, %v1056
      %v1067 = vcombine.high %v1063, %v1063
      %v1068 = vlaneseq
      %v1069 = vshrl.u32 %v1068, 7
      %v1070 = vsub.s32 0, %v1069
      %v1071 = vrot.slane %v1042, %v1070
      %v1072 = vlaneseq
      %v1073 = vshrl.u32 %v1072, 7
      %v1074 = vsub.s32 0, %v1073
      %v1075 = vrot.slane %v1056, %v1074
      %v1076 = vlaneseq
      %v1077 = vshrl.u32 %v1076, 7
      %v1078 = vsub.s32 0, %v1077
      %v1079 = vrot.slane %v1064, %v1078
      %v1080 = vlaneseq
      %v1081 = vshrl.u32 %v1080, 7
      %v1082 = vsub.s32 0, %v1081
      %v1083 = vrot.slane %v1066, %v1082
      %v1084 = vlaneseq
      %v1085 = vshrl.u32 %v1084, 7
      %v1086 = vsub.s32 0, %v1085
      %v1087 = vrot.slane %v1049, %v1086
      %v1088 = vlaneseq
      %v1089 = vshrl.u32 %v1088, 7
      %v1090 = vsub.s32 0, %v1089
      %v1091 = vrot.slane %v1063, %v1090
      %v1092 = vlaneseq
      %v1093 = vshrl.u32 %v1092, 7
      %v1094 = vsub.s32 0, %v1093
      %v1095 = vrot.slane %v1065, %v1094
      %v1096 = vlaneseq
      %v1097 = vshrl.u32 %v1096, 7
      %v1098 = vsub.s32 0, %v1097
      %v1099 = vrot.slane %v1067, %v1098
      %v1108 = vmul.f32 %v936, %v1071
      %v1109 = vmul.f32 %v940, %v1071
      %v1110 = vmul.f32 %v947, %v1075
      %v1111 = vmul.f32 %v951, %v1075
      %v1112 = vmul.f32 %v958, %v1079
      %v1113 = vmul.f32 %v962, %v1079
      %v1114 = vmul.f32 %v969, %v1083
      %v1115 = vmul.f32 %v973, %v1083
      %v1116 = vmul.f32 %v980, %v1087
      %v1117 = vmul.f32 %v984, %v1087
      %v1118 = vmul.f32 %v991, %v1091
      %v1119 = vmul.f32 %v995, %v1091
      %v1120 = vmul.f32 %v1002, %v1095
      %v1121 = vmul.f32 %v1006, %v1095
      %v1122 = vmul.f32 %v1013, %v1099
      %v1123 = vmul.f32 %v1017, %v1099
      %v1124 = vmul.f32 %v899, 0.0
      %v1125 = vmul.f32 %v901, 0.0
      %v1126 = vmul.f32 %v903, %v1108
      %v1127 = vmul.f32 %v905, %v1109
      %v1128 = vmul.f32 %v907, %v1110
      %v1129 = vmul.f32 %v909, %v1111
      %v1130 = vmul.f32 %v911, %v1112
      %v1131 = vmul.f32 %v913, %v1113
      %v1132 = vmul.f32 %v915, %v1114
      %v1133 = vmul.f32 %v917, %v1115
      %v1134 = vmul.f32 %v919, %v1116
      %v1135 = vmul.f32 %v921, %v1117
      %v1136 = vmul.f32 %v923, %v1118
      %v1137 = vmul.f32 %v925, %v1119
      %v1138 = vmul.f32 %v927, %v1120
      %v1139 = vmul.f32 %v929, %v1121
      %v1140 = vadd.f32 %v1124, %v1108
      %v1141 = vadd.f32 %v1125, %v1109
      %v1142 = vadd.f32 %v1126, %v1110
      %v1143 = vadd.f32 %v1127, %v1111
      %v1144 = vadd.f32 %v1128, %v1112
      %v1145 = vadd.f32 %v1129, %v1113
      %v1146 = vadd.f32 %v1130, %v1114
      %v1147 = vadd.f32 %v1131, %v1115
      %v1148 = vadd.f32 %v1132, %v1116
      %v1149 = vadd.f32 %v1133, %v1117
      %v1150 = vadd.f32 %v1134, %v1118
      %v1151 = vadd.f32 %v1135, %v1119
      %v1152 = vadd.f32 %v1136, %v1120
      %v1153 = vadd.f32 %v1137, %v1121
      %v1154 = vadd.f32 %v1138, %v1122
      %v1155 = vadd.f32 %v1139, %v1123
      %v1156 = vmul.f32 %v903, %v899
      %v1157 = vmul.f32 %v905, %v901
      %v1158 = vmul.f32 %v907, %v903
      %v1159 = vmul.f32 %v909, %v905
      %v1160 = vmul.f32 %v911, %v907
      %v1161 = vmul.f32 %v913, %v909
      %v1162 = vmul.f32 %v915, %v911
      %v1163 = vmul.f32 %v917, %v913
      %v1164 = vmul.f32 %v919, %v915
      %v1165 = vmul.f32 %v921, %v917
      %v1166 = vmul.f32 %v923, %v919
      %v1167 = vmul.f32 %v925, %v921
      %v1168 = vmul.f32 %v927, %v923
      %v1169 = vmul.f32 %v929, %v925
      %v1170 = vmul.f32 %v1156, 0.0
      %v1171 = vmul.f32 %v1157, 0.0
      %v1172 = vmul.f32 %v1158, %v1140
      %v1173 = vmul.f32 %v1159, %v1141
      %v1174 = vmul.f32 %v1160, %v1142
      %v1175 = vmul.f32 %v1161, %v1143
      %v1176 = vmul.f32 %v1162, %v1144
      %v1177 = vmul.f32 %v1163, %v1145
      %v1178 = vmul.f32 %v1164, %v1146
      %v1179 = vmul.f32 %v1165, %v1147
      %v1180 = vmul.f32 %v1166, %v1148
      %v1181 = vmul.f32 %v1167, %v1149
      %v1182 = vmul.f32 %v1168, %v1150
      %v1183 = vmul.f32 %v1169, %v1151
      %v1184 = vadd.f32 %v1124, %v1140
      %v1185 = vadd.f32 %v1125, %v1141
      %v1186 = vadd.f32 %v1170, %v1142
      %v1187 = vadd.f32 %v1171, %v1143
      %v1188 = vadd.f32 %v1172, %v1144
      %v1189 = vadd.f32 %v1173, %v1145
      %v1190 = vadd.f32 %v1174, %v1146
      %v1191 = vadd.f32 %v1175, %v1147
      %v1192 = vadd.f32 %v1176, %v1148
      %v1193 = vadd.f32 %v1177, %v1149
      %v1194 = vadd.f32 %v1178, %v1150
      %v1195 = vadd.f32 %v1179, %v1151
      %v1196 = vadd.f32 %v1180, %v1152
      %v1197 = vadd.f32 %v1181, %v1153
      %v1198 = vadd.f32 %v1182, %v1154
      %v1199 = vadd.f32 %v1183, %v1155
      %v1200 = vmul.f32 %v1158, %v899
      %v1201 = vmul.f32 %v1159, %v901
      %v1202 = vmul.f32 %v1160, %v1156
      %v1203 = vmul.f32 %v1161, %v1157
      %v1204 = vmul.f32 %v1162, %v1158
      %v1205 = vmul.f32 %v1163, %v1159
      %v1206 = vmul.f32 %v1164, %v1160
      %v1207 = vmul.f32 %v1165, %v1161
      %v1208 = vmul.f32 %v1166, %v1162
      %v1209 = vmul.f32 %v1167, %v1163
      %v1210 = vmul.f32 %v1168, %v1164
      %v1211 = vmul.f32 %v1169, %v1165
      %v1212 = vmul.f32 %v1200, 0.0
      %v1213 = vmul.f32 %v1201, 0.0
      %v1214 = vmul.f32 %v1202, 0.0
      %v1215 = vmul.f32 %v1203, 0.0
      %v1216 = vmul.f32 %v1204, %v1184
      %v1217 = vmul.f32 %v1205, %v1185
      %v1218 = vmul.f32 %v1206, %v1186
      %v1219 = vmul.f32 %v1207, %v1187
      %v1220 = vmul.f32 %v1208, %v1188
      %v1221 = vmul.f32 %v1209, %v1189
      %v1222 = vmul.f32 %v1210, %v1190
      %v1223 = vmul.f32 %v1211, %v1191
      %v1224 = vadd.f32 %v1124, %v1184
      %v1225 = vadd.f32 %v1125, %v1185
      %v1226 = vadd.f32 %v1170, %v1186
      %v1227 = vadd.f32 %v1171, %v1187
      %v1228 = vadd.f32 %v1212, %v1188
      %v1229 = vadd.f32 %v1213, %v1189
      %v1230 = vadd.f32 %v1214, %v1190
      %v1231 = vadd.f32 %v1215, %v1191
      %v1232 = vadd.f32 %v1216, %v1192
      %v1233 = vadd.f32 %v1217, %v1193
      %v1234 = vadd.f32 %v1218, %v1194
      %v1235 = vadd.f32 %v1219, %v1195
      %v1236 = vadd.f32 %v1220, %v1196
      %v1237 = vadd.f32 %v1221, %v1197
      %v1238 = vadd.f32 %v1222, %v1198
      %v1239 = vadd.f32 %v1223, %v1199
      %v1240 = vmul.f32 %v1204, %v899
      %v1241 = vmul.f32 %v1205, %v901
      %v1242 = vmul.f32 %v1206, %v1156
      %v1243 = vmul.f32 %v1207, %v1157
      %v1244 = vmul.f32 %v1208, %v1200
      %v1245 = vmul.f32 %v1209, %v1201
      %v1246 = vmul.f32 %v1210, %v1202
      %v1247 = vmul.f32 %v1211, %v1203
      %v1248 = vmul.f32 %v1240, 0.0
      %v1249 = vmul.f32 %v1241, 0.0
      %v1250 = vmul.f32 %v1242, 0.0
      %v1251 = vmul.f32 %v1243, 0.0
      %v1252 = vmul.f32 %v1244, 0.0
      %v1253 = vmul.f32 %v1245, 0.0
      %v1254 = vmul.f32 %v1246, 0.0
      %v1255 = vmul.f32 %v1247, 0.0
      %v1256 = vadd.f32 %v1124, %v1224
      %v1257 = vadd.f32 %v1125, %v1225
      %v1258 = vadd.f32 %v1170, %v1226
      %v1259 = vadd.f32 %v1171, %v1227
      %v1260 = vadd.f32 %v1212, %v1228
      %v1261 = vadd.f32 %v1213, %v1229
      %v1262 = vadd.f32 %v1214, %v1230
      %v1263 = vadd.f32 %v1215, %v1231
      %v1264 = vadd.f32 %v1248, %v1232
      %v1265 = vadd.f32 %v1249, %v1233
      %v1266 = vadd.f32 %v1250, %v1234
      %v1267 = vadd.f32 %v1251, %v1235
      %v1268 = vadd.f32 %v1252, %v1236
      %v1269 = vadd.f32 %v1253, %v1237
      %v1270 = vadd.f32 %v1254, %v1238
      %v1271 = vadd.f32 %v1255, %v1239
      %s1273 = sor.u32 256, 16
      %1274 = vbcast.lane.b32.xlu0 %v933, %s1273
      %v1275 = vpop.permute.xlu0 %1274
      %s1277 = sor.u32 256, 24
      %1278 = vbcast.lane.b32.xlu0 %v933, %s1277
      %v1279 = vpop.permute.xlu0 %1278
      %s1281 = sor.u32 256, 16
      %1282 = vbcast.lane.b32.xlu0 %v944, %s1281
      %v1283 = vpop.permute.xlu0 %1282
      %s1285 = sor.u32 256, 24
      %1286 = vbcast.lane.b32.xlu0 %v944, %s1285
      %v1287 = vpop.permute.xlu0 %1286
      %s1289 = sor.u32 256, 16
      %1290 = vbcast.lane.b32.xlu0 %v955, %s1289
      %v1291 = vpop.permute.xlu0 %1290
      %s1293 = sor.u32 256, 24
      %1294 = vbcast.lane.b32.xlu0 %v955, %s1293
      %v1295 = vpop.permute.xlu0 %1294
      %s1297 = sor.u32 256, 16
      %1298 = vbcast.lane.b32.xlu0 %v966, %s1297
      %v1299 = vpop.permute.xlu0 %1298
      %s1301 = sor.u32 256, 24
      %1302 = vbcast.lane.b32.xlu0 %v966, %s1301
      %v1303 = vpop.permute.xlu0 %1302
      %s1305 = sor.u32 256, 16
      %1306 = vbcast.lane.b32.xlu0 %v977, %s1305
      %v1307 = vpop.permute.xlu0 %1306
      %s1309 = sor.u32 256, 24
      %1310 = vbcast.lane.b32.xlu0 %v977, %s1309
      %v1311 = vpop.permute.xlu0 %1310
      %s1313 = sor.u32 256, 16
      %1314 = vbcast.lane.b32.xlu0 %v988, %s1313
      %v1315 = vpop.permute.xlu0 %1314
      %s1317 = sor.u32 256, 24
      %1318 = vbcast.lane.b32.xlu0 %v988, %s1317
      %v1319 = vpop.permute.xlu0 %1318
      %s1321 = sor.u32 256, 16
      %1322 = vbcast.lane.b32.xlu0 %v999, %s1321
      %v1323 = vpop.permute.xlu0 %1322
      %s1325 = sor.u32 256, 24
      %1326 = vbcast.lane.b32.xlu0 %v999, %s1325
      %v1327 = vpop.permute.xlu0 %1326
      %s1329 = sor.u32 256, 16
      %1330 = vbcast.lane.b32.xlu0 %v1010, %s1329
      %v1331 = vpop.permute.xlu0 %1330
      %s1333 = sor.u32 256, 24
      %1334 = vbcast.lane.b32.xlu0 %v1010, %s1333
      %v1335 = vpop.permute.xlu0 %1334
      %v1336 = vmul.f32 %v1275, %v1256
      %v1337 = vmul.f32 %v1279, %v1257
      %v1338 = vmul.f32 %v1283, %v1258
      %v1339 = vmul.f32 %v1287, %v1259
      %v1340 = vmul.f32 %v1291, %v1260
      %v1341 = vmul.f32 %v1295, %v1261
      %v1342 = vmul.f32 %v1299, %v1262
      %v1343 = vmul.f32 %v1303, %v1263
      %v1344 = vmul.f32 %v1307, %v1264
      %v1345 = vmul.f32 %v1311, %v1265
      %v1346 = vmul.f32 %v1315, %v1266
      %v1347 = vmul.f32 %v1319, %v1267
      %v1348 = vmul.f32 %v1323, %v1268
      %v1349 = vmul.f32 %v1327, %v1269
      %v1350 = vmul.f32 %v1331, %v1270
      %v1351 = vmul.f32 %v1335, %v1271
      %v1352 = vadd.f32 %v1336, %v1337
      %v1353 = vrot.slane %v1352, 4
      %v1354 = vadd.f32 %v1352, %v1353
      %v1355 = vrot.slane %v1354, 2
      %v1356 = vadd.f32 %v1354, %v1355
      %v1357 = vrot.slane %v1356, 1
      %v1358 = vadd.f32 %v1356, %v1357
      %v1359 = vadd.f32 %v1338, %v1339
      %v1360 = vrot.slane %v1359, 4
      %v1361 = vadd.f32 %v1359, %v1360
      %v1362 = vrot.slane %v1361, 2
      %v1363 = vadd.f32 %v1361, %v1362
      %v1364 = vrot.slane %v1363, 1
      %v1365 = vadd.f32 %v1363, %v1364
      %v1366 = vadd.f32 %v1340, %v1341
      %v1367 = vrot.slane %v1366, 4
      %v1368 = vadd.f32 %v1366, %v1367
      %v1369 = vrot.slane %v1368, 2
      %v1370 = vadd.f32 %v1368, %v1369
      %v1371 = vrot.slane %v1370, 1
      %v1372 = vadd.f32 %v1370, %v1371
      %v1373 = vadd.f32 %v1342, %v1343
      %v1374 = vrot.slane %v1373, 4
      %v1375 = vadd.f32 %v1373, %v1374
      %v1376 = vrot.slane %v1375, 2
      %v1377 = vadd.f32 %v1375, %v1376
      %v1378 = vrot.slane %v1377, 1
      %v1379 = vadd.f32 %v1377, %v1378
      %v1380 = vadd.f32 %v1344, %v1345
      %v1381 = vrot.slane %v1380, 4
      %v1382 = vadd.f32 %v1380, %v1381
      %v1383 = vrot.slane %v1382, 2
      %v1384 = vadd.f32 %v1382, %v1383
      %v1385 = vrot.slane %v1384, 1
      %v1386 = vadd.f32 %v1384, %v1385
      %v1387 = vadd.f32 %v1346, %v1347
      %v1388 = vrot.slane %v1387, 4
      %v1389 = vadd.f32 %v1387, %v1388
      %v1390 = vrot.slane %v1389, 2
      %v1391 = vadd.f32 %v1389, %v1390
      %v1392 = vrot.slane %v1391, 1
      %v1393 = vadd.f32 %v1391, %v1392
      %v1394 = vadd.f32 %v1348, %v1349
      %v1395 = vrot.slane %v1394, 4
      %v1396 = vadd.f32 %v1394, %v1395
      %v1397 = vrot.slane %v1396, 2
      %v1398 = vadd.f32 %v1396, %v1397
      %v1399 = vrot.slane %v1398, 1
      %v1400 = vadd.f32 %v1398, %v1399
      %v1401 = vadd.f32 %v1350, %v1351
      %v1402 = vrot.slane %v1401, 4
      %v1403 = vadd.f32 %v1401, %v1402
      %v1404 = vrot.slane %v1403, 2
      %v1405 = vadd.f32 %v1403, %v1404
      %v1406 = vrot.slane %v1405, 1
      %v1407 = vadd.f32 %v1405, %v1406
      %v1409 = vcombine.high %v783, %v783
      %v1411 = vunpack.c.l.s4 1966171168
      %v1412 = vunpack.c.0.s8 %v1411
      %v1413 = vlaneseq
      %v1414 = vshrl.u32 %v1413, 7
      %v1415 = vsub.s32 %v1412, %v1414
      %v1416 = vrot.slane %v783, %v1415
      %v1418 = vunpack.c.l.s4 1966171168
      %v1419 = vunpack.c.0.s8 %v1418
      %v1420 = vlaneseq
      %v1421 = vshrl.u32 %v1420, 7
      %v1422 = vsub.s32 %v1419, %v1421
      %v1423 = vrot.slane %v1409, %v1422
      %v1424 = vcombine.high %v1416, %v1416
      %v1425 = vcombine.high %v1423, %v1423
      %v1427 = vunpack.c.l.s4 1966171168
      %v1428 = vunpack.c.0.s8 %v1427
      %v1429 = vlaneseq
      %v1430 = vshrl.u32 %v1429, 7
      %v1431 = vsub.s32 %v1428, %v1430
      %v1432 = vrot.slane %v1416, %v1431
      %v1434 = vunpack.c.l.s4 1966171168
      %v1435 = vunpack.c.0.s8 %v1434
      %v1436 = vlaneseq
      %v1437 = vshrl.u32 %v1436, 7
      %v1438 = vsub.s32 %v1435, %v1437
      %v1439 = vrot.slane %v1423, %v1438
      %v1441 = vunpack.c.l.s4 1966171168
      %v1442 = vunpack.c.0.s8 %v1441
      %v1443 = vlaneseq
      %v1444 = vshrl.u32 %v1443, 7
      %v1445 = vsub.s32 %v1442, %v1444
      %v1446 = vrot.slane %v1424, %v1445
      %v1448 = vunpack.c.l.s4 1966171168
      %v1449 = vunpack.c.0.s8 %v1448
      %v1450 = vlaneseq
      %v1451 = vshrl.u32 %v1450, 7
      %v1452 = vsub.s32 %v1449, %v1451
      %v1453 = vrot.slane %v1425, %v1452
      %v1454 = vcombine.high %v1432, %v1432
      %v1455 = vcombine.high %v1439, %v1439
      %v1456 = vcombine.high %v1446, %v1446
      %v1457 = vcombine.high %v1453, %v1453
      %v1458 = vlaneseq
      %v1459 = vshrl.u32 %v1458, 7
      %v1460 = vsub.s32 0, %v1459
      %v1461 = vrot.slane %v1432, %v1460
      %v1462 = vlaneseq
      %v1463 = vshrl.u32 %v1462, 7
      %v1464 = vsub.s32 0, %v1463
      %v1465 = vrot.slane %v1446, %v1464
      %v1466 = vlaneseq
      %v1467 = vshrl.u32 %v1466, 7
      %v1468 = vsub.s32 0, %v1467
      %v1469 = vrot.slane %v1454, %v1468
      %v1470 = vlaneseq
      %v1471 = vshrl.u32 %v1470, 7
      %v1472 = vsub.s32 0, %v1471
      %v1473 = vrot.slane %v1456, %v1472
      %v1474 = vlaneseq
      %v1475 = vshrl.u32 %v1474, 7
      %v1476 = vsub.s32 0, %v1475
      %v1477 = vrot.slane %v1439, %v1476
      %v1478 = vlaneseq
      %v1479 = vshrl.u32 %v1478, 7
      %v1480 = vsub.s32 0, %v1479
      %v1481 = vrot.slane %v1453, %v1480
      %v1482 = vlaneseq
      %v1483 = vshrl.u32 %v1482, 7
      %v1484 = vsub.s32 0, %v1483
      %v1485 = vrot.slane %v1455, %v1484
      %v1486 = vlaneseq
      %v1487 = vshrl.u32 %v1486, 7
      %v1488 = vsub.s32 0, %v1487
      %v1489 = vrot.slane %v1457, %v1488
      %v1498 = vmul.f32 %v1461, %v790
      %v1499 = vmul.f32 %v1461, %v791
      %v1500 = vmul.f32 %v1465, %v790
      %v1501 = vmul.f32 %v1465, %v791
      %v1502 = vmul.f32 %v1469, %v790
      %v1503 = vmul.f32 %v1469, %v791
      %v1504 = vmul.f32 %v1473, %v790
      %v1505 = vmul.f32 %v1473, %v791
      %v1506 = vmul.f32 %v1477, %v790
      %v1507 = vmul.f32 %v1477, %v791
      %v1508 = vmul.f32 %v1481, %v790
      %v1509 = vmul.f32 %v1481, %v791
      %v1510 = vmul.f32 %v1485, %v790
      %v1511 = vmul.f32 %v1485, %v791
      %v1512 = vmul.f32 %v1489, %v790
      %v1513 = vmul.f32 %v1489, %v791
      %v1514 = vmul.f32 %v1498, 1.442695
      %v1515 = vpow.pop %v1514
      %v1516 = vmul.f32 %v1499, 1.442695
      %v1517 = vpow.pop %v1516
      %v1518 = vmul.f32 %v1500, 1.442695
      %v1519 = vpow.pop %v1518
      %v1520 = vmul.f32 %v1501, 1.442695
      %v1521 = vpow.pop %v1520
      %v1522 = vmul.f32 %v1502, 1.442695
      %v1523 = vpow.pop %v1522
      %v1524 = vmul.f32 %v1503, 1.442695
      %v1525 = vpow.pop %v1524
      %v1526 = vmul.f32 %v1504, 1.442695
      %v1527 = vpow.pop %v1526
      %v1528 = vmul.f32 %v1505, 1.442695
      %v1529 = vpow.pop %v1528
      %v1530 = vmul.f32 %v1506, 1.442695
      %v1531 = vpow.pop %v1530
      %v1532 = vmul.f32 %v1507, 1.442695
      %v1533 = vpow.pop %v1532
      %v1534 = vmul.f32 %v1508, 1.442695
      %v1535 = vpow.pop %v1534
      %v1536 = vmul.f32 %v1509, 1.442695
      %v1537 = vpow.pop %v1536
      %v1538 = vmul.f32 %v1510, 1.442695
      %v1539 = vpow.pop %v1538
      %v1540 = vmul.f32 %v1511, 1.442695
      %v1541 = vpow.pop %v1540
      %v1542 = vmul.f32 %v1512, 1.442695
      %v1543 = vpow.pop %v1542
      %v1544 = vmul.f32 %v1513, 1.442695
      %v1545 = vpow.pop %v1544
      %v1546 = vlaneseq
      %v1547 = vshrl.u32 %v1546, 7
      %v1548 = vsub.s32 0, %v1547
      %v1549 = vrot.slane %v727, %v1548
      %1551 = vbcast.lane.b32.xlu0 %v1549, 256
      %v1552 = vpop.permute.xlu0 %1551
      %s1554 = sor.u32 256, 8
      %1555 = vbcast.lane.b32.xlu0 %v1549, %s1554
      %v1556 = vpop.permute.xlu0 %1555
      %v1557 = vlaneseq
      %v1558 = vshrl.u32 %v1557, 7
      %v1559 = vsub.s32 1, %v1558
      %v1560 = vrot.slane %v727, %v1559
      %1562 = vbcast.lane.b32.xlu0 %v1560, 256
      %v1563 = vpop.permute.xlu0 %1562
      %s1565 = sor.u32 256, 8
      %1566 = vbcast.lane.b32.xlu0 %v1560, %s1565
      %v1567 = vpop.permute.xlu0 %1566
      %v1568 = vlaneseq
      %v1569 = vshrl.u32 %v1568, 7
      %v1570 = vsub.s32 2, %v1569
      %v1571 = vrot.slane %v727, %v1570
      %1573 = vbcast.lane.b32.xlu0 %v1571, 256
      %v1574 = vpop.permute.xlu0 %1573
      %s1576 = sor.u32 256, 8
      %1577 = vbcast.lane.b32.xlu0 %v1571, %s1576
      %v1578 = vpop.permute.xlu0 %1577
      %v1579 = vlaneseq
      %v1580 = vshrl.u32 %v1579, 7
      %v1581 = vsub.s32 3, %v1580
      %v1582 = vrot.slane %v727, %v1581
      %1584 = vbcast.lane.b32.xlu0 %v1582, 256
      %v1585 = vpop.permute.xlu0 %1584
      %s1587 = sor.u32 256, 8
      %1588 = vbcast.lane.b32.xlu0 %v1582, %s1587
      %v1589 = vpop.permute.xlu0 %1588
      %v1590 = vlaneseq
      %v1591 = vshrl.u32 %v1590, 7
      %v1592 = vsub.s32 4, %v1591
      %v1593 = vrot.slane %v727, %v1592
      %1595 = vbcast.lane.b32.xlu0 %v1593, 256
      %v1596 = vpop.permute.xlu0 %1595
      %s1598 = sor.u32 256, 8
      %1599 = vbcast.lane.b32.xlu0 %v1593, %s1598
      %v1600 = vpop.permute.xlu0 %1599
      %v1601 = vlaneseq
      %v1602 = vshrl.u32 %v1601, 7
      %v1603 = vsub.s32 5, %v1602
      %v1604 = vrot.slane %v727, %v1603
      %1606 = vbcast.lane.b32.xlu0 %v1604, 256
      %v1607 = vpop.permute.xlu0 %1606
      %s1609 = sor.u32 256, 8
      %1610 = vbcast.lane.b32.xlu0 %v1604, %s1609
      %v1611 = vpop.permute.xlu0 %1610
      %v1612 = vlaneseq
      %v1613 = vshrl.u32 %v1612, 7
      %v1614 = vsub.s32 6, %v1613
      %v1615 = vrot.slane %v727, %v1614
      %1617 = vbcast.lane.b32.xlu0 %v1615, 256
      %v1618 = vpop.permute.xlu0 %1617
      %s1620 = sor.u32 256, 8
      %1621 = vbcast.lane.b32.xlu0 %v1615, %s1620
      %v1622 = vpop.permute.xlu0 %1621
      %v1623 = vlaneseq
      %v1624 = vshrl.u32 %v1623, 7
      %v1625 = vsub.s32 7, %v1624
      %v1626 = vrot.slane %v727, %v1625
      %1628 = vbcast.lane.b32.xlu0 %v1626, 256
      %v1629 = vpop.permute.xlu0 %1628
      %s1631 = sor.u32 256, 8
      %1632 = vbcast.lane.b32.xlu0 %v1626, %s1631
      %v1633 = vpop.permute.xlu0 %1632
      %v1635 = vcombine.high %v787, %v787
      %v1637 = vunpack.c.l.s4 1966171168
      %v1638 = vunpack.c.0.s8 %v1637
      %v1639 = vlaneseq
      %v1640 = vshrl.u32 %v1639, 7
      %v1641 = vsub.s32 %v1638, %v1640
      %v1642 = vrot.slane %v787, %v1641
      %v1644 = vunpack.c.l.s4 1966171168
      %v1645 = vunpack.c.0.s8 %v1644
      %v1646 = vlaneseq
      %v1647 = vshrl.u32 %v1646, 7
      %v1648 = vsub.s32 %v1645, %v1647
      %v1649 = vrot.slane %v1635, %v1648
      %v1650 = vcombine.high %v1642, %v1642
      %v1651 = vcombine.high %v1649, %v1649
      %v1653 = vunpack.c.l.s4 1966171168
      %v1654 = vunpack.c.0.s8 %v1653
      %v1655 = vlaneseq
      %v1656 = vshrl.u32 %v1655, 7
      %v1657 = vsub.s32 %v1654, %v1656
      %v1658 = vrot.slane %v1642, %v1657
      %v1660 = vunpack.c.l.s4 1966171168
      %v1661 = vunpack.c.0.s8 %v1660
      %v1662 = vlaneseq
      %v1663 = vshrl.u32 %v1662, 7
      %v1664 = vsub.s32 %v1661, %v1663
      %v1665 = vrot.slane %v1649, %v1664
      %v1667 = vunpack.c.l.s4 1966171168
      %v1668 = vunpack.c.0.s8 %v1667
      %v1669 = vlaneseq
      %v1670 = vshrl.u32 %v1669, 7
      %v1671 = vsub.s32 %v1668, %v1670
      %v1672 = vrot.slane %v1650, %v1671
      %v1674 = vunpack.c.l.s4 1966171168
      %v1675 = vunpack.c.0.s8 %v1674
      %v1676 = vlaneseq
      %v1677 = vshrl.u32 %v1676, 7
      %v1678 = vsub.s32 %v1675, %v1677
      %v1679 = vrot.slane %v1651, %v1678
      %v1680 = vcombine.high %v1658, %v1658
      %v1681 = vcombine.high %v1665, %v1665
      %v1682 = vcombine.high %v1672, %v1672
      %v1683 = vcombine.high %v1679, %v1679
      %v1684 = vlaneseq
      %v1685 = vshrl.u32 %v1684, 7
      %v1686 = vsub.s32 0, %v1685
      %v1687 = vrot.slane %v1658, %v1686
      %v1688 = vlaneseq
      %v1689 = vshrl.u32 %v1688, 7
      %v1690 = vsub.s32 0, %v1689
      %v1691 = vrot.slane %v1672, %v1690
      %v1692 = vlaneseq
      %v1693 = vshrl.u32 %v1692, 7
      %v1694 = vsub.s32 0, %v1693
      %v1695 = vrot.slane %v1680, %v1694
      %v1696 = vlaneseq
      %v1697 = vshrl.u32 %v1696, 7
      %v1698 = vsub.s32 0, %v1697
      %v1699 = vrot.slane %v1682, %v1698
      %v1700 = vlaneseq
      %v1701 = vshrl.u32 %v1700, 7
      %v1702 = vsub.s32 0, %v1701
      %v1703 = vrot.slane %v1665, %v1702
      %v1704 = vlaneseq
      %v1705 = vshrl.u32 %v1704, 7
      %v1706 = vsub.s32 0, %v1705
      %v1707 = vrot.slane %v1679, %v1706
      %v1708 = vlaneseq
      %v1709 = vshrl.u32 %v1708, 7
      %v1710 = vsub.s32 0, %v1709
      %v1711 = vrot.slane %v1681, %v1710
      %v1712 = vlaneseq
      %v1713 = vshrl.u32 %v1712, 7
      %v1714 = vsub.s32 0, %v1713
      %v1715 = vrot.slane %v1683, %v1714
      %v1724 = vmul.f32 %v1552, %v1687
      %v1725 = vmul.f32 %v1556, %v1687
      %v1726 = vmul.f32 %v1563, %v1691
      %v1727 = vmul.f32 %v1567, %v1691
      %v1728 = vmul.f32 %v1574, %v1695
      %v1729 = vmul.f32 %v1578, %v1695
      %v1730 = vmul.f32 %v1585, %v1699
      %v1731 = vmul.f32 %v1589, %v1699
      %v1732 = vmul.f32 %v1596, %v1703
      %v1733 = vmul.f32 %v1600, %v1703
      %v1734 = vmul.f32 %v1607, %v1707
      %v1735 = vmul.f32 %v1611, %v1707
      %v1736 = vmul.f32 %v1618, %v1711
      %v1737 = vmul.f32 %v1622, %v1711
      %v1738 = vmul.f32 %v1629, %v1715
      %v1739 = vmul.f32 %v1633, %v1715
      %v1740 = vmul.f32 %v1515, 0.0
      %v1741 = vmul.f32 %v1517, 0.0
      %v1742 = vmul.f32 %v1519, %v1724
      %v1743 = vmul.f32 %v1521, %v1725
      %v1744 = vmul.f32 %v1523, %v1726
      %v1745 = vmul.f32 %v1525, %v1727
      %v1746 = vmul.f32 %v1527, %v1728
      %v1747 = vmul.f32 %v1529, %v1729
      %v1748 = vmul.f32 %v1531, %v1730
      %v1749 = vmul.f32 %v1533, %v1731
      %v1750 = vmul.f32 %v1535, %v1732
      %v1751 = vmul.f32 %v1537, %v1733
      %v1752 = vmul.f32 %v1539, %v1734
      %v1753 = vmul.f32 %v1541, %v1735
      %v1754 = vmul.f32 %v1543, %v1736
      %v1755 = vmul.f32 %v1545, %v1737
      %v1756 = vadd.f32 %v1740, %v1724
      %v1757 = vadd.f32 %v1741, %v1725
      %v1758 = vadd.f32 %v1742, %v1726
      %v1759 = vadd.f32 %v1743, %v1727
      %v1760 = vadd.f32 %v1744, %v1728
      %v1761 = vadd.f32 %v1745, %v1729
      %v1762 = vadd.f32 %v1746, %v1730
      %v1763 = vadd.f32 %v1747, %v1731
      %v1764 = vadd.f32 %v1748, %v1732
      %v1765 = vadd.f32 %v1749, %v1733
      %v1766 = vadd.f32 %v1750, %v1734
      %v1767 = vadd.f32 %v1751, %v1735
      %v1768 = vadd.f32 %v1752, %v1736
      %v1769 = vadd.f32 %v1753, %v1737
      %v1770 = vadd.f32 %v1754, %v1738
      %v1771 = vadd.f32 %v1755, %v1739
      %v1772 = vmul.f32 %v1519, %v1515
      %v1773 = vmul.f32 %v1521, %v1517
      %v1774 = vmul.f32 %v1523, %v1519
      %v1775 = vmul.f32 %v1525, %v1521
      %v1776 = vmul.f32 %v1527, %v1523
      %v1777 = vmul.f32 %v1529, %v1525
      %v1778 = vmul.f32 %v1531, %v1527
      %v1779 = vmul.f32 %v1533, %v1529
      %v1780 = vmul.f32 %v1535, %v1531
      %v1781 = vmul.f32 %v1537, %v1533
      %v1782 = vmul.f32 %v1539, %v1535
      %v1783 = vmul.f32 %v1541, %v1537
      %v1784 = vmul.f32 %v1543, %v1539
      %v1785 = vmul.f32 %v1545, %v1541
      %v1786 = vmul.f32 %v1772, 0.0
      %v1787 = vmul.f32 %v1773, 0.0
      %v1788 = vmul.f32 %v1774, %v1756
      %v1789 = vmul.f32 %v1775, %v1757
      %v1790 = vmul.f32 %v1776, %v1758
      %v1791 = vmul.f32 %v1777, %v1759
      %v1792 = vmul.f32 %v1778, %v1760
      %v1793 = vmul.f32 %v1779, %v1761
      %v1794 = vmul.f32 %v1780, %v1762
      %v1795 = vmul.f32 %v1781, %v1763
      %v1796 = vmul.f32 %v1782, %v1764
      %v1797 = vmul.f32 %v1783, %v1765
      %v1798 = vmul.f32 %v1784, %v1766
      %v1799 = vmul.f32 %v1785, %v1767
      %v1800 = vadd.f32 %v1740, %v1756
      %v1801 = vadd.f32 %v1741, %v1757
      %v1802 = vadd.f32 %v1786, %v1758
      %v1803 = vadd.f32 %v1787, %v1759
      %v1804 = vadd.f32 %v1788, %v1760
      %v1805 = vadd.f32 %v1789, %v1761
      %v1806 = vadd.f32 %v1790, %v1762
      %v1807 = vadd.f32 %v1791, %v1763
      %v1808 = vadd.f32 %v1792, %v1764
      %v1809 = vadd.f32 %v1793, %v1765
      %v1810 = vadd.f32 %v1794, %v1766
      %v1811 = vadd.f32 %v1795, %v1767
      %v1812 = vadd.f32 %v1796, %v1768
      %v1813 = vadd.f32 %v1797, %v1769
      %v1814 = vadd.f32 %v1798, %v1770
      %v1815 = vadd.f32 %v1799, %v1771
      %v1816 = vmul.f32 %v1774, %v1515
      %v1817 = vmul.f32 %v1775, %v1517
      %v1818 = vmul.f32 %v1776, %v1772
      %v1819 = vmul.f32 %v1777, %v1773
      %v1820 = vmul.f32 %v1778, %v1774
      %v1821 = vmul.f32 %v1779, %v1775
      %v1822 = vmul.f32 %v1780, %v1776
      %v1823 = vmul.f32 %v1781, %v1777
      %v1824 = vmul.f32 %v1782, %v1778
      %v1825 = vmul.f32 %v1783, %v1779
      %v1826 = vmul.f32 %v1784, %v1780
      %v1827 = vmul.f32 %v1785, %v1781
      %v1828 = vmul.f32 %v1816, 0.0
      %v1829 = vmul.f32 %v1817, 0.0
      %v1830 = vmul.f32 %v1818, 0.0
      %v1831 = vmul.f32 %v1819, 0.0
      %v1832 = vmul.f32 %v1820, %v1800
      %v1833 = vmul.f32 %v1821, %v1801
      %v1834 = vmul.f32 %v1822, %v1802
      %v1835 = vmul.f32 %v1823, %v1803
      %v1836 = vmul.f32 %v1824, %v1804
      %v1837 = vmul.f32 %v1825, %v1805
      %v1838 = vmul.f32 %v1826, %v1806
      %v1839 = vmul.f32 %v1827, %v1807
      %v1840 = vadd.f32 %v1740, %v1800
      %v1841 = vadd.f32 %v1741, %v1801
      %v1842 = vadd.f32 %v1786, %v1802
      %v1843 = vadd.f32 %v1787, %v1803
      %v1844 = vadd.f32 %v1828, %v1804
      %v1845 = vadd.f32 %v1829, %v1805
      %v1846 = vadd.f32 %v1830, %v1806
      %v1847 = vadd.f32 %v1831, %v1807
      %v1848 = vadd.f32 %v1832, %v1808
      %v1849 = vadd.f32 %v1833, %v1809
      %v1850 = vadd.f32 %v1834, %v1810
      %v1851 = vadd.f32 %v1835, %v1811
      %v1852 = vadd.f32 %v1836, %v1812
      %v1853 = vadd.f32 %v1837, %v1813
      %v1854 = vadd.f32 %v1838, %v1814
      %v1855 = vadd.f32 %v1839, %v1815
      %v1856 = vmul.f32 %v1820, %v1515
      %v1857 = vmul.f32 %v1821, %v1517
      %v1858 = vmul.f32 %v1822, %v1772
      %v1859 = vmul.f32 %v1823, %v1773
      %v1860 = vmul.f32 %v1824, %v1816
      %v1861 = vmul.f32 %v1825, %v1817
      %v1862 = vmul.f32 %v1826, %v1818
      %v1863 = vmul.f32 %v1827, %v1819
      %v1864 = vmul.f32 %v1515, %v1270
      %v1865 = vmul.f32 %v1517, %v1271
      %v1866 = vmul.f32 %v1772, %v1270
      %v1867 = vmul.f32 %v1773, %v1271
      %v1868 = vmul.f32 %v1816, %v1270
      %v1869 = vmul.f32 %v1817, %v1271
      %v1870 = vmul.f32 %v1818, %v1270
      %v1871 = vmul.f32 %v1819, %v1271
      %v1872 = vmul.f32 %v1856, %v1270
      %v1873 = vmul.f32 %v1857, %v1271
      %v1874 = vmul.f32 %v1858, %v1270
      %v1875 = vmul.f32 %v1859, %v1271
      %v1876 = vmul.f32 %v1860, %v1270
      %v1877 = vmul.f32 %v1861, %v1271
      %v1878 = vmul.f32 %v1862, %v1270
      %v1879 = vmul.f32 %v1863, %v1271
      %v1880 = vadd.f32 %v1864, %v1840
      %v1881 = vadd.f32 %v1865, %v1841
      %v1882 = vadd.f32 %v1866, %v1842
      %v1883 = vadd.f32 %v1867, %v1843
      %v1884 = vadd.f32 %v1868, %v1844
      %v1885 = vadd.f32 %v1869, %v1845
      %v1886 = vadd.f32 %v1870, %v1846
      %v1887 = vadd.f32 %v1871, %v1847
      %v1888 = vadd.f32 %v1872, %v1848
      %v1889 = vadd.f32 %v1873, %v1849
      %v1890 = vadd.f32 %v1874, %v1850
      %v1891 = vadd.f32 %v1875, %v1851
      %v1892 = vadd.f32 %v1876, %v1852
      %v1893 = vadd.f32 %v1877, %v1853
      %v1894 = vadd.f32 %v1878, %v1854
      %v1895 = vadd.f32 %v1879, %v1855
      %s1897 = sor.u32 256, 16
      %1898 = vbcast.lane.b32.xlu0 %v1549, %s1897
      %v1899 = vpop.permute.xlu0 %1898
      %s1901 = sor.u32 256, 24
      %1902 = vbcast.lane.b32.xlu0 %v1549, %s1901
      %v1903 = vpop.permute.xlu0 %1902
      %s1905 = sor.u32 256, 16
      %1906 = vbcast.lane.b32.xlu0 %v1560, %s1905
      %v1907 = vpop.permute.xlu0 %1906
      %s1909 = sor.u32 256, 24
      %1910 = vbcast.lane.b32.xlu0 %v1560, %s1909
      %v1911 = vpop.permute.xlu0 %1910
      %s1913 = sor.u32 256, 16
      %1914 = vbcast.lane.b32.xlu0 %v1571, %s1913
      %v1915 = vpop.permute.xlu0 %1914
      %s1917 = sor.u32 256, 24
      %1918 = vbcast.lane.b32.xlu0 %v1571, %s1917
      %v1919 = vpop.permute.xlu0 %1918
      %s1921 = sor.u32 256, 16
      %1922 = vbcast.lane.b32.xlu0 %v1582, %s1921
      %v1923 = vpop.permute.xlu0 %1922
      %s1925 = sor.u32 256, 24
      %1926 = vbcast.lane.b32.xlu0 %v1582, %s1925
      %v1927 = vpop.permute.xlu0 %1926
      %s1929 = sor.u32 256, 16
      %1930 = vbcast.lane.b32.xlu0 %v1593, %s1929
      %v1931 = vpop.permute.xlu0 %1930
      %s1933 = sor.u32 256, 24
      %1934 = vbcast.lane.b32.xlu0 %v1593, %s1933
      %v1935 = vpop.permute.xlu0 %1934
      %s1937 = sor.u32 256, 16
      %1938 = vbcast.lane.b32.xlu0 %v1604, %s1937
      %v1939 = vpop.permute.xlu0 %1938
      %s1941 = sor.u32 256, 24
      %1942 = vbcast.lane.b32.xlu0 %v1604, %s1941
      %v1943 = vpop.permute.xlu0 %1942
      %s1945 = sor.u32 256, 16
      %1946 = vbcast.lane.b32.xlu0 %v1615, %s1945
      %v1947 = vpop.permute.xlu0 %1946
      %s1949 = sor.u32 256, 24
      %1950 = vbcast.lane.b32.xlu0 %v1615, %s1949
      %v1951 = vpop.permute.xlu0 %1950
      %s1953 = sor.u32 256, 16
      %1954 = vbcast.lane.b32.xlu0 %v1626, %s1953
      %v1955 = vpop.permute.xlu0 %1954
      %s1957 = sor.u32 256, 24
      %1958 = vbcast.lane.b32.xlu0 %v1626, %s1957
      %v1959 = vpop.permute.xlu0 %1958
      %v1960 = vmul.f32 %v1899, %v1880
      %v1961 = vmul.f32 %v1903, %v1881
      %v1962 = vmul.f32 %v1907, %v1882
      %v1963 = vmul.f32 %v1911, %v1883
      %v1964 = vmul.f32 %v1915, %v1884
      %v1965 = vmul.f32 %v1919, %v1885
      %v1966 = vmul.f32 %v1923, %v1886
      %v1967 = vmul.f32 %v1927, %v1887
      %v1968 = vmul.f32 %v1931, %v1888
      %v1969 = vmul.f32 %v1935, %v1889
      %v1970 = vmul.f32 %v1939, %v1890
      %v1971 = vmul.f32 %v1943, %v1891
      %v1972 = vmul.f32 %v1947, %v1892
      %v1973 = vmul.f32 %v1951, %v1893
      %v1974 = vmul.f32 %v1955, %v1894
      %v1975 = vmul.f32 %v1959, %v1895
      %v1976 = vadd.f32 %v1960, %v1961
      %v1977 = vrot.slane %v1976, 4
      %v1978 = vadd.f32 %v1976, %v1977
      %v1979 = vrot.slane %v1978, 2
      %v1980 = vadd.f32 %v1978, %v1979
      %v1981 = vrot.slane %v1980, 1
      %v1982 = vadd.f32 %v1980, %v1981
      %v1983 = vadd.f32 %v1962, %v1963
      %v1984 = vrot.slane %v1983, 4
      %v1985 = vadd.f32 %v1983, %v1984
      %v1986 = vrot.slane %v1985, 2
      %v1987 = vadd.f32 %v1985, %v1986
      %v1988 = vrot.slane %v1987, 1
      %v1989 = vadd.f32 %v1987, %v1988
      %v1990 = vadd.f32 %v1964, %v1965
      %v1991 = vrot.slane %v1990, 4
      %v1992 = vadd.f32 %v1990, %v1991
      %v1993 = vrot.slane %v1992, 2
      %v1994 = vadd.f32 %v1992, %v1993
      %v1995 = vrot.slane %v1994, 1
      %v1996 = vadd.f32 %v1994, %v1995
      %v1997 = vadd.f32 %v1966, %v1967
      %v1998 = vrot.slane %v1997, 4
      %v1999 = vadd.f32 %v1997, %v1998
      %v2000 = vrot.slane %v1999, 2
      %v2001 = vadd.f32 %v1999, %v2000
      %v2002 = vrot.slane %v2001, 1
      %v2003 = vadd.f32 %v2001, %v2002
      %v2004 = vadd.f32 %v1968, %v1969
      %v2005 = vrot.slane %v2004, 4
      %v2006 = vadd.f32 %v2004, %v2005
      %v2007 = vrot.slane %v2006, 2
      %v2008 = vadd.f32 %v2006, %v2007
      %v2009 = vrot.slane %v2008, 1
      %v2010 = vadd.f32 %v2008, %v2009
      %v2011 = vadd.f32 %v1970, %v1971
      %v2012 = vrot.slane %v2011, 4
      %v2013 = vadd.f32 %v2011, %v2012
      %v2014 = vrot.slane %v2013, 2
      %v2015 = vadd.f32 %v2013, %v2014
      %v2016 = vrot.slane %v2015, 1
      %v2017 = vadd.f32 %v2015, %v2016
      %v2018 = vadd.f32 %v1972, %v1973
      %v2019 = vrot.slane %v2018, 4
      %v2020 = vadd.f32 %v2018, %v2019
      %v2021 = vrot.slane %v2020, 2
      %v2022 = vadd.f32 %v2020, %v2021
      %v2023 = vrot.slane %v2022, 1
      %v2024 = vadd.f32 %v2022, %v2023
      %v2025 = vadd.f32 %v1974, %v1975
      %v2026 = vrot.slane %v2025, 4
      %v2027 = vadd.f32 %v2025, %v2026
      %v2028 = vrot.slane %v2027, 2
      %v2029 = vadd.f32 %v2027, %v2028
      %v2030 = vrot.slane %v2029, 1
      %v2031 = vadd.f32 %v2029, %v2030
      %v2033 = vcombine.high %v784, %v784
      %v2035 = vunpack.c.l.s4 1966171168
      %v2036 = vunpack.c.0.s8 %v2035
      %v2037 = vlaneseq
      %v2038 = vshrl.u32 %v2037, 7
      %v2039 = vsub.s32 %v2036, %v2038
      %v2040 = vrot.slane %v784, %v2039
      %v2042 = vunpack.c.l.s4 1966171168
      %v2043 = vunpack.c.0.s8 %v2042
      %v2044 = vlaneseq
      %v2045 = vshrl.u32 %v2044, 7
      %v2046 = vsub.s32 %v2043, %v2045
      %v2047 = vrot.slane %v2033, %v2046
      %v2048 = vcombine.high %v2040, %v2040
      %v2049 = vcombine.high %v2047, %v2047
      %v2051 = vunpack.c.l.s4 1966171168
      %v2052 = vunpack.c.0.s8 %v2051
      %v2053 = vlaneseq
      %v2054 = vshrl.u32 %v2053, 7
      %v2055 = vsub.s32 %v2052, %v2054
      %v2056 = vrot.slane %v2040, %v2055
      %v2058 = vunpack.c.l.s4 1966171168
      %v2059 = vunpack.c.0.s8 %v2058
      %v2060 = vlaneseq
      %v2061 = vshrl.u32 %v2060, 7
      %v2062 = vsub.s32 %v2059, %v2061
      %v2063 = vrot.slane %v2047, %v2062
      %v2065 = vunpack.c.l.s4 1966171168
      %v2066 = vunpack.c.0.s8 %v2065
      %v2067 = vlaneseq
      %v2068 = vshrl.u32 %v2067, 7
      %v2069 = vsub.s32 %v2066, %v2068
      %v2070 = vrot.slane %v2048, %v2069
      %v2072 = vunpack.c.l.s4 1966171168
      %v2073 = vunpack.c.0.s8 %v2072
      %v2074 = vlaneseq
      %v2075 = vshrl.u32 %v2074, 7
      %v2076 = vsub.s32 %v2073, %v2075
      %v2077 = vrot.slane %v2049, %v2076
      %v2078 = vcombine.high %v2056, %v2056
      %v2079 = vcombine.high %v2063, %v2063
      %v2080 = vcombine.high %v2070, %v2070
      %v2081 = vcombine.high %v2077, %v2077
      %v2082 = vlaneseq
      %v2083 = vshrl.u32 %v2082, 7
      %v2084 = vsub.s32 0, %v2083
      %v2085 = vrot.slane %v2056, %v2084
      %v2086 = vlaneseq
      %v2087 = vshrl.u32 %v2086, 7
      %v2088 = vsub.s32 0, %v2087
      %v2089 = vrot.slane %v2070, %v2088
      %v2090 = vlaneseq
      %v2091 = vshrl.u32 %v2090, 7
      %v2092 = vsub.s32 0, %v2091
      %v2093 = vrot.slane %v2078, %v2092
      %v2094 = vlaneseq
      %v2095 = vshrl.u32 %v2094, 7
      %v2096 = vsub.s32 0, %v2095
      %v2097 = vrot.slane %v2080, %v2096
      %v2098 = vlaneseq
      %v2099 = vshrl.u32 %v2098, 7
      %v2100 = vsub.s32 0, %v2099
      %v2101 = vrot.slane %v2063, %v2100
      %v2102 = vlaneseq
      %v2103 = vshrl.u32 %v2102, 7
      %v2104 = vsub.s32 0, %v2103
      %v2105 = vrot.slane %v2077, %v2104
      %v2106 = vlaneseq
      %v2107 = vshrl.u32 %v2106, 7
      %v2108 = vsub.s32 0, %v2107
      %v2109 = vrot.slane %v2079, %v2108
      %v2110 = vlaneseq
      %v2111 = vshrl.u32 %v2110, 7
      %v2112 = vsub.s32 0, %v2111
      %v2113 = vrot.slane %v2081, %v2112
      %v2122 = vmul.f32 %v2085, %v790
      %v2123 = vmul.f32 %v2085, %v791
      %v2124 = vmul.f32 %v2089, %v790
      %v2125 = vmul.f32 %v2089, %v791
      %v2126 = vmul.f32 %v2093, %v790
      %v2127 = vmul.f32 %v2093, %v791
      %v2128 = vmul.f32 %v2097, %v790
      %v2129 = vmul.f32 %v2097, %v791
      %v2130 = vmul.f32 %v2101, %v790
      %v2131 = vmul.f32 %v2101, %v791
      %v2132 = vmul.f32 %v2105, %v790
      %v2133 = vmul.f32 %v2105, %v791
      %v2134 = vmul.f32 %v2109, %v790
      %v2135 = vmul.f32 %v2109, %v791
      %v2136 = vmul.f32 %v2113, %v790
      %v2137 = vmul.f32 %v2113, %v791
      %v2138 = vmul.f32 %v2122, 1.442695
      %v2139 = vpow.pop %v2138
      %v2140 = vmul.f32 %v2123, 1.442695
      %v2141 = vpow.pop %v2140
      %v2142 = vmul.f32 %v2124, 1.442695
      %v2143 = vpow.pop %v2142
      %v2144 = vmul.f32 %v2125, 1.442695
      %v2145 = vpow.pop %v2144
      %v2146 = vmul.f32 %v2126, 1.442695
      %v2147 = vpow.pop %v2146
      %v2148 = vmul.f32 %v2127, 1.442695
      %v2149 = vpow.pop %v2148
      %v2150 = vmul.f32 %v2128, 1.442695
      %v2151 = vpow.pop %v2150
      %v2152 = vmul.f32 %v2129, 1.442695
      %v2153 = vpow.pop %v2152
      %v2154 = vmul.f32 %v2130, 1.442695
      %v2155 = vpow.pop %v2154
      %v2156 = vmul.f32 %v2131, 1.442695
      %v2157 = vpow.pop %v2156
      %v2158 = vmul.f32 %v2132, 1.442695
      %v2159 = vpow.pop %v2158
      %v2160 = vmul.f32 %v2133, 1.442695
      %v2161 = vpow.pop %v2160
      %v2162 = vmul.f32 %v2134, 1.442695
      %v2163 = vpow.pop %v2162
      %v2164 = vmul.f32 %v2135, 1.442695
      %v2165 = vpow.pop %v2164
      %v2166 = vmul.f32 %v2136, 1.442695
      %v2167 = vpow.pop %v2166
      %v2168 = vmul.f32 %v2137, 1.442695
      %v2169 = vpow.pop %v2168
      %v2170 = vlaneseq
      %v2171 = vshrl.u32 %v2170, 7
      %v2172 = vsub.s32 0, %v2171
      %v2173 = vrot.slane %v733, %v2172
      %2175 = vbcast.lane.b32.xlu0 %v2173, 256
      %v2176 = vpop.permute.xlu0 %2175
      %s2178 = sor.u32 256, 8
      %2179 = vbcast.lane.b32.xlu0 %v2173, %s2178
      %v2180 = vpop.permute.xlu0 %2179
      %v2181 = vlaneseq
      %v2182 = vshrl.u32 %v2181, 7
      %v2183 = vsub.s32 1, %v2182
      %v2184 = vrot.slane %v733, %v2183
      %2186 = vbcast.lane.b32.xlu0 %v2184, 256
      %v2187 = vpop.permute.xlu0 %2186
      %s2189 = sor.u32 256, 8
      %2190 = vbcast.lane.b32.xlu0 %v2184, %s2189
      %v2191 = vpop.permute.xlu0 %2190
      %v2192 = vlaneseq
      %v2193 = vshrl.u32 %v2192, 7
      %v2194 = vsub.s32 2, %v2193
      %v2195 = vrot.slane %v733, %v2194
      %2197 = vbcast.lane.b32.xlu0 %v2195, 256
      %v2198 = vpop.permute.xlu0 %2197
      %s2200 = sor.u32 256, 8
      %2201 = vbcast.lane.b32.xlu0 %v2195, %s2200
      %v2202 = vpop.permute.xlu0 %2201
      %v2203 = vlaneseq
      %v2204 = vshrl.u32 %v2203, 7
      %v2205 = vsub.s32 3, %v2204
      %v2206 = vrot.slane %v733, %v2205
      %2208 = vbcast.lane.b32.xlu0 %v2206, 256
      %v2209 = vpop.permute.xlu0 %2208
      %s2211 = sor.u32 256, 8
      %2212 = vbcast.lane.b32.xlu0 %v2206, %s2211
      %v2213 = vpop.permute.xlu0 %2212
      %v2214 = vlaneseq
      %v2215 = vshrl.u32 %v2214, 7
      %v2216 = vsub.s32 4, %v2215
      %v2217 = vrot.slane %v733, %v2216
      %2219 = vbcast.lane.b32.xlu0 %v2217, 256
      %v2220 = vpop.permute.xlu0 %2219
      %s2222 = sor.u32 256, 8
      %2223 = vbcast.lane.b32.xlu0 %v2217, %s2222
      %v2224 = vpop.permute.xlu0 %2223
      %v2225 = vlaneseq
      %v2226 = vshrl.u32 %v2225, 7
      %v2227 = vsub.s32 5, %v2226
      %v2228 = vrot.slane %v733, %v2227
      %2230 = vbcast.lane.b32.xlu0 %v2228, 256
      %v2231 = vpop.permute.xlu0 %2230
      %s2233 = sor.u32 256, 8
      %2234 = vbcast.lane.b32.xlu0 %v2228, %s2233
      %v2235 = vpop.permute.xlu0 %2234
      %v2236 = vlaneseq
      %v2237 = vshrl.u32 %v2236, 7
      %v2238 = vsub.s32 6, %v2237
      %v2239 = vrot.slane %v733, %v2238
      %2241 = vbcast.lane.b32.xlu0 %v2239, 256
      %v2242 = vpop.permute.xlu0 %2241
      %s2244 = sor.u32 256, 8
      %2245 = vbcast.lane.b32.xlu0 %v2239, %s2244
      %v2246 = vpop.permute.xlu0 %2245
      %v2247 = vlaneseq
      %v2248 = vshrl.u32 %v2247, 7
      %v2249 = vsub.s32 7, %v2248
      %v2250 = vrot.slane %v733, %v2249
      %2252 = vbcast.lane.b32.xlu0 %v2250, 256
      %v2253 = vpop.permute.xlu0 %2252
      %s2255 = sor.u32 256, 8
      %2256 = vbcast.lane.b32.xlu0 %v2250, %s2255
      %v2257 = vpop.permute.xlu0 %2256
      %v2259 = vcombine.high %v788, %v788
      %v2261 = vunpack.c.l.s4 1966171168
      %v2262 = vunpack.c.0.s8 %v2261
      %v2263 = vlaneseq
      %v2264 = vshrl.u32 %v2263, 7
      %v2265 = vsub.s32 %v2262, %v2264
      %v2266 = vrot.slane %v788, %v2265
      %v2268 = vunpack.c.l.s4 1966171168
      %v2269 = vunpack.c.0.s8 %v2268
      %v2270 = vlaneseq
      %v2271 = vshrl.u32 %v2270, 7
      %v2272 = vsub.s32 %v2269, %v2271
      %v2273 = vrot.slane %v2259, %v2272
      %v2274 = vcombine.high %v2266, %v2266
      %v2275 = vcombine.high %v2273, %v2273
      %v2277 = vunpack.c.l.s4 1966171168
      %v2278 = vunpack.c.0.s8 %v2277
      %v2279 = vlaneseq
      %v2280 = vshrl.u32 %v2279, 7
      %v2281 = vsub.s32 %v2278, %v2280
      %v2282 = vrot.slane %v2266, %v2281
      %v2284 = vunpack.c.l.s4 1966171168
      %v2285 = vunpack.c.0.s8 %v2284
      %v2286 = vlaneseq
      %v2287 = vshrl.u32 %v2286, 7
      %v2288 = vsub.s32 %v2285, %v2287
      %v2289 = vrot.slane %v2273, %v2288
      %v2291 = vunpack.c.l.s4 1966171168
      %v2292 = vunpack.c.0.s8 %v2291
      %v2293 = vlaneseq
      %v2294 = vshrl.u32 %v2293, 7
      %v2295 = vsub.s32 %v2292, %v2294
      %v2296 = vrot.slane %v2274, %v2295
      %v2298 = vunpack.c.l.s4 1966171168
      %v2299 = vunpack.c.0.s8 %v2298
      %v2300 = vlaneseq
      %v2301 = vshrl.u32 %v2300, 7
      %v2302 = vsub.s32 %v2299, %v2301
      %v2303 = vrot.slane %v2275, %v2302
      %v2304 = vcombine.high %v2282, %v2282
      %v2305 = vcombine.high %v2289, %v2289
      %v2306 = vcombine.high %v2296, %v2296
      %v2307 = vcombine.high %v2303, %v2303
      %v2308 = vlaneseq
      %v2309 = vshrl.u32 %v2308, 7
      %v2310 = vsub.s32 0, %v2309
      %v2311 = vrot.slane %v2282, %v2310
      %v2312 = vlaneseq
      %v2313 = vshrl.u32 %v2312, 7
      %v2314 = vsub.s32 0, %v2313
      %v2315 = vrot.slane %v2296, %v2314
      %v2316 = vlaneseq
      %v2317 = vshrl.u32 %v2316, 7
      %v2318 = vsub.s32 0, %v2317
      %v2319 = vrot.slane %v2304, %v2318
      %v2320 = vlaneseq
      %v2321 = vshrl.u32 %v2320, 7
      %v2322 = vsub.s32 0, %v2321
      %v2323 = vrot.slane %v2306, %v2322
      %v2324 = vlaneseq
      %v2325 = vshrl.u32 %v2324, 7
      %v2326 = vsub.s32 0, %v2325
      %v2327 = vrot.slane %v2289, %v2326
      %v2328 = vlaneseq
      %v2329 = vshrl.u32 %v2328, 7
      %v2330 = vsub.s32 0, %v2329
      %v2331 = vrot.slane %v2303, %v2330
      %v2332 = vlaneseq
      %v2333 = vshrl.u32 %v2332, 7
      %v2334 = vsub.s32 0, %v2333
      %v2335 = vrot.slane %v2305, %v2334
      %v2336 = vlaneseq
      %v2337 = vshrl.u32 %v2336, 7
      %v2338 = vsub.s32 0, %v2337
      %v2339 = vrot.slane %v2307, %v2338
      %v2348 = vmul.f32 %v2176, %v2311
      %v2349 = vmul.f32 %v2180, %v2311
      %v2350 = vmul.f32 %v2187, %v2315
      %v2351 = vmul.f32 %v2191, %v2315
      %v2352 = vmul.f32 %v2198, %v2319
      %v2353 = vmul.f32 %v2202, %v2319
      %v2354 = vmul.f32 %v2209, %v2323
      %v2355 = vmul.f32 %v2213, %v2323
      %v2356 = vmul.f32 %v2220, %v2327
      %v2357 = vmul.f32 %v2224, %v2327
      %v2358 = vmul.f32 %v2231, %v2331
      %v2359 = vmul.f32 %v2235, %v2331
      %v2360 = vmul.f32 %v2242, %v2335
      %v2361 = vmul.f32 %v2246, %v2335
      %v2362 = vmul.f32 %v2253, %v2339
      %v2363 = vmul.f32 %v2257, %v2339
      %v2364 = vmul.f32 %v2139, 0.0
      %v2365 = vmul.f32 %v2141, 0.0
      %v2366 = vmul.f32 %v2143, %v2348
      %v2367 = vmul.f32 %v2145, %v2349
      %v2368 = vmul.f32 %v2147, %v2350
      %v2369 = vmul.f32 %v2149, %v2351
      %v2370 = vmul.f32 %v2151, %v2352
      %v2371 = vmul.f32 %v2153, %v2353
      %v2372 = vmul.f32 %v2155, %v2354
      %v2373 = vmul.f32 %v2157, %v2355
      %v2374 = vmul.f32 %v2159, %v2356
      %v2375 = vmul.f32 %v2161, %v2357
      %v2376 = vmul.f32 %v2163, %v2358
      %v2377 = vmul.f32 %v2165, %v2359
      %v2378 = vmul.f32 %v2167, %v2360
      %v2379 = vmul.f32 %v2169, %v2361
      %v2380 = vadd.f32 %v2364, %v2348
      %v2381 = vadd.f32 %v2365, %v2349
      %v2382 = vadd.f32 %v2366, %v2350
      %v2383 = vadd.f32 %v2367, %v2351
      %v2384 = vadd.f32 %v2368, %v2352
      %v2385 = vadd.f32 %v2369, %v2353
      %v2386 = vadd.f32 %v2370, %v2354
      %v2387 = vadd.f32 %v2371, %v2355
      %v2388 = vadd.f32 %v2372, %v2356
      %v2389 = vadd.f32 %v2373, %v2357
      %v2390 = vadd.f32 %v2374, %v2358
      %v2391 = vadd.f32 %v2375, %v2359
      %v2392 = vadd.f32 %v2376, %v2360
      %v2393 = vadd.f32 %v2377, %v2361
      %v2394 = vadd.f32 %v2378, %v2362
      %v2395 = vadd.f32 %v2379, %v2363
      %v2396 = vmul.f32 %v2143, %v2139
      %v2397 = vmul.f32 %v2145, %v2141
      %v2398 = vmul.f32 %v2147, %v2143
      %v2399 = vmul.f32 %v2149, %v2145
      %v2400 = vmul.f32 %v2151, %v2147
      %v2401 = vmul.f32 %v2153, %v2149
      %v2402 = vmul.f32 %v2155, %v2151
      %v2403 = vmul.f32 %v2157, %v2153
      %v2404 = vmul.f32 %v2159, %v2155
      %v2405 = vmul.f32 %v2161, %v2157
      %v2406 = vmul.f32 %v2163, %v2159
      %v2407 = vmul.f32 %v2165, %v2161
      %v2408 = vmul.f32 %v2167, %v2163
      %v2409 = vmul.f32 %v2169, %v2165
      %v2410 = vmul.f32 %v2396, 0.0
      %v2411 = vmul.f32 %v2397, 0.0
      %v2412 = vmul.f32 %v2398, %v2380
      %v2413 = vmul.f32 %v2399, %v2381
      %v2414 = vmul.f32 %v2400, %v2382
      %v2415 = vmul.f32 %v2401, %v2383
      %v2416 = vmul.f32 %v2402, %v2384
      %v2417 = vmul.f32 %v2403, %v2385
      %v2418 = vmul.f32 %v2404, %v2386
      %v2419 = vmul.f32 %v2405, %v2387
      %v2420 = vmul.f32 %v2406, %v2388
      %v2421 = vmul.f32 %v2407, %v2389
      %v2422 = vmul.f32 %v2408, %v2390
      %v2423 = vmul.f32 %v2409, %v2391
      %v2424 = vadd.f32 %v2364, %v2380
      %v2425 = vadd.f32 %v2365, %v2381
      %v2426 = vadd.f32 %v2410, %v2382
      %v2427 = vadd.f32 %v2411, %v2383
      %v2428 = vadd.f32 %v2412, %v2384
      %v2429 = vadd.f32 %v2413, %v2385
      %v2430 = vadd.f32 %v2414, %v2386
      %v2431 = vadd.f32 %v2415, %v2387
      %v2432 = vadd.f32 %v2416, %v2388
      %v2433 = vadd.f32 %v2417, %v2389
      %v2434 = vadd.f32 %v2418, %v2390
      %v2435 = vadd.f32 %v2419, %v2391
      %v2436 = vadd.f32 %v2420, %v2392
      %v2437 = vadd.f32 %v2421, %v2393
      %v2438 = vadd.f32 %v2422, %v2394
      %v2439 = vadd.f32 %v2423, %v2395
      %v2440 = vmul.f32 %v2398, %v2139
      %v2441 = vmul.f32 %v2399, %v2141
      %v2442 = vmul.f32 %v2400, %v2396
      %v2443 = vmul.f32 %v2401, %v2397
      %v2444 = vmul.f32 %v2402, %v2398
      %v2445 = vmul.f32 %v2403, %v2399
      %v2446 = vmul.f32 %v2404, %v2400
      %v2447 = vmul.f32 %v2405, %v2401
      %v2448 = vmul.f32 %v2406, %v2402
      %v2449 = vmul.f32 %v2407, %v2403
      %v2450 = vmul.f32 %v2408, %v2404
      %v2451 = vmul.f32 %v2409, %v2405
      %v2452 = vmul.f32 %v2440, 0.0
      %v2453 = vmul.f32 %v2441, 0.0
      %v2454 = vmul.f32 %v2442, 0.0
      %v2455 = vmul.f32 %v2443, 0.0
      %v2456 = vmul.f32 %v2444, %v2424
      %v2457 = vmul.f32 %v2445, %v2425
      %v2458 = vmul.f32 %v2446, %v2426
      %v2459 = vmul.f32 %v2447, %v2427
      %v2460 = vmul.f32 %v2448, %v2428
      %v2461 = vmul.f32 %v2449, %v2429
      %v2462 = vmul.f32 %v2450, %v2430
      %v2463 = vmul.f32 %v2451, %v2431
      %v2464 = vadd.f32 %v2364, %v2424
      %v2465 = vadd.f32 %v2365, %v2425
      %v2466 = vadd.f32 %v2410, %v2426
      %v2467 = vadd.f32 %v2411, %v2427
      %v2468 = vadd.f32 %v2452, %v2428
      %v2469 = vadd.f32 %v2453, %v2429
      %v2470 = vadd.f32 %v2454, %v2430
      %v2471 = vadd.f32 %v2455, %v2431
      %v2472 = vadd.f32 %v2456, %v2432
      %v2473 = vadd.f32 %v2457, %v2433
      %v2474 = vadd.f32 %v2458, %v2434
      %v2475 = vadd.f32 %v2459, %v2435
      %v2476 = vadd.f32 %v2460, %v2436
      %v2477 = vadd.f32 %v2461, %v2437
      %v2478 = vadd.f32 %v2462, %v2438
      %v2479 = vadd.f32 %v2463, %v2439
      %v2480 = vmul.f32 %v2444, %v2139
      %v2481 = vmul.f32 %v2445, %v2141
      %v2482 = vmul.f32 %v2446, %v2396
      %v2483 = vmul.f32 %v2447, %v2397
      %v2484 = vmul.f32 %v2448, %v2440
      %v2485 = vmul.f32 %v2449, %v2441
      %v2486 = vmul.f32 %v2450, %v2442
      %v2487 = vmul.f32 %v2451, %v2443
      %v2488 = vmul.f32 %v2139, %v1894
      %v2489 = vmul.f32 %v2141, %v1895
      %v2490 = vmul.f32 %v2396, %v1894
      %v2491 = vmul.f32 %v2397, %v1895
      %v2492 = vmul.f32 %v2440, %v1894
      %v2493 = vmul.f32 %v2441, %v1895
      %v2494 = vmul.f32 %v2442, %v1894
      %v2495 = vmul.f32 %v2443, %v1895
      %v2496 = vmul.f32 %v2480, %v1894
      %v2497 = vmul.f32 %v2481, %v1895
      %v2498 = vmul.f32 %v2482, %v1894
      %v2499 = vmul.f32 %v2483, %v1895
      %v2500 = vmul.f32 %v2484, %v1894
      %v2501 = vmul.f32 %v2485, %v1895
      %v2502 = vmul.f32 %v2486, %v1894
      %v2503 = vmul.f32 %v2487, %v1895
      %v2504 = vadd.f32 %v2488, %v2464
      %v2505 = vadd.f32 %v2489, %v2465
      %v2506 = vadd.f32 %v2490, %v2466
      %v2507 = vadd.f32 %v2491, %v2467
      %v2508 = vadd.f32 %v2492, %v2468
      %v2509 = vadd.f32 %v2493, %v2469
      %v2510 = vadd.f32 %v2494, %v2470
      %v2511 = vadd.f32 %v2495, %v2471
      %v2512 = vadd.f32 %v2496, %v2472
      %v2513 = vadd.f32 %v2497, %v2473
      %v2514 = vadd.f32 %v2498, %v2474
      %v2515 = vadd.f32 %v2499, %v2475
      %v2516 = vadd.f32 %v2500, %v2476
      %v2517 = vadd.f32 %v2501, %v2477
      %v2518 = vadd.f32 %v2502, %v2478
      %v2519 = vadd.f32 %v2503, %v2479
      %s2521 = sor.u32 256, 16
      %2522 = vbcast.lane.b32.xlu0 %v2173, %s2521
      %v2523 = vpop.permute.xlu0 %2522
      %s2525 = sor.u32 256, 24
      %2526 = vbcast.lane.b32.xlu0 %v2173, %s2525
      %v2527 = vpop.permute.xlu0 %2526
      %s2529 = sor.u32 256, 16
      %2530 = vbcast.lane.b32.xlu0 %v2184, %s2529
      %v2531 = vpop.permute.xlu0 %2530
      %s2533 = sor.u32 256, 24
      %2534 = vbcast.lane.b32.xlu0 %v2184, %s2533
      %v2535 = vpop.permute.xlu0 %2534
      %s2537 = sor.u32 256, 16
      %2538 = vbcast.lane.b32.xlu0 %v2195, %s2537
      %v2539 = vpop.permute.xlu0 %2538
      %s2541 = sor.u32 256, 24
      %2542 = vbcast.lane.b32.xlu0 %v2195, %s2541
      %v2543 = vpop.permute.xlu0 %2542
      %s2545 = sor.u32 256, 16
      %2546 = vbcast.lane.b32.xlu0 %v2206, %s2545
      %v2547 = vpop.permute.xlu0 %2546
      %s2549 = sor.u32 256, 24
      %2550 = vbcast.lane.b32.xlu0 %v2206, %s2549
      %v2551 = vpop.permute.xlu0 %2550
      %s2553 = sor.u32 256, 16
      %2554 = vbcast.lane.b32.xlu0 %v2217, %s2553
      %v2555 = vpop.permute.xlu0 %2554
      %s2557 = sor.u32 256, 24
      %2558 = vbcast.lane.b32.xlu0 %v2217, %s2557
      %v2559 = vpop.permute.xlu0 %2558
      %s2561 = sor.u32 256, 16
      %2562 = vbcast.lane.b32.xlu0 %v2228, %s2561
      %v2563 = vpop.permute.xlu0 %2562
      %s2565 = sor.u32 256, 24
      %2566 = vbcast.lane.b32.xlu0 %v2228, %s2565
      %v2567 = vpop.permute.xlu0 %2566
      %s2569 = sor.u32 256, 16
      %2570 = vbcast.lane.b32.xlu0 %v2239, %s2569
      %v2571 = vpop.permute.xlu0 %2570
      %s2573 = sor.u32 256, 24
      %2574 = vbcast.lane.b32.xlu0 %v2239, %s2573
      %v2575 = vpop.permute.xlu0 %2574
      %s2577 = sor.u32 256, 16
      %2578 = vbcast.lane.b32.xlu0 %v2250, %s2577
      %v2579 = vpop.permute.xlu0 %2578
      %s2581 = sor.u32 256, 24
      %2582 = vbcast.lane.b32.xlu0 %v2250, %s2581
      %v2583 = vpop.permute.xlu0 %2582
      %v2584 = vmul.f32 %v2523, %v2504
      %v2585 = vmul.f32 %v2527, %v2505
      %v2586 = vmul.f32 %v2531, %v2506
      %v2587 = vmul.f32 %v2535, %v2507
      %v2588 = vmul.f32 %v2539, %v2508
      %v2589 = vmul.f32 %v2543, %v2509
      %v2590 = vmul.f32 %v2547, %v2510
      %v2591 = vmul.f32 %v2551, %v2511
      %v2592 = vmul.f32 %v2555, %v2512
      %v2593 = vmul.f32 %v2559, %v2513
      %v2594 = vmul.f32 %v2563, %v2514
      %v2595 = vmul.f32 %v2567, %v2515
      %v2596 = vmul.f32 %v2571, %v2516
      %v2597 = vmul.f32 %v2575, %v2517
      %v2598 = vmul.f32 %v2579, %v2518
      %v2599 = vmul.f32 %v2583, %v2519
      %v2600 = vadd.f32 %v2584, %v2585
      %v2601 = vrot.slane %v2600, 4
      %v2602 = vadd.f32 %v2600, %v2601
      %v2603 = vrot.slane %v2602, 2
      %v2604 = vadd.f32 %v2602, %v2603
      %v2605 = vrot.slane %v2604, 1
      %v2606 = vadd.f32 %v2604, %v2605
      %v2607 = vadd.f32 %v2586, %v2587
      %v2608 = vrot.slane %v2607, 4
      %v2609 = vadd.f32 %v2607, %v2608
      %v2610 = vrot.slane %v2609, 2
      %v2611 = vadd.f32 %v2609, %v2610
      %v2612 = vrot.slane %v2611, 1
      %v2613 = vadd.f32 %v2611, %v2612
      %v2614 = vadd.f32 %v2588, %v2589
      %v2615 = vrot.slane %v2614, 4
      %v2616 = vadd.f32 %v2614, %v2615
      %v2617 = vrot.slane %v2616, 2
      %v2618 = vadd.f32 %v2616, %v2617
      %v2619 = vrot.slane %v2618, 1
      %v2620 = vadd.f32 %v2618, %v2619
      %v2621 = vadd.f32 %v2590, %v2591
      %v2622 = vrot.slane %v2621, 4
      %v2623 = vadd.f32 %v2621, %v2622
      %v2624 = vrot.slane %v2623, 2
      %v2625 = vadd.f32 %v2623, %v2624
      %v2626 = vrot.slane %v2625, 1
      %v2627 = vadd.f32 %v2625, %v2626
      %v2628 = vadd.f32 %v2592, %v2593
      %v2629 = vrot.slane %v2628, 4
      %v2630 = vadd.f32 %v2628, %v2629
      %v2631 = vrot.slane %v2630, 2
      %v2632 = vadd.f32 %v2630, %v2631
      %v2633 = vrot.slane %v2632, 1
      %v2634 = vadd.f32 %v2632, %v2633
      %v2635 = vadd.f32 %v2594, %v2595
      %v2636 = vrot.slane %v2635, 4
      %v2637 = vadd.f32 %v2635, %v2636
      %v2638 = vrot.slane %v2637, 2
      %v2639 = vadd.f32 %v2637, %v2638
      %v2640 = vrot.slane %v2639, 1
      %v2641 = vadd.f32 %v2639, %v2640
      %v2642 = vadd.f32 %v2596, %v2597
      %v2643 = vrot.slane %v2642, 4
      %v2644 = vadd.f32 %v2642, %v2643
      %v2645 = vrot.slane %v2644, 2
      %v2646 = vadd.f32 %v2644, %v2645
      %v2647 = vrot.slane %v2646, 1
      %v2648 = vadd.f32 %v2646, %v2647
      %v2649 = vadd.f32 %v2598, %v2599
      %v2650 = vrot.slane %v2649, 4
      %v2651 = vadd.f32 %v2649, %v2650
      %v2652 = vrot.slane %v2651, 2
      %v2653 = vadd.f32 %v2651, %v2652
      %v2654 = vrot.slane %v2653, 1
      %v2655 = vadd.f32 %v2653, %v2654
      %v2657 = vcombine.high %v785, %v785
      %v2659 = vunpack.c.l.s4 1966171168
      %v2660 = vunpack.c.0.s8 %v2659
      %v2661 = vlaneseq
      %v2662 = vshrl.u32 %v2661, 7
      %v2663 = vsub.s32 %v2660, %v2662
      %v2664 = vrot.slane %v785, %v2663
      %v2666 = vunpack.c.l.s4 1966171168
      %v2667 = vunpack.c.0.s8 %v2666
      %v2668 = vlaneseq
      %v2669 = vshrl.u32 %v2668, 7
      %v2670 = vsub.s32 %v2667, %v2669
      %v2671 = vrot.slane %v2657, %v2670
      %v2672 = vcombine.high %v2664, %v2664
      %v2673 = vcombine.high %v2671, %v2671
      %v2675 = vunpack.c.l.s4 1966171168
      %v2676 = vunpack.c.0.s8 %v2675
      %v2677 = vlaneseq
      %v2678 = vshrl.u32 %v2677, 7
      %v2679 = vsub.s32 %v2676, %v2678
      %v2680 = vrot.slane %v2664, %v2679
      %v2682 = vunpack.c.l.s4 1966171168
      %v2683 = vunpack.c.0.s8 %v2682
      %v2684 = vlaneseq
      %v2685 = vshrl.u32 %v2684, 7
      %v2686 = vsub.s32 %v2683, %v2685
      %v2687 = vrot.slane %v2671, %v2686
      %v2689 = vunpack.c.l.s4 1966171168
      %v2690 = vunpack.c.0.s8 %v2689
      %v2691 = vlaneseq
      %v2692 = vshrl.u32 %v2691, 7
      %v2693 = vsub.s32 %v2690, %v2692
      %v2694 = vrot.slane %v2672, %v2693
      %v2696 = vunpack.c.l.s4 1966171168
      %v2697 = vunpack.c.0.s8 %v2696
      %v2698 = vlaneseq
      %v2699 = vshrl.u32 %v2698, 7
      %v2700 = vsub.s32 %v2697, %v2699
      %v2701 = vrot.slane %v2673, %v2700
      %v2702 = vcombine.high %v2680, %v2680
      %v2703 = vcombine.high %v2687, %v2687
      %v2704 = vcombine.high %v2694, %v2694
      %v2705 = vcombine.high %v2701, %v2701
      %v2706 = vlaneseq
      %v2707 = vshrl.u32 %v2706, 7
      %v2708 = vsub.s32 0, %v2707
      %v2709 = vrot.slane %v2680, %v2708
      %v2710 = vlaneseq
      %v2711 = vshrl.u32 %v2710, 7
      %v2712 = vsub.s32 0, %v2711
      %v2713 = vrot.slane %v2694, %v2712
      %v2714 = vlaneseq
      %v2715 = vshrl.u32 %v2714, 7
      %v2716 = vsub.s32 0, %v2715
      %v2717 = vrot.slane %v2702, %v2716
      %v2718 = vlaneseq
      %v2719 = vshrl.u32 %v2718, 7
      %v2720 = vsub.s32 0, %v2719
      %v2721 = vrot.slane %v2704, %v2720
      %v2722 = vlaneseq
      %v2723 = vshrl.u32 %v2722, 7
      %v2724 = vsub.s32 0, %v2723
      %v2725 = vrot.slane %v2687, %v2724
      %v2726 = vlaneseq
      %v2727 = vshrl.u32 %v2726, 7
      %v2728 = vsub.s32 0, %v2727
      %v2729 = vrot.slane %v2701, %v2728
      %v2730 = vlaneseq
      %v2731 = vshrl.u32 %v2730, 7
      %v2732 = vsub.s32 0, %v2731
      %v2733 = vrot.slane %v2703, %v2732
      %v2734 = vlaneseq
      %v2735 = vshrl.u32 %v2734, 7
      %v2736 = vsub.s32 0, %v2735
      %v2737 = vrot.slane %v2705, %v2736
      %v2746 = vmul.f32 %v2709, %v790
      %v2747 = vmul.f32 %v2709, %v791
      %v2748 = vmul.f32 %v2713, %v790
      %v2749 = vmul.f32 %v2713, %v791
      %v2750 = vmul.f32 %v2717, %v790
      %v2751 = vmul.f32 %v2717, %v791
      %v2752 = vmul.f32 %v2721, %v790
      %v2753 = vmul.f32 %v2721, %v791
      %v2754 = vmul.f32 %v2725, %v790
      %v2755 = vmul.f32 %v2725, %v791
      %v2756 = vmul.f32 %v2729, %v790
      %v2757 = vmul.f32 %v2729, %v791
      %v2758 = vmul.f32 %v2733, %v790
      %v2759 = vmul.f32 %v2733, %v791
      %v2760 = vmul.f32 %v2737, %v790
      %v2761 = vmul.f32 %v2737, %v791
      %v2762 = vmul.f32 %v2746, 1.442695
      %v2763 = vpow.pop %v2762
      %v2764 = vmul.f32 %v2747, 1.442695
      %v2765 = vpow.pop %v2764
      %v2766 = vmul.f32 %v2748, 1.442695
      %v2767 = vpow.pop %v2766
      %v2768 = vmul.f32 %v2749, 1.442695
      %v2769 = vpow.pop %v2768
      %v2770 = vmul.f32 %v2750, 1.442695
      %v2771 = vpow.pop %v2770
      %v2772 = vmul.f32 %v2751, 1.442695
      %v2773 = vpow.pop %v2772
      %v2774 = vmul.f32 %v2752, 1.442695
      %v2775 = vpow.pop %v2774
      %v2776 = vmul.f32 %v2753, 1.442695
      %v2777 = vpow.pop %v2776
      %v2778 = vmul.f32 %v2754, 1.442695
      %v2779 = vpow.pop %v2778
      %v2780 = vmul.f32 %v2755, 1.442695
      %v2781 = vpow.pop %v2780
      %v2782 = vmul.f32 %v2756, 1.442695
      %v2783 = vpow.pop %v2782
      %v2784 = vmul.f32 %v2757, 1.442695
      %v2785 = vpow.pop %v2784
      %v2786 = vmul.f32 %v2758, 1.442695
      %v2787 = vpow.pop %v2786
      %v2788 = vmul.f32 %v2759, 1.442695
      %v2789 = vpow.pop %v2788
      %v2790 = vmul.f32 %v2760, 1.442695
      %v2791 = vpow.pop %v2790
      %v2792 = vmul.f32 %v2761, 1.442695
      %v2793 = vpow.pop %v2792
      %v2794 = vlaneseq
      %v2795 = vshrl.u32 %v2794, 7
      %v2796 = vsub.s32 0, %v2795
      %v2797 = vrot.slane %v737, %v2796
      %2799 = vbcast.lane.b32.xlu0 %v2797, 256
      %v2800 = vpop.permute.xlu0 %2799
      %s2802 = sor.u32 256, 8
      %2803 = vbcast.lane.b32.xlu0 %v2797, %s2802
      %v2804 = vpop.permute.xlu0 %2803
      %v2805 = vlaneseq
      %v2806 = vshrl.u32 %v2805, 7
      %v2807 = vsub.s32 1, %v2806
      %v2808 = vrot.slane %v737, %v2807
      %2810 = vbcast.lane.b32.xlu0 %v2808, 256
      %v2811 = vpop.permute.xlu0 %2810
      %s2813 = sor.u32 256, 8
      %2814 = vbcast.lane.b32.xlu0 %v2808, %s2813
      %v2815 = vpop.permute.xlu0 %2814
      %v2816 = vlaneseq
      %v2817 = vshrl.u32 %v2816, 7
      %v2818 = vsub.s32 2, %v2817
      %v2819 = vrot.slane %v737, %v2818
      %2821 = vbcast.lane.b32.xlu0 %v2819, 256
      %v2822 = vpop.permute.xlu0 %2821
      %s2824 = sor.u32 256, 8
      %2825 = vbcast.lane.b32.xlu0 %v2819, %s2824
      %v2826 = vpop.permute.xlu0 %2825
      %v2827 = vlaneseq
      %v2828 = vshrl.u32 %v2827, 7
      %v2829 = vsub.s32 3, %v2828
      %v2830 = vrot.slane %v737, %v2829
      %2832 = vbcast.lane.b32.xlu0 %v2830, 256
      %v2833 = vpop.permute.xlu0 %2832
      %s2835 = sor.u32 256, 8
      %2836 = vbcast.lane.b32.xlu0 %v2830, %s2835
      %v2837 = vpop.permute.xlu0 %2836
      %v2838 = vlaneseq
      %v2839 = vshrl.u32 %v2838, 7
      %v2840 = vsub.s32 4, %v2839
      %v2841 = vrot.slane %v737, %v2840
      %2843 = vbcast.lane.b32.xlu0 %v2841, 256
      %v2844 = vpop.permute.xlu0 %2843
      %s2846 = sor.u32 256, 8
      %2847 = vbcast.lane.b32.xlu0 %v2841, %s2846
      %v2848 = vpop.permute.xlu0 %2847
      %v2849 = vlaneseq
      %v2850 = vshrl.u32 %v2849, 7
      %v2851 = vsub.s32 5, %v2850
      %v2852 = vrot.slane %v737, %v2851
      %2854 = vbcast.lane.b32.xlu0 %v2852, 256
      %v2855 = vpop.permute.xlu0 %2854
      %s2857 = sor.u32 256, 8
      %2858 = vbcast.lane.b32.xlu0 %v2852, %s2857
      %v2859 = vpop.permute.xlu0 %2858
      %v2860 = vlaneseq
      %v2861 = vshrl.u32 %v2860, 7
      %v2862 = vsub.s32 6, %v2861
      %v2863 = vrot.slane %v737, %v2862
      %2865 = vbcast.lane.b32.xlu0 %v2863, 256
      %v2866 = vpop.permute.xlu0 %2865
      %s2868 = sor.u32 256, 8
      %2869 = vbcast.lane.b32.xlu0 %v2863, %s2868
      %v2870 = vpop.permute.xlu0 %2869
      %v2871 = vlaneseq
      %v2872 = vshrl.u32 %v2871, 7
      %v2873 = vsub.s32 7, %v2872
      %v2874 = vrot.slane %v737, %v2873
      %2876 = vbcast.lane.b32.xlu0 %v2874, 256
      %v2877 = vpop.permute.xlu0 %2876
      %s2879 = sor.u32 256, 8
      %2880 = vbcast.lane.b32.xlu0 %v2874, %s2879
      %v2881 = vpop.permute.xlu0 %2880
      %v2883 = vcombine.high %v789, %v789
      %v2885 = vunpack.c.l.s4 1966171168
      %v2886 = vunpack.c.0.s8 %v2885
      %v2887 = vlaneseq
      %v2888 = vshrl.u32 %v2887, 7
      %v2889 = vsub.s32 %v2886, %v2888
      %v2890 = vrot.slane %v789, %v2889
      %v2892 = vunpack.c.l.s4 1966171168
      %v2893 = vunpack.c.0.s8 %v2892
      %v2894 = vlaneseq
      %v2895 = vshrl.u32 %v2894, 7
      %v2896 = vsub.s32 %v2893, %v2895
      %v2897 = vrot.slane %v2883, %v2896
      %v2898 = vcombine.high %v2890, %v2890
      %v2899 = vcombine.high %v2897, %v2897
      %v2901 = vunpack.c.l.s4 1966171168
      %v2902 = vunpack.c.0.s8 %v2901
      %v2903 = vlaneseq
      %v2904 = vshrl.u32 %v2903, 7
      %v2905 = vsub.s32 %v2902, %v2904
      %v2906 = vrot.slane %v2890, %v2905
      %v2908 = vunpack.c.l.s4 1966171168
      %v2909 = vunpack.c.0.s8 %v2908
      %v2910 = vlaneseq
      %v2911 = vshrl.u32 %v2910, 7
      %v2912 = vsub.s32 %v2909, %v2911
      %v2913 = vrot.slane %v2897, %v2912
      %v2915 = vunpack.c.l.s4 1966171168
      %v2916 = vunpack.c.0.s8 %v2915
      %v2917 = vlaneseq
      %v2918 = vshrl.u32 %v2917, 7
      %v2919 = vsub.s32 %v2916, %v2918
      %v2920 = vrot.slane %v2898, %v2919
      %v2922 = vunpack.c.l.s4 1966171168
      %v2923 = vunpack.c.0.s8 %v2922
      %v2924 = vlaneseq
      %v2925 = vshrl.u32 %v2924, 7
      %v2926 = vsub.s32 %v2923, %v2925
      %v2927 = vrot.slane %v2899, %v2926
      %v2928 = vcombine.high %v2906, %v2906
      %v2929 = vcombine.high %v2913, %v2913
      %v2930 = vcombine.high %v2920, %v2920
      %v2931 = vcombine.high %v2927, %v2927
      %v2932 = vlaneseq
      %v2933 = vshrl.u32 %v2932, 7
      %v2934 = vsub.s32 0, %v2933
      %v2935 = vrot.slane %v2906, %v2934
      %v2936 = vlaneseq
      %v2937 = vshrl.u32 %v2936, 7
      %v2938 = vsub.s32 0, %v2937
      %v2939 = vrot.slane %v2920, %v2938
      %v2940 = vlaneseq
      %v2941 = vshrl.u32 %v2940, 7
      %v2942 = vsub.s32 0, %v2941
      %v2943 = vrot.slane %v2928, %v2942
      %v2944 = vlaneseq
      %v2945 = vshrl.u32 %v2944, 7
      %v2946 = vsub.s32 0, %v2945
      %v2947 = vrot.slane %v2930, %v2946
      %v2948 = vlaneseq
      %v2949 = vshrl.u32 %v2948, 7
      %v2950 = vsub.s32 0, %v2949
      %v2951 = vrot.slane %v2913, %v2950
      %v2952 = vlaneseq
      %v2953 = vshrl.u32 %v2952, 7
      %v2954 = vsub.s32 0, %v2953
      %v2955 = vrot.slane %v2927, %v2954
      %v2956 = vlaneseq
      %v2957 = vshrl.u32 %v2956, 7
      %v2958 = vsub.s32 0, %v2957
      %v2959 = vrot.slane %v2929, %v2958
      %v2960 = vlaneseq
      %v2961 = vshrl.u32 %v2960, 7
      %v2962 = vsub.s32 0, %v2961
      %v2963 = vrot.slane %v2931, %v2962
      %v2972 = vmul.f32 %v2800, %v2935
      %v2973 = vmul.f32 %v2804, %v2935
      %v2974 = vmul.f32 %v2811, %v2939
      %v2975 = vmul.f32 %v2815, %v2939
      %v2976 = vmul.f32 %v2822, %v2943
      %v2977 = vmul.f32 %v2826, %v2943
      %v2978 = vmul.f32 %v2833, %v2947
      %v2979 = vmul.f32 %v2837, %v2947
      %v2980 = vmul.f32 %v2844, %v2951
      %v2981 = vmul.f32 %v2848, %v2951
      %v2982 = vmul.f32 %v2855, %v2955
      %v2983 = vmul.f32 %v2859, %v2955
      %v2984 = vmul.f32 %v2866, %v2959
      %v2985 = vmul.f32 %v2870, %v2959
      %v2986 = vmul.f32 %v2877, %v2963
      %v2987 = vmul.f32 %v2881, %v2963
      %v2988 = vmul.f32 %v2763, 0.0
      %v2989 = vmul.f32 %v2765, 0.0
      %v2990 = vmul.f32 %v2767, %v2972
      %v2991 = vmul.f32 %v2769, %v2973
      %v2992 = vmul.f32 %v2771, %v2974
      %v2993 = vmul.f32 %v2773, %v2975
      %v2994 = vmul.f32 %v2775, %v2976
      %v2995 = vmul.f32 %v2777, %v2977
      %v2996 = vmul.f32 %v2779, %v2978
      %v2997 = vmul.f32 %v2781, %v2979
      %v2998 = vmul.f32 %v2783, %v2980
      %v2999 = vmul.f32 %v2785, %v2981
      %v3000 = vmul.f32 %v2787, %v2982
      %v3001 = vmul.f32 %v2789, %v2983
      %v3002 = vmul.f32 %v2791, %v2984
      %v3003 = vmul.f32 %v2793, %v2985
      %v3004 = vadd.f32 %v2988, %v2972
      %v3005 = vadd.f32 %v2989, %v2973
      %v3006 = vadd.f32 %v2990, %v2974
      %v3007 = vadd.f32 %v2991, %v2975
      %v3008 = vadd.f32 %v2992, %v2976
      %v3009 = vadd.f32 %v2993, %v2977
      %v3010 = vadd.f32 %v2994, %v2978
      %v3011 = vadd.f32 %v2995, %v2979
      %v3012 = vadd.f32 %v2996, %v2980
      %v3013 = vadd.f32 %v2997, %v2981
      %v3014 = vadd.f32 %v2998, %v2982
      %v3015 = vadd.f32 %v2999, %v2983
      %v3016 = vadd.f32 %v3000, %v2984
      %v3017 = vadd.f32 %v3001, %v2985
      %v3018 = vadd.f32 %v3002, %v2986
      %v3019 = vadd.f32 %v3003, %v2987
      %v3020 = vmul.f32 %v2767, %v2763
      %v3021 = vmul.f32 %v2769, %v2765
      %v3022 = vmul.f32 %v2771, %v2767
      %v3023 = vmul.f32 %v2773, %v2769
      %v3024 = vmul.f32 %v2775, %v2771
      %v3025 = vmul.f32 %v2777, %v2773
      %v3026 = vmul.f32 %v2779, %v2775
      %v3027 = vmul.f32 %v2781, %v2777
      %v3028 = vmul.f32 %v2783, %v2779
      %v3029 = vmul.f32 %v2785, %v2781
      %v3030 = vmul.f32 %v2787, %v2783
      %v3031 = vmul.f32 %v2789, %v2785
      %v3032 = vmul.f32 %v2791, %v2787
      %v3033 = vmul.f32 %v2793, %v2789
      %v3034 = vmul.f32 %v3020, 0.0
      %v3035 = vmul.f32 %v3021, 0.0
      %v3036 = vmul.f32 %v3022, %v3004
      %v3037 = vmul.f32 %v3023, %v3005
      %v3038 = vmul.f32 %v3024, %v3006
      %v3039 = vmul.f32 %v3025, %v3007
      %v3040 = vmul.f32 %v3026, %v3008
      %v3041 = vmul.f32 %v3027, %v3009
      %v3042 = vmul.f32 %v3028, %v3010
      %v3043 = vmul.f32 %v3029, %v3011
      %v3044 = vmul.f32 %v3030, %v3012
      %v3045 = vmul.f32 %v3031, %v3013
      %v3046 = vmul.f32 %v3032, %v3014
      %v3047 = vmul.f32 %v3033, %v3015
      %v3048 = vadd.f32 %v2988, %v3004
      %v3049 = vadd.f32 %v2989, %v3005
      %v3050 = vadd.f32 %v3034, %v3006
      %v3051 = vadd.f32 %v3035, %v3007
      %v3052 = vadd.f32 %v3036, %v3008
      %v3053 = vadd.f32 %v3037, %v3009
      %v3054 = vadd.f32 %v3038, %v3010
      %v3055 = vadd.f32 %v3039, %v3011
      %v3056 = vadd.f32 %v3040, %v3012
      %v3057 = vadd.f32 %v3041, %v3013
      %v3058 = vadd.f32 %v3042, %v3014
      %v3059 = vadd.f32 %v3043, %v3015
      %v3060 = vadd.f32 %v3044, %v3016
      %v3061 = vadd.f32 %v3045, %v3017
      %v3062 = vadd.f32 %v3046, %v3018
      %v3063 = vadd.f32 %v3047, %v3019
      %v3064 = vmul.f32 %v3022, %v2763
      %v3065 = vmul.f32 %v3023, %v2765
      %v3066 = vmul.f32 %v3024, %v3020
      %v3067 = vmul.f32 %v3025, %v3021
      %v3068 = vmul.f32 %v3026, %v3022
      %v3069 = vmul.f32 %v3027, %v3023
      %v3070 = vmul.f32 %v3028, %v3024
      %v3071 = vmul.f32 %v3029, %v3025
      %v3072 = vmul.f32 %v3030, %v3026
      %v3073 = vmul.f32 %v3031, %v3027
      %v3074 = vmul.f32 %v3032, %v3028
      %v3075 = vmul.f32 %v3033, %v3029
      %v3076 = vmul.f32 %v3064, 0.0
      %v3077 = vmul.f32 %v3065, 0.0
      %v3078 = vmul.f32 %v3066, 0.0
      %v3079 = vmul.f32 %v3067, 0.0
      %v3080 = vmul.f32 %v3068, %v3048
      %v3081 = vmul.f32 %v3069, %v3049
      %v3082 = vmul.f32 %v3070, %v3050
      %v3083 = vmul.f32 %v3071, %v3051
      %v3084 = vmul.f32 %v3072, %v3052
      %v3085 = vmul.f32 %v3073, %v3053
      %v3086 = vmul.f32 %v3074, %v3054
      %v3087 = vmul.f32 %v3075, %v3055
      %v3088 = vadd.f32 %v2988, %v3048
      %v3089 = vadd.f32 %v2989, %v3049
      %v3090 = vadd.f32 %v3034, %v3050
      %v3091 = vadd.f32 %v3035, %v3051
      %v3092 = vadd.f32 %v3076, %v3052
      %v3093 = vadd.f32 %v3077, %v3053
      %v3094 = vadd.f32 %v3078, %v3054
      %v3095 = vadd.f32 %v3079, %v3055
      %v3096 = vadd.f32 %v3080, %v3056
      %v3097 = vadd.f32 %v3081, %v3057
      %v3098 = vadd.f32 %v3082, %v3058
      %v3099 = vadd.f32 %v3083, %v3059
      %v3100 = vadd.f32 %v3084, %v3060
      %v3101 = vadd.f32 %v3085, %v3061
      %v3102 = vadd.f32 %v3086, %v3062
      %v3103 = vadd.f32 %v3087, %v3063
      %v3104 = vmul.f32 %v3068, %v2763
      %v3105 = vmul.f32 %v3069, %v2765
      %v3106 = vmul.f32 %v3070, %v3020
      %v3107 = vmul.f32 %v3071, %v3021
      %v3108 = vmul.f32 %v3072, %v3064
      %v3109 = vmul.f32 %v3073, %v3065
      %v3110 = vmul.f32 %v3074, %v3066
      %v3111 = vmul.f32 %v3075, %v3067
      %v3112 = vmul.f32 %v2763, %v2518
      %v3113 = vmul.f32 %v2765, %v2519
      %v3114 = vmul.f32 %v3020, %v2518
      %v3115 = vmul.f32 %v3021, %v2519
      %v3116 = vmul.f32 %v3064, %v2518
      %v3117 = vmul.f32 %v3065, %v2519
      %v3118 = vmul.f32 %v3066, %v2518
      %v3119 = vmul.f32 %v3067, %v2519
      %v3120 = vmul.f32 %v3104, %v2518
      %v3121 = vmul.f32 %v3105, %v2519
      %v3122 = vmul.f32 %v3106, %v2518
      %v3123 = vmul.f32 %v3107, %v2519
      %v3124 = vmul.f32 %v3108, %v2518
      %v3125 = vmul.f32 %v3109, %v2519
      %v3126 = vmul.f32 %v3110, %v2518
      %v3127 = vmul.f32 %v3111, %v2519
      %v3128 = vadd.f32 %v3112, %v3088
      %v3129 = vadd.f32 %v3113, %v3089
      %v3130 = vadd.f32 %v3114, %v3090
      %v3131 = vadd.f32 %v3115, %v3091
      %v3132 = vadd.f32 %v3116, %v3092
      %v3133 = vadd.f32 %v3117, %v3093
      %v3134 = vadd.f32 %v3118, %v3094
      %v3135 = vadd.f32 %v3119, %v3095
      %v3136 = vadd.f32 %v3120, %v3096
      %v3137 = vadd.f32 %v3121, %v3097
      %v3138 = vadd.f32 %v3122, %v3098
      %v3139 = vadd.f32 %v3123, %v3099
      %v3140 = vadd.f32 %v3124, %v3100
      %v3141 = vadd.f32 %v3125, %v3101
      %v3142 = vadd.f32 %v3126, %v3102
      %v3143 = vadd.f32 %v3127, %v3103
      %s3145 = sor.u32 256, 16
      %3146 = vbcast.lane.b32.xlu0 %v2797, %s3145
      %v3147 = vpop.permute.xlu0 %3146
      %s3149 = sor.u32 256, 24
      %3150 = vbcast.lane.b32.xlu0 %v2797, %s3149
      %v3151 = vpop.permute.xlu0 %3150
      %s3153 = sor.u32 256, 16
      %3154 = vbcast.lane.b32.xlu0 %v2808, %s3153
      %v3155 = vpop.permute.xlu0 %3154
      %s3157 = sor.u32 256, 24
      %3158 = vbcast.lane.b32.xlu0 %v2808, %s3157
      %v3159 = vpop.permute.xlu0 %3158
      %s3161 = sor.u32 256, 16
      %3162 = vbcast.lane.b32.xlu0 %v2819, %s3161
      %v3163 = vpop.permute.xlu0 %3162
      %s3165 = sor.u32 256, 24
      %3166 = vbcast.lane.b32.xlu0 %v2819, %s3165
      %v3167 = vpop.permute.xlu0 %3166
      %s3169 = sor.u32 256, 16
      %3170 = vbcast.lane.b32.xlu0 %v2830, %s3169
      %v3171 = vpop.permute.xlu0 %3170
      %s3173 = sor.u32 256, 24
      %3174 = vbcast.lane.b32.xlu0 %v2830, %s3173
      %v3175 = vpop.permute.xlu0 %3174
      %s3177 = sor.u32 256, 16
      %3178 = vbcast.lane.b32.xlu0 %v2841, %s3177
      %v3179 = vpop.permute.xlu0 %3178
      %s3181 = sor.u32 256, 24
      %3182 = vbcast.lane.b32.xlu0 %v2841, %s3181
      %v3183 = vpop.permute.xlu0 %3182
      %s3185 = sor.u32 256, 16
      %3186 = vbcast.lane.b32.xlu0 %v2852, %s3185
      %v3187 = vpop.permute.xlu0 %3186
      %s3189 = sor.u32 256, 24
      %3190 = vbcast.lane.b32.xlu0 %v2852, %s3189
      %v3191 = vpop.permute.xlu0 %3190
      %s3193 = sor.u32 256, 16
      %3194 = vbcast.lane.b32.xlu0 %v2863, %s3193
      %v3195 = vpop.permute.xlu0 %3194
      %s3197 = sor.u32 256, 24
      %3198 = vbcast.lane.b32.xlu0 %v2863, %s3197
      %v3199 = vpop.permute.xlu0 %3198
      %s3201 = sor.u32 256, 16
      %3202 = vbcast.lane.b32.xlu0 %v2874, %s3201
      %v3203 = vpop.permute.xlu0 %3202
      %s3205 = sor.u32 256, 24
      %3206 = vbcast.lane.b32.xlu0 %v2874, %s3205
      %v3207 = vpop.permute.xlu0 %3206
      %v3208 = vmul.f32 %v3147, %v3128
      %v3209 = vmul.f32 %v3151, %v3129
      %v3210 = vmul.f32 %v3155, %v3130
      %v3211 = vmul.f32 %v3159, %v3131
      %v3212 = vmul.f32 %v3163, %v3132
      %v3213 = vmul.f32 %v3167, %v3133
      %v3214 = vmul.f32 %v3171, %v3134
      %v3215 = vmul.f32 %v3175, %v3135
      %v3216 = vmul.f32 %v3179, %v3136
      %v3217 = vmul.f32 %v3183, %v3137
      %v3218 = vmul.f32 %v3187, %v3138
      %v3219 = vmul.f32 %v3191, %v3139
      %v3220 = vmul.f32 %v3195, %v3140
      %v3221 = vmul.f32 %v3199, %v3141
      %v3222 = vmul.f32 %v3203, %v3142
      %v3223 = vmul.f32 %v3207, %v3143
      %v3224 = vadd.f32 %v3208, %v3209
      %v3225 = vrot.slane %v3224, 4
      %v3226 = vadd.f32 %v3224, %v3225
      %v3227 = vrot.slane %v3226, 2
      %v3228 = vadd.f32 %v3226, %v3227
      %v3229 = vrot.slane %v3228, 1
      %v3230 = vadd.f32 %v3228, %v3229
      %v3231 = vadd.f32 %v3210, %v3211
      %v3232 = vrot.slane %v3231, 4
      %v3233 = vadd.f32 %v3231, %v3232
      %v3234 = vrot.slane %v3233, 2
      %v3235 = vadd.f32 %v3233, %v3234
      %v3236 = vrot.slane %v3235, 1
      %v3237 = vadd.f32 %v3235, %v3236
      %v3238 = vadd.f32 %v3212, %v3213
      %v3239 = vrot.slane %v3238, 4
      %v3240 = vadd.f32 %v3238, %v3239
      %v3241 = vrot.slane %v3240, 2
      %v3242 = vadd.f32 %v3240, %v3241
      %v3243 = vrot.slane %v3242, 1
      %v3244 = vadd.f32 %v3242, %v3243
      %v3245 = vadd.f32 %v3214, %v3215
      %v3246 = vrot.slane %v3245, 4
      %v3247 = vadd.f32 %v3245, %v3246
      %v3248 = vrot.slane %v3247, 2
      %v3249 = vadd.f32 %v3247, %v3248
      %v3250 = vrot.slane %v3249, 1
      %v3251 = vadd.f32 %v3249, %v3250
      %v3252 = vadd.f32 %v3216, %v3217
      %v3253 = vrot.slane %v3252, 4
      %v3254 = vadd.f32 %v3252, %v3253
      %v3255 = vrot.slane %v3254, 2
      %v3256 = vadd.f32 %v3254, %v3255
      %v3257 = vrot.slane %v3256, 1
      %v3258 = vadd.f32 %v3256, %v3257
      %v3259 = vadd.f32 %v3218, %v3219
      %v3260 = vrot.slane %v3259, 4
      %v3261 = vadd.f32 %v3259, %v3260
      %v3262 = vrot.slane %v3261, 2
      %v3263 = vadd.f32 %v3261, %v3262
      %v3264 = vrot.slane %v3263, 1
      %v3265 = vadd.f32 %v3263, %v3264
      %v3266 = vadd.f32 %v3220, %v3221
      %v3267 = vrot.slane %v3266, 4
      %v3268 = vadd.f32 %v3266, %v3267
      %v3269 = vrot.slane %v3268, 2
      %v3270 = vadd.f32 %v3268, %v3269
      %v3271 = vrot.slane %v3270, 1
      %v3272 = vadd.f32 %v3270, %v3271
      %v3273 = vadd.f32 %v3222, %v3223
      %v3274 = vrot.slane %v3273, 4
      %v3275 = vadd.f32 %v3273, %v3274
      %v3276 = vrot.slane %v3275, 2
      %v3277 = vadd.f32 %v3275, %v3276
      %v3278 = vrot.slane %v3277, 1
      %v3279 = vadd.f32 %v3277, %v3278
      %vm3288 = vcmask 1041409
      %v3289 = vsel %vm3288, %v1365, %v1358
      %vm3290 = vcmask 1042434
      %v3291 = vsel %vm3290, %v1372, %v3289
      %vm3292 = vcmask 1043459
      %v3293 = vsel %vm3292, %v1379, %v3291
      %vm3294 = vcmask 1044484
      %v3295 = vsel %vm3294, %v1386, %v3293
      %vm3296 = vcmask 1045509
      %v3297 = vsel %vm3296, %v1393, %v3295
      %vm3298 = vcmask 1046534
      %v3299 = vsel %vm3298, %v1400, %v3297
      %vm3300 = vcmask 1047559
      %v3301 = vsel %vm3300, %v1407, %v3299
      %v3311 = vsel %vm3288, %v1989, %v1982
      %v3312 = vsel %vm3290, %v1996, %v3311
      %v3313 = vsel %vm3292, %v2003, %v3312
      %v3314 = vsel %vm3294, %v2010, %v3313
      %v3315 = vsel %vm3296, %v2017, %v3314
      %v3316 = vsel %vm3298, %v2024, %v3315
      %v3317 = vsel %vm3300, %v2031, %v3316
      %v3327 = vsel %vm3288, %v2613, %v2606
      %v3328 = vsel %vm3290, %v2620, %v3327
      %v3329 = vsel %vm3292, %v2627, %v3328
      %v3330 = vsel %vm3294, %v2634, %v3329
      %v3331 = vsel %vm3296, %v2641, %v3330
      %v3332 = vsel %vm3298, %v2648, %v3331
      %v3333 = vsel %vm3300, %v2655, %v3332
      %v3343 = vsel %vm3288, %v3237, %v3230
      %v3344 = vsel %vm3290, %v3244, %v3343
      %v3345 = vsel %vm3292, %v3251, %v3344
      %v3346 = vsel %vm3294, %v3258, %v3345
      %v3347 = vsel %vm3296, %v3265, %v3346
      %v3348 = vsel %vm3298, %v3272, %v3347
      %v3349 = vsel %vm3300, %v3279, %v3348
      %v3351 = vld [vmem:[%s7] sm:$0x1]
      %v3353 = vlaneseq
      %v3354 = vshrl.u32 %v3353, 7
      %v3355 = vsub.s32 0, %v3354
      %v3356 = vrot.slane %v3351, %v3355
      %v3358 = vmul.f32 %v584, %v3356
      %v3359 = vmul.f32 %v585, %v3356
      %v3360 = vmul.f32 %v586, %v3356
      %v3361 = vmul.f32 %v587, %v3356
      %v3362 = vadd.f32 %v3301, %v3358
      %v3363 = vadd.f32 %v3317, %v3359
      %v3364 = vadd.f32 %v3333, %v3360
      %v3365 = vadd.f32 %v3349, %v3361
      %v3366 = vmul.f32 %v440, 0.5
      %v3367 = vmul.f32 %v444, 0.5
      %v3368 = vmul.f32 %v450, 0.5
      %v3369 = vmul.f32 %v454, 0.5
      %v3370 = vtanh.pop %v3366
      %v3371 = vtanh.pop %v3367
      %v3372 = vtanh.pop %v3368
      %v3373 = vtanh.pop %v3369
      %v3374 = vadd.f32 %v3370, 1.0
      %v3375 = vadd.f32 %v3371, 1.0
      %v3376 = vadd.f32 %v3372, 1.0
      %v3377 = vadd.f32 %v3373, 1.0
      %v3378 = vmul.f32 %v3374, 0.5
      %v3379 = vmul.f32 %v3375, 0.5
      %v3380 = vmul.f32 %v3376, 0.5
      %v3381 = vmul.f32 %v3377, 0.5
      %v3382 = vmul.f32 %v440, %v3378
      %v3383 = vmul.f32 %v444, %v3379
      %v3384 = vmul.f32 %v450, %v3380
      %v3385 = vmul.f32 %v454, %v3381
      %v3386 = vmul.f32 %v3362, %v3382
      %v3387 = vmul.f32 %v3363, %v3383
      %v3388 = vmul.f32 %v3364, %v3384
      %v3389 = vmul.f32 %v3365, %v3385
      %v3390 = vpack.c.bf16 %v3387, %v3386
      %v3391 = vpack.c.bf16 %v3389, %v3388
      %v3392 = vld [vmem:[%s8] sm:$0xf]
      %v3393 = vld [vmem:[%s8 + $0x4] sm:$0xf]
      %v3394 = vld [vmem:[%s8 + $0x8] sm:$0xf]
      %v3395 = vld [vmem:[%s8 + $0xc] sm:$0xf]
      %v3396 = vld [vmem:[%s8 + $0x10] sm:$0xf]
      %v3397 = vld [vmem:[%s8 + $0x14] sm:$0xf]
      %v3398 = vld [vmem:[%s8 + $0x18] sm:$0xf]
      %v3399 = vld [vmem:[%s8 + $0x1c] sm:$0xf]
      %v3400 = vld [vmem:[%s8 + $0x20] sm:$0xf]
      %v3401 = vld [vmem:[%s8 + $0x24] sm:$0xf]
      %v3402 = vld [vmem:[%s8 + $0x28] sm:$0xf]
      %v3403 = vld [vmem:[%s8 + $0x2c] sm:$0xf]
      %v3404 = vld [vmem:[%s8 + $0x30] sm:$0xf]
      %v3405 = vld [vmem:[%s8 + $0x34] sm:$0xf]
      %v3406 = vld [vmem:[%s8 + $0x38] sm:$0xf]
      %v3407 = vld [vmem:[%s8 + $0x3c] sm:$0xf]
      %v3424 = vunpack.c.l.b16 %v3392
      %v3425 = vunpack.c.l.b16 %v3393
      %v3426 = vunpack.c.l.b16 %v3394
      %v3427 = vunpack.c.l.b16 %v3395
      %v3428 = vunpack.c.l.b16 %v3396
      %v3429 = vunpack.c.l.b16 %v3397
      %v3430 = vunpack.c.l.b16 %v3398
      %v3431 = vunpack.c.l.b16 %v3399
      %v3432 = vunpack.c.l.b16 %v3400
      %v3433 = vunpack.c.l.b16 %v3401
      %v3434 = vunpack.c.l.b16 %v3402
      %v3435 = vunpack.c.l.b16 %v3403
      %v3436 = vunpack.c.l.b16 %v3404
      %v3437 = vunpack.c.l.b16 %v3405
      %v3438 = vunpack.c.l.b16 %v3406
      %v3439 = vunpack.c.l.b16 %v3407
      %v3440 = vpack.c.b16 %v3425, %v3424
      %v3441 = vpack.c.b16 %v3427, %v3426
      %v3442 = vpack.c.b16 %v3429, %v3428
      %v3443 = vpack.c.b16 %v3431, %v3430
      %v3444 = vpack.c.b16 %v3433, %v3432
      %v3445 = vpack.c.b16 %v3435, %v3434
      %v3446 = vpack.c.b16 %v3437, %v3436
      %v3447 = vpack.c.b16 %v3439, %v3438
      %3456 = vmatprep.subr.bf16.mxu0 0
      %3457 = vmatpush1.bf16.msra.mxu0 %v3447
      %3458 = vmatprep.subr.bf16.mxu0 0
      %3459 = vmatpush1.bf16.msra.mxu0 %v3446
      %3460 = vmatprep.subr.bf16.mxu0 0
      %3461 = vmatpush1.bf16.msra.mxu0 %v3445
      %3462 = vmatprep.subr.bf16.mxu0 0
      %3463 = vmatpush1.bf16.msra.mxu0 %v3444
      %3464 = vmatprep.subr.bf16.mxu0 0
      %3465 = vmatpush1.bf16.msra.mxu0 %v3443
      %3466 = vmatprep.subr.bf16.mxu0 0
      %3467 = vmatpush1.bf16.msra.mxu0 %v3442
      %3468 = vmatprep.subr.bf16.mxu0 0
      %3469 = vmatpush1.bf16.msra.mxu0 %v3441
      %3470 = vmatprep.subr.bf16.mxu0 0
      %3471 = vmatpush1.bf16.msra.mxu0 %v3440
      %3472 = vmatprep.subr.bf16.mxu0 0
      %3473 = vmatpush2.bf16.msra.mxu0 0
      %3474 = vmatprep.subr.bf16.mxu0 0
      %3475 = vmatpush2.bf16.msra.mxu0 0
      %3476 = vmatprep.subr.bf16.mxu0 0
      %3477 = vmatpush2.bf16.msra.mxu0 0
      %3478 = vmatprep.subr.bf16.mxu0 0
      %3479 = vmatpush2.bf16.msra.mxu0 0
      %3480 = vmatprep.subr.bf16.mxu0 0
      %3481 = vmatpush2.bf16.msra.mxu0 0
      %3482 = vmatprep.subr.bf16.mxu0 0
      %3483 = vmatpush2.bf16.msra.mxu0 0
      %3484 = vmatprep.subr.bf16.mxu0 0
      %3485 = vmatpush2.bf16.msra.mxu0 0
      %3486 = vmatprep.subr.bf16.mxu0 0
      %3487 = vmatpush2.bf16.msra.mxu0 0
      %3488 = vmatprep.mubr.bf16.mxu0 0
      %3489 = vmatmul.mubr.bf16.gmra.mxu0 %v3390
      %v3490 = vpop.f32.mrf.mxu0
      %v3491 = vadd.f32 0.0, %v3490
      %v3492 = vpop.f32.mrf.mxu0
      %v3493 = vpop.f32.mrf.mxu0
      %v3494 = vadd.f32 0.0, %v3493
      %v3495 = vpop.f32.mrf.mxu0
      %3496 = vmatprep.mubr.bf16.mxu0 0
      %3497 = vmatmul.mubr.bf16.gmra.mxu0 %v3391
      %v3498 = vpop.f32.mrf.mxu0
      %v3499 = vadd.f32 0.0, %v3498
      %v3500 = vpop.f32.mrf.mxu0
      %v3501 = vpop.f32.mrf.mxu0
      %v3502 = vadd.f32 0.0, %v3501
      %v3503 = vpop.f32.mrf.mxu0
      %3504 = vdwg.mxu0
      %3505 = vst [vmem:[%s332] sm:$0xff] %v3491
      %3506 = vst [vmem:[%s332 + $0x8] sm:$0xff] %v3494
      %3507 = vst [vmem:[%s332 + $0x10] sm:$0xff] %v3499
      %3508 = vst [vmem:[%s332 + $0x18] sm:$0xff] %v3502
      %p3509 = scmp.lt.s32.totalorder %s20, 1
      %s3510 = scalar_select %p3509, %s20, 1
      %s3511 = smul.addr %s3510, 4
      %s3512 = smul.addr %s3511, 8
      %s3513 = scalar_lea.vmem %s9, %s3512
      // Predicated region
      $region57: #{double_ssm_block_out.1} parent=55 // pred_check
        %p3514 = pneg %p232
      $region58: #{double_ssm_block_out.1} parent=55 // pred_check_branch
        %3516 = sbr.rel (%p3514) target = $region60
      $region59: #{double_ssm_block_out.1} parent=55 // pred_region
        _
      $region60: #{double_ssm_block_out.1} parent=55 // pred_fallthru
        _
    $region56: #{double_ssm_block_out.1} parent=5 // pred_fallthru
      _
    %p3517 = scmp.le.s32.totalorder 2, %s15
    // Predicated region
    $region61: #{double_ssm_block_out.1} parent=5 // pred_check
      %p3518 = pneg %p3517
    $region62: #{double_ssm_block_out.1} parent=5 // pred_check_branch
      %3520 = sbr.rel (%p3518) target = $region64
    $region63: #{double_ssm_block_out.1} parent=5 // pred_region
      %s3521 = ssub.s32 %s15, 2
      // Predicated region
      $region65: #{double_ssm_block_out.1} parent=63 // pred_check
        %p3522 = pneg %p238
      $region66: #{double_ssm_block_out.1} parent=63 // pred_check_branch
        %3524 = sbr.rel (%p3522) target = $region68
      $region67: #{double_ssm_block_out.1} parent=63 // pred_region
        %p3525 = scmp.lt.s32.totalorder %s21, 1
        %s3526 = scalar_select %p3525, %s21, 1
        %s3527 = smul.addr %s3526, 4
        %s3528 = smul.addr %s3527, 8
        %s3529 = scalar_lea.vmem %s9, %s3528
      $region68: #{double_ssm_block_out.1} parent=63 // pred_fallthru
        _
    $region64: #{double_ssm_block_out.1} parent=5 // pred_fallthru
      _
  $region6: #{double_ssm_block_out.1} parent=0 // loop_footer
    %s19 = sadd.s32 1, %s15
  $region7: #{double_ssm_block_out.1} parent=0 // loop_footer_branch
    %14 = sbr.rel target = $region3
  $region8: #{double_ssm_block_out.1} parent=0 // loop_exit
    _

</llo_original>
